<compile_context>
chip_gen: v7x
topology: tpu7x:2x2x1
jax: 0.10.0
libtpu: 0.0.40
codegen_flags: <defaults>
</compile_context>

<pallas_src>
import functools

import jax
import jax.numpy as jnp
from jax.experimental import pallas as pl
from jax.experimental.pallas import tpu as pltpu

# ----------------------------------------------------------------------------
# Model configuration (small, self-consistent shapes)
# ----------------------------------------------------------------------------
LATENT_DIMS = 8
IN_CH, IMG = 1, 16            # input: (B, 1, 16, 16)
# encoder: conv1 1->4 k3, conv2 4->8 k3, conv3 8->8 k3, pool k2 s2
#   16 -> 14 -> 12 -> 10 -> pool -> 5 ; flatten = 8*5*5 = 200
POOL_K, POOL_S = 2, 2
UNFLAT = (8, 5, 5)            # decoder nn.Unflatten size
FLAT = UNFLAT[0] * UNFLAT[1] * UNFLAT[2]   # 200

_VSPEC = pl.BlockSpec(memory_space=pltpu.MemorySpace.VMEM)
_SSPEC = pl.BlockSpec(memory_space=pltpu.MemorySpace.SMEM)


# ----------------------------------------------------------------------------
# Pallas kernels
# ----------------------------------------------------------------------------
def _convmm_kernel(w_ref, p_ref, b_ref, o_ref, *, activation):
    """o = act(W @ P + b).  W:(OC,K), P:(K,M), b:(OC,1) -> o:(OC,M) lane-dense."""
    y = jnp.dot(w_ref[...], p_ref[...], preferred_element_type=jnp.float32)
    y = y + b_ref[...]
    if activation == "relu":
        y = jnp.maximum(y, 0.0)
    o_ref[...] = y.astype(o_ref.dtype)


def conv_matmul(w_mat, patches, b_col, activation="relu"):
    OC, _ = w_mat.shape
    M = patches.shape[1]
    return pl.pallas_call(
        functools.partial(_convmm_kernel, activation=activation),
        out_shape=jax.ShapeDtypeStruct((OC, M), jnp.float32),
        in_specs=[_VSPEC, _VSPEC, _VSPEC],
        out_specs=_VSPEC,
    )(w_mat, patches, b_col)


def _mlp_core_kernel(eps_ref, f_ref,
                     we1_ref, be1_ref, we2_ref, be2_ref, we3_ref, be3_ref,
                     we4_ref, be4_ref, wm_ref, bm_ref, ws_ref, bs_ref,
                     wd1_ref, bd1_ref, wd2_ref, bd2_ref, wd3_ref, bd3_ref,
                     wd4_ref, bd4_ref,
                     d_ref, kl_ref):
    """Fused encoder MLP -> mean/std -> reparam + KL -> decoder MLP."""
    def fc(h, w_ref_, b_ref_, relu):
        y = jnp.dot(h, w_ref_[...], preferred_element_type=jnp.float32)
        y = y + b_ref_[...]
        return jnp.maximum(y, 0.0) if relu else y

    h = fc(f_ref[...], we1_ref, be1_ref, True)
    h = fc(h, we2_ref, be2_ref, True)
    h = fc(h, we3_ref, be3_ref, True)
    h = fc(h, we4_ref, be4_ref, True)

    mean = fc(h, wm_ref, bm_ref, False)
    s = fc(h, ws_ref, bs_ref, False)          # log std (pre-exp)
    std = jnp.exp(s)

    # torch: eps = Normal(0,1).sample() is a single scalar shared by all
    # batch elements / latent dims -> matches the reference module.
    eps = eps_ref[0, 0]
    z = mean + std * eps

    # KL per batch: sum(log q(z) - log p(z)); since (z-mean)/std == eps this
    # reduces to sum(0.5*z^2 - 0.5*eps^2 - s)  (no divide, no log).
    kl_ref[...] = jnp.sum(0.5 * z * z - 0.5 * eps * eps - s,
                          axis=-1, keepdims=True)

    d = fc(z, wd1_ref, bd1_ref, True)
    d = fc(d, wd2_ref, bd2_ref, True)
    d = fc(d, wd3_ref, bd3_ref, True)
    d = fc(d, wd4_ref, bd4_ref, True)
    d_ref[...] = d


def mlp_core(f, eps, prep):
    """Runs the fused MLP core; returns (decoder features (B, FLAT), kl (B,1))."""
    B = f.shape[0]
    args = [jnp.asarray(eps, jnp.float32).reshape(1, 1), f.astype(jnp.float32)]
    for w, b in prep["enc_mlp"] + prep["dec_mlp"]:
        args.append(w)
        args.append(b)
    d, kl = pl.pallas_call(
        _mlp_core_kernel,
        out_shape=(jax.ShapeDtypeStruct((B, FLAT), jnp.float32),
                   jax.ShapeDtypeStruct((B, 1), jnp.float32)),
        in_specs=[_SSPEC] + [_VSPEC] * (len(args) - 1),
        out_specs=(_VSPEC, _VSPEC),
    )(*args)
    return d, kl


def _final_deconv_loss_kernel(ls_ref, w_ref, p_ref, b_ref, x_ref, kl_ref,
                              xhat_ref, loss_ref):
    """Final deconv matmul + sigmoid, fused with Gaussian likelihood and
    total loss = sum_b kl[b] - sum(log p(x | x_hat))."""
    y = jnp.dot(w_ref[...], p_ref[...], preferred_element_type=jnp.float32)
    y = y + b_ref[...]
    x_hat = jax.nn.sigmoid(y)
    xhat_ref[...] = x_hat

    log_std = ls_ref[0, 0]
    inv_var = jnp.exp(-2.0 * log_std)
    c = 0.5 * jnp.log(2.0 * jnp.pi)
    diff = x_ref[...] - x_hat
    log_p = -0.5 * diff * diff * inv_var - log_std - c          # (1, B*H*W)

    recon_total = jnp.sum(log_p, axis=1, keepdims=True)          # (1, 1)
    kl_total = jnp.sum(kl_ref[...], axis=0, keepdims=True)       # (1, 1)
    loss_ref[...] = kl_total - recon_total


def final_deconv_loss(w_mat, patches, b_col, x_flat, kl, log_std):
    OC = w_mat.shape[0]
    M = patches.shape[1]
    return pl.pallas_call(
        _final_deconv_loss_kernel,
        out_shape=(jax.ShapeDtypeStruct((OC, M), jnp.float32),
                   jax.ShapeDtypeStruct((1, 1), jnp.float32)),
        in_specs=[_SSPEC, _VSPEC, _VSPEC, _VSPEC, _VSPEC, _VSPEC],
        out_specs=(_VSPEC, _VSPEC),
    )(log_std, w_mat, patches, b_col, x_flat, kl)


# ----------------------------------------------------------------------------
# Conv / ConvTranspose / MaxPool glue.  Activations live in (C, B, H, W)
# layout so the conv matmuls' outputs (OC, B*OH*OW) need no transposes.
# ----------------------------------------------------------------------------
def _im2col_T(x, k):
    """x: (C, B, H, W) -> patches (k*k*C, B*OH*OW); axis-0 order (di, dj, c)."""
    C, B, H, W = x.shape
    OH, OW = H - k + 1, W - k + 1
    cols = [x[:, :, di:di + OH, dj:dj + OW]
            for di in range(k) for dj in range(k)]
    p = jnp.concatenate(cols, axis=0)                 # (k*k*C, B, OH, OW)
    return p.reshape(k * k * C, B * OH * OW), OH, OW


def conv_block(h, w_mat, b_col, k, activation="relu"):
    """Conv (stride 1, pad 0) in (C,B,H,W) layout.  w_mat: (OC, k*k*IC)."""
    B = h.shape[1]
    patches, OH, OW = _im2col_T(h, k)
    y = conv_matmul(w_mat, patches, b_col, activation)   # (OC, B*OH*OW)
    return y.reshape(y.shape[0], B, OH, OW)


def deconv_block(h, w_mat, b_col, k, activation="relu"):
    """ConvTranspose (stride 1, pad 0) = full-pad then conv with prepped weight."""
    hp = jnp.pad(h, ((0, 0), (0, 0), (k - 1, k - 1), (k - 1, k - 1)))
    return conv_block(hp, w_mat, b_col, k, activation)


def maxpool2d_with_indices(x, k, s):
    """nn.MaxPool2d(return_indices=True) on (C,B,H,W): values + flat H*W idx."""
    # TODO(synk): argmax tie-breaking may differ from PyTorch when duplicates
    # exist; data-dependent index math kept in plain JAX.
    C, B, H, W = x.shape
    OH = (H - k) // s + 1
    OW = (W - k) // s + 1
    row0 = jnp.arange(OH) * s
    col0 = jnp.arange(OW) * s
    vals, idxs = [], []
    for di in range(k):
        for dj in range(k):
            vals.append(x[:, :, di:di + s * OH:s, dj:dj + s * OW:s])
            r = (row0[:, None] + di) * W + (col0[None, :] + dj)
            idxs.append(jnp.broadcast_to(r, (C, B, OH, OW)))
    vals = jnp.stack(vals, axis=-1)
    idxs = jnp.stack(idxs, axis=-1)
    arg = jnp.argmax(vals, axis=-1)
    out = jnp.max(vals, axis=-1)
    ind = jnp.take_along_axis(idxs, arg[..., None], axis=-1)[..., 0]
    return out, ind


def max_unpool2d(x, indices, out_hw):
    """nn.MaxUnpool2d scatter on (C,B,oh,ow) into flat H*W positions."""
    # TODO(synk): data-dependent scatter kept in plain JAX (no clean Pallas
    # equivalent worth writing at this toy size).
    C, B, OH, OW = x.shape
    H, W = out_hw
    flat = jnp.zeros((C, B, H * W), x.dtype)
    idx = indices.reshape(C, B, OH * OW)
    vals = x.reshape(C, B, OH * OW)
    flat = flat.at[jnp.arange(C)[:, None, None],
                   jnp.arange(B)[None, :, None], idx].set(vals)
    return flat.reshape(C, B, H, W)


# ----------------------------------------------------------------------------
# Parameters (PyTorch layouts) + one-time kernel-ready preprocessing
# ----------------------------------------------------------------------------
def _lin(key, out_f, in_f, scale=0.05):
    kw, kb = jax.random.split(key)
    return (scale * jax.random.normal(kw, (out_f, in_f), jnp.float32),
            scale * jax.random.normal(kb, (out_f,), jnp.float32))


def _conv(key, oc, ic, k, scale=0.05):
    kw, kb = jax.random.split(key)
    return (scale * jax.random.normal(kw, (oc, ic, k, k), jnp.float32),
            scale * jax.random.normal(kb, (oc,), jnp.float32))


def _deconv(key, ic, oc, k, scale=0.05):
    kw, kb = jax.random.split(key)
    return (scale * jax.random.normal(kw, (ic, oc, k, k), jnp.float32),
            scale * jax.random.normal(kb, (oc,), jnp.float32))


def init_params(key):
    ks = jax.random.split(key, 20)
    enc = {}
    enc["conv1_w"], enc["conv1_b"] = _conv(ks[0], 4, IN_CH, 3)
    enc["conv2_w"], enc["conv2_b"] = _conv(ks[1], 8, 4, 3)
    enc["conv3_w"], enc["conv3_b"] = _conv(ks[2], 8, 8, 3)
    enc["ln1_w"], enc["ln1_b"] = _lin(ks[3], 128, FLAT)
    enc["ln2_w"], enc["ln2_b"] = _lin(ks[4], 64, 128)
    enc["ln3_w"], enc["ln3_b"] = _lin(ks[5], 64, 64)
    enc["ln4_w"], enc["ln4_b"] = _lin(ks[6], 32, 64)
    enc["mean_w"], enc["mean_b"] = _lin(ks[7], LATENT_DIMS, 32)
    enc["std_w"], enc["std_b"] = _lin(ks[8], LATENT_DIMS, 32)
    dec = {}
    dec["ln1_w"], dec["ln1_b"] = _lin(ks[9], 32, LATENT_DIMS)
    dec["ln2_w"], dec["ln2_b"] = _lin(ks[10], 64, 32)
    dec["ln3_w"], dec["ln3_b"] = _lin(ks[11], 128, 64)
    dec["ln4_w"], dec["ln4_b"] = _lin(ks[12], FLAT, 128)
    dec["dc1_w"], dec["dc1_b"] = _deconv(ks[13], 8, 8, 3)
    dec["dc2_w"], dec["dc2_b"] = _deconv(ks[14], 8, 4, 3)
    dec["dc3_w"], dec["dc3_b"] = _deconv(ks[15], 4, IN_CH, 3)
    return {"enc": enc, "dec": dec, "log_std": jnp.zeros((1,), jnp.float32)}


def prepare_params(params):
    """One-time weight prep: all transposes / flips / reshapes hoisted here."""
    enc, dec = params["enc"], params["dec"]

    def lin(src, wk, bk):
        return (jnp.asarray(src[wk], jnp.float32).T,               # (K, N)
                jnp.asarray(src[bk], jnp.float32).reshape(1, -1))  # (1, N)

    def conv(src, wk, bk):
        w = jnp.asarray(src[wk], jnp.float32)                      # (OC,IC,K,K)
        oc = w.shape[0]
        w_mat = w.transpose(0, 2, 3, 1).reshape(oc, -1)            # (OC, K*K*IC)
        return w_mat, jnp.asarray(src[bk], jnp.float32).reshape(oc, 1)

    def deconv(src, wk, bk):
        w = jnp.asarray(src[wk], jnp.float32)                      # (IC,OC,K,K)
        oc = w.shape[1]
        w_mat = jnp.flip(w, axis=(2, 3)).transpose(1, 2, 3, 0).reshape(oc, -1)
        return w_mat, jnp.asarray(src[bk], jnp.float32).reshape(oc, 1)

    return {
        "conv1": conv(enc, "conv1_w", "conv1_b"),
        "conv2": conv(enc, "conv2_w", "conv2_b"),
        "conv3": conv(enc, "conv3_w", "conv3_b"),
        "enc_mlp": [lin(enc, "ln1_w", "ln1_b"), lin(enc, "ln2_w", "ln2_b"),
                    lin(enc, "ln3_w", "ln3_b"), lin(enc, "ln4_w", "ln4_b"),
                    lin(enc, "mean_w", "mean_b"), lin(enc, "std_w", "std_b")],
        "dec_mlp": [lin(dec, "ln1_w", "ln1_b"), lin(dec, "ln2_w", "ln2_b"),
                    lin(dec, "ln3_w", "ln3_b"), lin(dec, "ln4_w", "ln4_b")],
        "dc1": deconv(dec, "dc1_w", "dc1_b"),
        "dc2": deconv(dec, "dc2_w", "dc2_b"),
        "dc3": deconv(dec, "dc3_w", "dc3_b"),
        "log_std": jnp.asarray(params["log_std"], jnp.float32).reshape(1, 1),
    }


# ----------------------------------------------------------------------------
# VAE forward (matches VAE.forward: returns (x_hat, loss)) -- 7 pallas_calls
# ----------------------------------------------------------------------------
def vae_forward(prep, x, eps):
    B = x.shape[0]
    xT = x.astype(jnp.float32).transpose(1, 0, 2, 3)      # (C, B, H, W)

    # ---- ConvEncoder (conv stack in channels-first-rows layout) ----
    h = conv_block(xT, *prep["conv1"], 3, "relu")          # (4, B, 14, 14)
    h = conv_block(h, *prep["conv2"], 3, "relu")           # (8, B, 12, 12)
    h = conv_block(h, *prep["conv3"], 3, "relu")           # (8, B, 10, 10)
    pooled, pool_idx = maxpool2d_with_indices(h, POOL_K, POOL_S)   # (8,B,5,5)
    f = pooled.transpose(1, 0, 2, 3).reshape(B, -1)        # torch.flatten(x, 1)

    # ---- Fused encoder MLP + reparam + KL + decoder MLP ----
    d, kl = mlp_core(f, eps, prep)                         # (B,200), (B,1)

    # ---- ConvDecoder ----
    d = d.reshape(B, *UNFLAT).transpose(1, 0, 2, 3)        # (8, B, 5, 5)
    unpool_hw = ((UNFLAT[1] - 1) * POOL_S + POOL_K,
                 (UNFLAT[2] - 1) * POOL_S + POOL_K)
    u = max_unpool2d(d, pool_idx, unpool_hw)               # (8, B, 10, 10)
    u = deconv_block(u, *prep["dc1"], 3, "relu")           # (8, B, 12, 12)
    u = deconv_block(u, *prep["dc2"], 3, "relu")           # (4, B, 14, 14)

    # final deconv fused with sigmoid + likelihood + total loss
    k = 3
    up = jnp.pad(u, ((0, 0), (0, 0), (k - 1, k - 1), (k - 1, k - 1)))
    patches, OH, OW = _im2col_T(up, k)                     # (36, B*16*16)
    x_flat = xT.reshape(IN_CH, B * IMG * IMG)
    x_hat_rows, loss = final_deconv_loss(prep["dc3"][0], patches, prep["dc3"][1],
                                         x_flat, kl, prep["log_std"])
    x_hat = x_hat_rows.reshape(IN_CH, B, OH, OW).transpose(1, 0, 2, 3)
    return x_hat, loss[0, 0]


# ----------------------------------------------------------------------------
if __name__ == "__main__":
    key = jax.random.PRNGKey(0)
    pkey, xkey, ekey = jax.random.split(key, 3)
    params = init_params(pkey)
    prep = prepare_params(params)          # one-time weight prep (hoisted)
    x = jax.random.uniform(xkey, (2, IN_CH, IMG, IMG), jnp.float32)
    eps = jax.random.normal(ekey, (), jnp.float32)   # Normal(0,1).sample() scalar

    fwd = jax.jit(vae_forward)
    x_hat, loss = fwd(prep, x, eps)
    jax.block_until_ready((x_hat, loss))

    assert x_hat.shape == (2, IN_CH, IMG, IMG)
    assert x_hat.dtype == jnp.float32
    assert loss.shape == ()
    assert bool(jnp.isfinite(loss))
    print("KERNEL_OK")
</pallas_src>

<mosaic_0001>
module attributes {stable_mosaic.version = 11 : i64} {
  func.func @_convmm_kernel(%arg0: memref<4x9xf32, #tpu.memory_space<vmem>>, %arg1: memref<9x392xf32, #tpu.memory_space<vmem>>, %arg2: memref<4x1xf32, #tpu.memory_space<vmem>>, %arg3: memref<4x392xf32, #tpu.memory_space<vmem>>) attributes {dimension_semantics = [], scalar_prefetch = 0 : i64, scratch_operands = 0 : i64, tpu.core_type = #tpu.core_type<tc>} {
    %c0 = arith.constant 0 : index
    %c0_0 = arith.constant 0 : index
    %0 = vector.load %arg0[%c0, %c0_0] : memref<4x9xf32, #tpu.memory_space<vmem>>, vector<4x9xf32>
    %c0_1 = arith.constant 0 : index
    %c0_2 = arith.constant 0 : index
    %1 = vector.load %arg1[%c0_1, %c0_2] : memref<9x392xf32, #tpu.memory_space<vmem>>, vector<9x392xf32>
    %cst = arith.constant dense<0.000000e+00> : vector<4x392xf32>
    %2 = tpu.matmul %0, %1, %cst {dimension_numbers = #tpu.dot_dimension_numbers<[1], [0], [0], [1], [0, 0, 1, 1], [], []>} : vector<4x9xf32>, vector<9x392xf32>, vector<4x392xf32> -> vector<4x392xf32>
    %c0_3 = arith.constant 0 : index
    %c0_4 = arith.constant 0 : index
    %3 = vector.load %arg2[%c0_3, %c0_4] : memref<4x1xf32, #tpu.memory_space<vmem>>, vector<4x1xf32>
    %4 = vector.broadcast %3 : vector<4x1xf32> to vector<4x392xf32>
    %5 = arith.addf %2, %4 : vector<4x392xf32>
    %cst_5 = arith.constant 0.000000e+00 : f32
    %6 = vector.broadcast %cst_5 : f32 to vector<4x392xf32>
    %7 = arith.maximumf %5, %6 : vector<4x392xf32>
    %c0_6 = arith.constant 0 : index
    %c0_7 = arith.constant 0 : index
    %8 = vector.load %arg3[%c0_6, %c0_7] : memref<4x392xf32, #tpu.memory_space<vmem>>, vector<4x392xf32>
    tpu.vector_store %arg3[%c0_6, %c0_7], %7 {strides = array<i32>} : memref<4x392xf32, #tpu.memory_space<vmem>>, vector<4x392xf32>,
    return
  }
}

module attributes {stable_mosaic.version = 11 : i64} {
  func.func @_convmm_kernel(%arg0: memref<8x36xf32, #tpu.memory_space<vmem>>, %arg1: memref<36x288xf32, #tpu.memory_space<vmem>>, %arg2: memref<8x1xf32, #tpu.memory_space<vmem>>, %arg3: memref<8x288xf32, #tpu.memory_space<vmem>>) attributes {dimension_semantics = [], scalar_prefetch = 0 : i64, scratch_operands = 0 : i64, tpu.core_type = #tpu.core_type<tc>} {
    %c0 = arith.constant 0 : index
    %c0_0 = arith.constant 0 : index
    %0 = vector.load %arg0[%c0, %c0_0] : memref<8x36xf32, #tpu.memory_space<vmem>>, vector<8x36xf32>
    %c0_1 = arith.constant 0 : index
    %c0_2 = arith.constant 0 : index
    %1 = vector.load %arg1[%c0_1, %c0_2] : memref<36x288xf32, #tpu.memory_space<vmem>>, vector<36x288xf32>
    %cst = arith.constant dense<0.000000e+00> : vector<8x288xf32>
    %2 = tpu.matmul %0, %1, %cst {dimension_numbers = #tpu.dot_dimension_numbers<[1], [0], [0], [1], [0, 0, 1, 1], [], []>} : vector<8x36xf32>, vector<36x288xf32>, vector<8x288xf32> -> vector<8x288xf32>
    %c0_3 = arith.constant 0 : index
    %c0_4 = arith.constant 0 : index
    %3 = vector.load %arg2[%c0_3, %c0_4] : memref<8x1xf32, #tpu.memory_space<vmem>>, vector<8x1xf32>
    %4 = vector.broadcast %3 : vector<8x1xf32> to vector<8x288xf32>
    %5 = arith.addf %2, %4 : vector<8x288xf32>
    %cst_5 = arith.constant 0.000000e+00 : f32
    %6 = vector.broadcast %cst_5 : f32 to vector<8x288xf32>
    %7 = arith.maximumf %5, %6 : vector<8x288xf32>
    %c0_6 = arith.constant 0 : index
    %c0_7 = arith.constant 0 : index
    %8 = vector.load %arg3[%c0_6, %c0_7] : memref<8x288xf32, #tpu.memory_space<vmem>>, vector<8x288xf32>
    tpu.vector_store %arg3[%c0_6, %c0_7], %7 {strides = array<i32>} : memref<8x288xf32, #tpu.memory_space<vmem>>, vector<8x288xf32>,
    return
  }
}

module attributes {stable_mosaic.version = 11 : i64} {
  func.func @_convmm_kernel(%arg0: memref<8x72xf32, #tpu.memory_space<vmem>>, %arg1: memref<72x200xf32, #tpu.memory_space<vmem>>, %arg2: memref<8x1xf32, #tpu.memory_space<vmem>>, %arg3: memref<8x200xf32, #tpu.memory_space<vmem>>) attributes {dimension_semantics = [], scalar_prefetch = 0 : i64, scratch_operands = 0 : i64, tpu.core_type = #tpu.core_type<tc>} {
    %c0 = arith.constant 0 : index
    %c0_0 = arith.constant 0 : index
    %0 = vector.load %arg0[%c0, %c0_0] : memref<8x72xf32, #tpu.memory_space<vmem>>, vector<8x72xf32>
    %c0_1 = arith.constant 0 : index
    %c0_2 = arith.constant 0 : index
    %1 = vector.load %arg1[%c0_1, %c0_2] : memref<72x200xf32, #tpu.memory_space<vmem>>, vector<72x200xf32>
    %cst = arith.constant dense<0.000000e+00> : vector<8x200xf32>
    %2 = tpu.matmul %0, %1, %cst {dimension_numbers = #tpu.dot_dimension_numbers<[1], [0], [0], [1], [0, 0, 1, 1], [], []>} : vector<8x72xf32>, vector<72x200xf32>, vector<8x200xf32> -> vector<8x200xf32>
    %c0_3 = arith.constant 0 : index
    %c0_4 = arith.constant 0 : index
    %3 = vector.load %arg2[%c0_3, %c0_4] : memref<8x1xf32, #tpu.memory_space<vmem>>, vector<8x1xf32>
    %4 = vector.broadcast %3 : vector<8x1xf32> to vector<8x200xf32>
    %5 = arith.addf %2, %4 : vector<8x200xf32>
    %cst_5 = arith.constant 0.000000e+00 : f32
    %6 = vector.broadcast %cst_5 : f32 to vector<8x200xf32>
    %7 = arith.maximumf %5, %6 : vector<8x200xf32>
    %c0_6 = arith.constant 0 : index
    %c0_7 = arith.constant 0 : index
    %8 = vector.load %arg3[%c0_6, %c0_7] : memref<8x200xf32, #tpu.memory_space<vmem>>, vector<8x200xf32>
    tpu.vector_store %arg3[%c0_6, %c0_7], %7 {strides = array<i32>} : memref<8x200xf32, #tpu.memory_space<vmem>>, vector<8x200xf32>,
    return
  }
}

module attributes {stable_mosaic.version = 11 : i64} {
  func.func @_mlp_core_kernel(%arg0: memref<1x1xf32, #tpu.memory_space<smem>>, %arg1: memref<2x200xf32, #tpu.memory_space<vmem>>, %arg2: memref<200x128xf32, #tpu.memory_space<vmem>>, %arg3: memref<1x128xf32, #tpu.memory_space<vmem>>, %arg4: memref<128x64xf32, #tpu.memory_space<vmem>>, %arg5: memref<1x64xf32, #tpu.memory_space<vmem>>, %arg6: memref<64x64xf32, #tpu.memory_space<vmem>>, %arg7: memref<1x64xf32, #tpu.memory_space<vmem>>, %arg8: memref<64x32xf32, #tpu.memory_space<vmem>>, %arg9: memref<1x32xf32, #tpu.memory_space<vmem>>, %arg10: memref<32x8xf32, #tpu.memory_space<vmem>>, %arg11: memref<1x8xf32, #tpu.memory_space<vmem>>, %arg12: memref<32x8xf32, #tpu.memory_space<vmem>>, %arg13: memref<1x8xf32, #tpu.memory_space<vmem>>, %arg14: memref<8x32xf32, #tpu.memory_space<vmem>>, %arg15: memref<1x32xf32, #tpu.memory_space<vmem>>, %arg16: memref<32x64xf32, #tpu.memory_space<vmem>>, %arg17: memref<1x64xf32, #tpu.memory_space<vmem>>, %arg18: memref<64x128xf32, #tpu.memory_space<vmem>>, %arg19: memref<1x128xf32, #tpu.memory_space<vmem>>, %arg20: memref<128x200xf32, #tpu.memory_space<vmem>>, %arg21: memref<1x200xf32, #tpu.memory_space<vmem>>, %arg22: memref<2x200xf32, #tpu.memory_space<vmem>>, %arg23: memref<2x1xf32, #tpu.memory_space<vmem>>) attributes {dimension_semantics = [], scalar_prefetch = 0 : i64, scratch_operands = 0 : i64, tpu.core_type = #tpu.core_type<tc>} {
    %c0 = arith.constant 0 : index
    %c0_0 = arith.constant 0 : index
    %0 = vector.load %arg1[%c0, %c0_0] : memref<2x200xf32, #tpu.memory_space<vmem>>, vector<2x200xf32>
    %c0_1 = arith.constant 0 : index
    %c0_2 = arith.constant 0 : index
    %1 = vector.load %arg2[%c0_1, %c0_2] : memref<200x128xf32, #tpu.memory_space<vmem>>, vector<200x128xf32>
    %cst = arith.constant dense<0.000000e+00> : vector<2x128xf32>
    %2 = tpu.matmul %0, %1, %cst {dimension_numbers = #tpu.dot_dimension_numbers<[1], [0], [0], [1], [0, 0, 1, 1], [], []>} : vector<2x200xf32>, vector<200x128xf32>, vector<2x128xf32> -> vector<2x128xf32>
    %c0_3 = arith.constant 0 : index
    %c0_4 = arith.constant 0 : index
    %3 = vector.load %arg3[%c0_3, %c0_4] : memref<1x128xf32, #tpu.memory_space<vmem>>, vector<1x128xf32>
    %4 = vector.broadcast %3 : vector<1x128xf32> to vector<2x128xf32>
    %5 = arith.addf %2, %4 : vector<2x128xf32>
    %cst_5 = arith.constant 0.000000e+00 : f32
    %6 = vector.broadcast %cst_5 : f32 to vector<2x128xf32>
    %7 = arith.maximumf %5, %6 : vector<2x128xf32>
    %c0_6 = arith.constant 0 : index
    %c0_7 = arith.constant 0 : index
    %8 = vector.load %arg4[%c0_6, %c0_7] : memref<128x64xf32, #tpu.memory_space<vmem>>, vector<128x64xf32>
    %cst_8 = arith.constant dense<0.000000e+00> : vector<2x64xf32>
    %9 = tpu.matmul %7, %8, %cst_8 {dimension_numbers = #tpu.dot_dimension_numbers<[1], [0], [0], [1], [0, 0, 1, 1], [], []>} : vector<2x128xf32>, vector<128x64xf32>, vector<2x64xf32> -> vector<2x64xf32>
    %c0_9 = arith.constant 0 : index
    %c0_10 = arith.constant 0 : index
    %10 = vector.load %arg5[%c0_9, %c0_10] : memref<1x64xf32, #tpu.memory_space<vmem>>, vector<1x64xf32>
    %11 = vector.broadcast %10 : vector<1x64xf32> to vector<2x64xf32>
    %12 = arith.addf %9, %11 : vector<2x64xf32>
    %cst_11 = arith.constant 0.000000e+00 : f32
    %13 = vector.broadcast %cst_11 : f32 to vector<2x64xf32>
    %14 = arith.maximumf %12, %13 : vector<2x64xf32>
    %c0_12 = arith.constant 0 : index
    %c0_13 = arith.constant 0 : index
    %15 = vector.load %arg6[%c0_12, %c0_13] : memref<64x64xf32, #tpu.memory_space<vmem>>, vector<64x64xf32>
    %cst_14 = arith.constant dense<0.000000e+00> : vector<2x64xf32>
    %16 = tpu.matmul %14, %15, %cst_14 {dimension_numbers = #tpu.dot_dimension_numbers<[1], [0], [0], [1], [0, 0, 1, 1], [], []>} : vector<2x64xf32>, vector<64x64xf32>, vector<2x64xf32> -> vector<2x64xf32>
    %c0_15 = arith.constant 0 : index
    %c0_16 = arith.constant 0 : index
    %17 = vector.load %arg7[%c0_15, %c0_16] : memref<1x64xf32, #tpu.memory_space<vmem>>, vector<1x64xf32>
    %18 = vector.broadcast %17 : vector<1x64xf32> to vector<2x64xf32>
    %19 = arith.addf %16, %18 : vector<2x64xf32>
    %cst_17 = arith.constant 0.000000e+00 : f32
    %20 = vector.broadcast %cst_17 : f32 to vector<2x64xf32>
    %21 = arith.maximumf %19, %20 : vector<2x64xf32>
    %c0_18 = arith.constant 0 : index
    %c0_19 = arith.constant 0 : index
    %22 = vector.load %arg8[%c0_18, %c0_19] : memref<64x32xf32, #tpu.memory_space<vmem>>, vector<64x32xf32>
    %cst_20 = arith.constant dense<0.000000e+00> : vector<2x32xf32>
    %23 = tpu.matmul %21, %22, %cst_20 {dimension_numbers = #tpu.dot_dimension_numbers<[1], [0], [0], [1], [0, 0, 1, 1], [], []>} : vector<2x64xf32>, vector<64x32xf32>, vector<2x32xf32> -> vector<2x32xf32>
    %c0_21 = arith.constant 0 : index
    %c0_22 = arith.constant 0 : index
    %24 = vector.load %arg9[%c0_21, %c0_22] : memref<1x32xf32, #tpu.memory_space<vmem>>, vector<1x32xf32>
    %25 = vector.broadcast %24 : vector<1x32xf32> to vector<2x32xf32>
    %26 = arith.addf %23, %25 : vector<2x32xf32>
    %cst_23 = arith.constant 0.000000e+00 : f32
    %27 = vector.broadcast %cst_23 : f32 to vector<2x32xf32>
    %28 = arith.maximumf %26, %27 : vector<2x32xf32>
    %c0_24 = arith.constant 0 : index
    %c0_25 = arith.constant 0 : index
    %29 = vector.load %arg10[%c0_24, %c0_25] : memref<32x8xf32, #tpu.memory_space<vmem>>, vector<32x8xf32>
    %cst_26 = arith.constant dense<0.000000e+00> : vector<2x8xf32>
    %30 = tpu.matmul %28, %29, %cst_26 {dimension_numbers = #tpu.dot_dimension_numbers<[1], [0], [0], [1], [0, 0, 1, 1], [], []>} : vector<2x32xf32>, vector<32x8xf32>, vector<2x8xf32> -> vector<2x8xf32>
    %c0_27 = arith.constant 0 : index
    %c0_28 = arith.constant 0 : index
    %31 = vector.load %arg11[%c0_27, %c0_28] : memref<1x8xf32, #tpu.memory_space<vmem>>, vector<1x8xf32>
    %32 = vector.broadcast %31 : vector<1x8xf32> to vector<2x8xf32>
    %33 = arith.addf %30, %32 : vector<2x8xf32>
    %c0_29 = arith.constant 0 : index
    %c0_30 = arith.constant 0 : index
    %34 = vector.load %arg12[%c0_29, %c0_30] : memref<32x8xf32, #tpu.memory_space<vmem>>, vector<32x8xf32>
    %cst_31 = arith.constant dense<0.000000e+00> : vector<2x8xf32>
    %35 = tpu.matmul %28, %34, %cst_31 {dimension_numbers = #tpu.dot_dimension_numbers<[1], [0], [0], [1], [0, 0, 1, 1], [], []>} : vector<2x32xf32>, vector<32x8xf32>, vector<2x8xf32> -> vector<2x8xf32>
    %c0_32 = arith.constant 0 : index
    %c0_33 = arith.constant 0 : index
    %36 = vector.load %arg13[%c0_32, %c0_33] : memref<1x8xf32, #tpu.memory_space<vmem>>, vector<1x8xf32>
    %37 = vector.broadcast %36 : vector<1x8xf32> to vector<2x8xf32>
    %38 = arith.addf %35, %37 : vector<2x8xf32>
    %39 = math.exp %38 : vector<2x8xf32>
    %c0_34 = arith.constant 0 : index
    %c0_35 = arith.constant 0 : index
    %40 = memref.load %arg0[%c0_34, %c0_35] : memref<1x1xf32, #tpu.memory_space<smem>>
    %41 = vector.broadcast %40 : f32 to vector<2x8xf32>
    %42 = arith.mulf %39, %41 : vector<2x8xf32>
    %43 = arith.addf %33, %42 : vector<2x8xf32>
    %cst_36 = arith.constant 5.000000e-01 : f32
    %44 = vector.broadcast %cst_36 : f32 to vector<2x8xf32>
    %45 = arith.mulf %44, %43 : vector<2x8xf32>
    %46 = arith.mulf %45, %43 : vector<2x8xf32>
    %cst_37 = arith.constant 5.000000e-01 : f32
    %47 = arith.mulf %cst_37, %40 : f32
    %48 = arith.mulf %47, %40 : f32
    %49 = vector.broadcast %48 : f32 to vector<2x8xf32>
    %50 = arith.subf %46, %49 : vector<2x8xf32>
    %51 = arith.subf %50, %38 : vector<2x8xf32>
    %cst_38 = arith.constant dense<0.000000e+00> : vector<2xf32>
    %52 = vector.multi_reduction <add>, %51, %cst_38 [1] : vector<2x8xf32> to vector<2xf32>
    %53 = vector.shape_cast %52 : vector<2xf32> to vector<2x1xf32>
    %c0_39 = arith.constant 0 : index
    %c0_40 = arith.constant 0 : index
    %54 = vector.load %arg23[%c0_39, %c0_40] : memref<2x1xf32, #tpu.memory_space<vmem>>, vector<2x1xf32>
    tpu.vector_store %arg23[%c0_39, %c0_40], %53 {strides = array<i32>} : memref<2x1xf32, #tpu.memory_space<vmem>>, vector<2x1xf32>,
    %c0_41 = arith.constant 0 : index
    %c0_42 = arith.constant 0 : index
    %55 = vector.load %arg14[%c0_41, %c0_42] : memref<8x32xf32, #tpu.memory_space<vmem>>, vector<8x32xf32>
    %cst_43 = arith.constant dense<0.000000e+00> : vector<2x32xf32>
    %56 = tpu.matmul %43, %55, %cst_43 {dimension_numbers = #tpu.dot_dimension_numbers<[1], [0], [0], [1], [0, 0, 1, 1], [], []>} : vector<2x8xf32>, vector<8x32xf32>, vector<2x32xf32> -> vector<2x32xf32>
    %c0_44 = arith.constant 0 : index
    %c0_45 = arith.constant 0 : index
    %57 = vector.load %arg15[%c0_44, %c0_45] : memref<1x32xf32, #tpu.memory_space<vmem>>, vector<1x32xf32>
    %58 = vector.broadcast %57 : vector<1x32xf32> to vector<2x32xf32>
    %59 = arith.addf %56, %58 : vector<2x32xf32>
    %cst_46 = arith.constant 0.000000e+00 : f32
    %60 = vector.broadcast %cst_46 : f32 to vector<2x32xf32>
    %61 = arith.maximumf %59, %60 : vector<2x32xf32>
    %c0_47 = arith.constant 0 : index
    %c0_48 = arith.constant 0 : index
    %62 = vector.load %arg16[%c0_47, %c0_48] : memref<32x64xf32, #tpu.memory_space<vmem>>, vector<32x64xf32>
    %cst_49 = arith.constant dense<0.000000e+00> : vector<2x64xf32>
    %63 = tpu.matmul %61, %62, %cst_49 {dimension_numbers = #tpu.dot_dimension_numbers<[1], [0], [0], [1], [0, 0, 1, 1], [], []>} : vector<2x32xf32>, vector<32x64xf32>, vector<2x64xf32> -> vector<2x64xf32>
    %c0_50 = arith.constant 0 : index
    %c0_51 = arith.constant 0 : index
    %64 = vector.load %arg17[%c0_50, %c0_51] : memref<1x64xf32, #tpu.memory_space<vmem>>, vector<1x64xf32>
    %65 = vector.broadcast %64 : vector<1x64xf32> to vector<2x64xf32>
    %66 = arith.addf %63, %65 : vector<2x64xf32>
    %cst_52 = arith.constant 0.000000e+00 : f32
    %67 = vector.broadcast %cst_52 : f32 to vector<2x64xf32>
    %68 = arith.maximumf %66, %67 : vector<2x64xf32>
    %c0_53 = arith.constant 0 : index
    %c0_54 = arith.constant 0 : index
    %69 = vector.load %arg18[%c0_53, %c0_54] : memref<64x128xf32, #tpu.memory_space<vmem>>, vector<64x128xf32>
    %cst_55 = arith.constant dense<0.000000e+00> : vector<2x128xf32>
    %70 = tpu.matmul %68, %69, %cst_55 {dimension_numbers = #tpu.dot_dimension_numbers<[1], [0], [0], [1], [0, 0, 1, 1], [], []>} : vector<2x64xf32>, vector<64x128xf32>, vector<2x128xf32> -> vector<2x128xf32>
    %c0_56 = arith.constant 0 : index
    %c0_57 = arith.constant 0 : index
    %71 = vector.load %arg19[%c0_56, %c0_57] : memref<1x128xf32, #tpu.memory_space<vmem>>, vector<1x128xf32>
    %72 = vector.broadcast %71 : vector<1x128xf32> to vector<2x128xf32>
    %73 = arith.addf %70, %72 : vector<2x128xf32>
    %cst_58 = arith.constant 0.000000e+00 : f32
    %74 = vector.broadcast %cst_58 : f32 to vector<2x128xf32>
    %75 = arith.maximumf %73, %74 : vector<2x128xf32>
    %c0_59 = arith.constant 0 : index
    %c0_60 = arith.constant 0 : index
    %76 = vector.load %arg20[%c0_59, %c0_60] : memref<128x200xf32, #tpu.memory_space<vmem>>, vector<128x200xf32>
    %cst_61 = arith.constant dense<0.000000e+00> : vector<2x200xf32>
    %77 = tpu.matmul %75, %76, %cst_61 {dimension_numbers = #tpu.dot_dimension_numbers<[1], [0], [0], [1], [0, 0, 1, 1], [], []>} : vector<2x128xf32>, vector<128x200xf32>, vector<2x200xf32> -> vector<2x200xf32>
    %c0_62 = arith.constant 0 : index
    %c0_63 = arith.constant 0 : index
    %78 = vector.load %arg21[%c0_62, %c0_63] : memref<1x200xf32, #tpu.memory_space<vmem>>, vector<1x200xf32>
    %79 = vector.broadcast %78 : vector<1x200xf32> to vector<2x200xf32>
    %80 = arith.addf %77, %79 : vector<2x200xf32>
    %cst_64 = arith.constant 0.000000e+00 : f32
    %81 = vector.broadcast %cst_64 : f32 to vector<2x200xf32>
    %82 = arith.maximumf %80, %81 : vector<2x200xf32>
    %c0_65 = arith.constant 0 : index
    %c0_66 = arith.constant 0 : index
    %83 = vector.load %arg22[%c0_65, %c0_66] : memref<2x200xf32, #tpu.memory_space<vmem>>, vector<2x200xf32>
    tpu.vector_store %arg22[%c0_65, %c0_66], %82 {strides = array<i32>} : memref<2x200xf32, #tpu.memory_space<vmem>>, vector<2x200xf32>,
    return
  }
}

module attributes {stable_mosaic.version = 11 : i64} {
  func.func @_convmm_kernel(%arg0: memref<8x72xf32, #tpu.memory_space<vmem>>, %arg1: memref<72x288xf32, #tpu.memory_space<vmem>>, %arg2: memref<8x1xf32, #tpu.memory_space<vmem>>, %arg3: memref<8x288xf32, #tpu.memory_space<vmem>>) attributes {dimension_semantics = [], scalar_prefetch = 0 : i64, scratch_operands = 0 : i64, tpu.core_type = #tpu.core_type<tc>} {
    %c0 = arith.constant 0 : index
    %c0_0 = arith.constant 0 : index
    %0 = vector.load %arg0[%c0, %c0_0] : memref<8x72xf32, #tpu.memory_space<vmem>>, vector<8x72xf32>
    %c0_1 = arith.constant 0 : index
    %c0_2 = arith.constant 0 : index
    %1 = vector.load %arg1[%c0_1, %c0_2] : memref<72x288xf32, #tpu.memory_space<vmem>>, vector<72x288xf32>
    %cst = arith.constant dense<0.000000e+00> : vector<8x288xf32>
    %2 = tpu.matmul %0, %1, %cst {dimension_numbers = #tpu.dot_dimension_numbers<[1], [0], [0], [1], [0, 0, 1, 1], [], []>} : vector<8x72xf32>, vector<72x288xf32>, vector<8x288xf32> -> vector<8x288xf32>
    %c0_3 = arith.constant 0 : index
    %c0_4 = arith.constant 0 : index
    %3 = vector.load %arg2[%c0_3, %c0_4] : memref<8x1xf32, #tpu.memory_space<vmem>>, vector<8x1xf32>
    %4 = vector.broadcast %3 : vector<8x1xf32> to vector<8x288xf32>
    %5 = arith.addf %2, %4 : vector<8x288xf32>
    %cst_5 = arith.constant 0.000000e+00 : f32
    %6 = vector.broadcast %cst_5 : f32 to vector<8x288xf32>
    %7 = arith.maximumf %5, %6 : vector<8x288xf32>
    %c0_6 = arith.constant 0 : index
    %c0_7 = arith.constant 0 : index
    %8 = vector.load %arg3[%c0_6, %c0_7] : memref<8x288xf32, #tpu.memory_space<vmem>>, vector<8x288xf32>
    tpu.vector_store %arg3[%c0_6, %c0_7], %7 {strides = array<i32>} : memref<8x288xf32, #tpu.memory_space<vmem>>, vector<8x288xf32>,
    return
  }
}

module attributes {stable_mosaic.version = 11 : i64} {
  func.func @_convmm_kernel(%arg0: memref<4x72xf32, #tpu.memory_space<vmem>>, %arg1: memref<72x392xf32, #tpu.memory_space<vmem>>, %arg2: memref<4x1xf32, #tpu.memory_space<vmem>>, %arg3: memref<4x392xf32, #tpu.memory_space<vmem>>) attributes {dimension_semantics = [], scalar_prefetch = 0 : i64, scratch_operands = 0 : i64, tpu.core_type = #tpu.core_type<tc>} {
    %c0 = arith.constant 0 : index
    %c0_0 = arith.constant 0 : index
    %0 = vector.load %arg0[%c0, %c0_0] : memref<4x72xf32, #tpu.memory_space<vmem>>, vector<4x72xf32>
    %c0_1 = arith.constant 0 : index
    %c0_2 = arith.constant 0 : index
    %1 = vector.load %arg1[%c0_1, %c0_2] : memref<72x392xf32, #tpu.memory_space<vmem>>, vector<72x392xf32>
    %cst = arith.constant dense<0.000000e+00> : vector<4x392xf32>
    %2 = tpu.matmul %0, %1, %cst {dimension_numbers = #tpu.dot_dimension_numbers<[1], [0], [0], [1], [0, 0, 1, 1], [], []>} : vector<4x72xf32>, vector<72x392xf32>, vector<4x392xf32> -> vector<4x392xf32>
    %c0_3 = arith.constant 0 : index
    %c0_4 = arith.constant 0 : index
    %3 = vector.load %arg2[%c0_3, %c0_4] : memref<4x1xf32, #tpu.memory_space<vmem>>, vector<4x1xf32>
    %4 = vector.broadcast %3 : vector<4x1xf32> to vector<4x392xf32>
    %5 = arith.addf %2, %4 : vector<4x392xf32>
    %cst_5 = arith.constant 0.000000e+00 : f32
    %6 = vector.broadcast %cst_5 : f32 to vector<4x392xf32>
    %7 = arith.maximumf %5, %6 : vector<4x392xf32>
    %c0_6 = arith.constant 0 : index
    %c0_7 = arith.constant 0 : index
    %8 = vector.load %arg3[%c0_6, %c0_7] : memref<4x392xf32, #tpu.memory_space<vmem>>, vector<4x392xf32>
    tpu.vector_store %arg3[%c0_6, %c0_7], %7 {strides = array<i32>} : memref<4x392xf32, #tpu.memory_space<vmem>>, vector<4x392xf32>,
    return
  }
}

module attributes {stable_mosaic.version = 11 : i64} {
  func.func @_final_deconv_loss_kernel(%arg0: memref<1x1xf32, #tpu.memory_space<smem>>, %arg1: memref<1x36xf32, #tpu.memory_space<vmem>>, %arg2: memref<36x512xf32, #tpu.memory_space<vmem>>, %arg3: memref<1x1xf32, #tpu.memory_space<vmem>>, %arg4: memref<1x512xf32, #tpu.memory_space<vmem>>, %arg5: memref<2x1xf32, #tpu.memory_space<vmem>>, %arg6: memref<1x512xf32, #tpu.memory_space<vmem>>, %arg7: memref<1x1xf32, #tpu.memory_space<vmem>>) attributes {dimension_semantics = [], scalar_prefetch = 0 : i64, scratch_operands = 0 : i64, tpu.core_type = #tpu.core_type<tc>} {
    %c0 = arith.constant 0 : index
    %c0_0 = arith.constant 0 : index
    %0 = vector.load %arg1[%c0, %c0_0] : memref<1x36xf32, #tpu.memory_space<vmem>>, vector<1x36xf32>
    %c0_1 = arith.constant 0 : index
    %c0_2 = arith.constant 0 : index
    %1 = vector.load %arg2[%c0_1, %c0_2] : memref<36x512xf32, #tpu.memory_space<vmem>>, vector<36x512xf32>
    %cst = arith.constant dense<0.000000e+00> : vector<1x512xf32>
    %2 = tpu.matmul %0, %1, %cst {dimension_numbers = #tpu.dot_dimension_numbers<[1], [0], [0], [1], [0, 0, 1, 1], [], []>} : vector<1x36xf32>, vector<36x512xf32>, vector<1x512xf32> -> vector<1x512xf32>
    %c0_3 = arith.constant 0 : index
    %c0_4 = arith.constant 0 : index
    %3 = vector.load %arg3[%c0_3, %c0_4] : memref<1x1xf32, #tpu.memory_space<vmem>>, vector<1x1xf32>
    %4 = vector.broadcast %3 : vector<1x1xf32> to vector<1x512xf32>
    %5 = arith.addf %2, %4 : vector<1x512xf32>
    %6 = arith.negf %5 : vector<1x512xf32>
    %7 = math.exp %6 : vector<1x512xf32>
    %cst_5 = arith.constant 1.000000e+00 : f32
    %8 = vector.broadcast %cst_5 : f32 to vector<1x512xf32>
    %9 = arith.addf %8, %7 : vector<1x512xf32>
    %10 = arith.divf %8, %9 : vector<1x512xf32>
    %c0_6 = arith.constant 0 : index
    %c0_7 = arith.constant 0 : index
    %11 = vector.load %arg6[%c0_6, %c0_7] : memref<1x512xf32, #tpu.memory_space<vmem>>, vector<1x512xf32>
    tpu.vector_store %arg6[%c0_6, %c0_7], %10 {strides = array<i32>} : memref<1x512xf32, #tpu.memory_space<vmem>>, vector<1x512xf32>,
    %c0_8 = arith.constant 0 : index
    %c0_9 = arith.constant 0 : index
    %12 = memref.load %arg0[%c0_8, %c0_9] : memref<1x1xf32, #tpu.memory_space<smem>>
    %cst_10 = arith.constant -2.000000e+00 : f32
    %13 = arith.mulf %cst_10, %12 : f32
    %14 = math.exp %13 : f32
    %cst_11 = arith.constant 6.28318548 : f32
    %15 = math.log %cst_11 : f32
    %cst_12 = arith.constant 5.000000e-01 : f32
    %16 = arith.mulf %cst_12, %15 : f32
    %c0_13 = arith.constant 0 : index
    %c0_14 = arith.constant 0 : index
    %17 = vector.load %arg4[%c0_13, %c0_14] : memref<1x512xf32, #tpu.memory_space<vmem>>, vector<1x512xf32>
    %18 = arith.subf %17, %10 : vector<1x512xf32>
    %cst_15 = arith.constant -5.000000e-01 : f32
    %19 = vector.broadcast %cst_15 : f32 to vector<1x512xf32>
    %20 = arith.mulf %19, %18 : vector<1x512xf32>
    %21 = arith.mulf %20, %18 : vector<1x512xf32>
    %22 = vector.broadcast %14 : f32 to vector<1x512xf32>
    %23 = arith.mulf %21, %22 : vector<1x512xf32>
    %24 = vector.broadcast %12 : f32 to vector<1x512xf32>
    %25 = arith.subf %23, %24 : vector<1x512xf32>
    %26 = vector.broadcast %16 : f32 to vector<1x512xf32>
    %27 = arith.subf %25, %26 : vector<1x512xf32>
    %cst_16 = arith.constant dense<0.000000e+00> : vector<1xf32>
    %28 = vector.multi_reduction <add>, %27, %cst_16 [1] : vector<1x512xf32> to vector<1xf32>
    %29 = vector.shape_cast %28 : vector<1xf32> to vector<1x1xf32>
    %c0_17 = arith.constant 0 : index
    %c0_18 = arith.constant 0 : index
    %30 = vector.load %arg5[%c0_17, %c0_18] : memref<2x1xf32, #tpu.memory_space<vmem>>, vector<2x1xf32>
    %cst_19 = arith.constant dense<0.000000e+00> : vector<1xf32>
    %31 = vector.multi_reduction <add>, %30, %cst_19 [0] : vector<2x1xf32> to vector<1xf32>
    %32 = vector.shape_cast %31 : vector<1xf32> to vector<1x1xf32>
    %33 = arith.subf %32, %29 : vector<1x1xf32>
    %c0_20 = arith.constant 0 : index
    %c0_21 = arith.constant 0 : index
    %34 = vector.load %arg7[%c0_20, %c0_21] : memref<1x1xf32, #tpu.memory_space<vmem>>, vector<1x1xf32>
    tpu.vector_store %arg7[%c0_20, %c0_21], %33 {strides = array<i32>} : memref<1x1xf32, #tpu.memory_space<vmem>>, vector<1x1xf32>,
    return
  }
}

</mosaic_0001>

<llo_original>
// kernel: vae_forward.7
$region0: #{vae_forward.7}
  #allocation0 [shape = 'u32[]', space=smem, size = 0x4, offset = 0x4, fixed_abs, tag = 'smem constant byte address 0x4 - core index']
  #allocation1 [shape = 'u32[144,128]{1,0:T(1,128)}', space=vmem, size = 0x12000, scoped, tag = 'internal scratch']
  %s0 = inlined_call_operand.hbm [shape: f32[4,9], index: 0, kind: input, shape index: {}]
  %s1 = inlined_call_operand.vmem [shape: f32[9,392], index: 1, kind: input, shape index: {}]
  %s2 = inlined_call_operand.vmem [shape: f32[4,1], index: 2, kind: input, shape index: {}]
  %s3 = inlined_call_operand.vmem [shape: f32[4,392], index: 3, kind: output, shape index: {}]
  %s4 = sld [smem:[#allocation0]]
  $region26: #{vae_forward.7} parent=0
    _
  %s6 = ssub.s32 1, %s4
  %s7 = scalar_select 0, %s6, %s4
  $region1: #{vae_forward.7} parent=0
    #allocation2 [shape = 'u8[2048]{0}', space=vmem, size = 0x800, scoped, tag = 'input window, operand 0, single buffered']
    #allocation3 [shape = 's32[1]{0}', space=sflag, size = 0x4, scoped, tag = 'scoped memory for vae_forward.7']
    %8 = vsyncpa [#allocation3], 0
    // Predicated region
    $region2: #{vae_forward.7} parent=1 // pred_check
      _
    $region3: #{vae_forward.7} parent=1 // pred_check_branch
      %10 = sbr.rel (0) target = $region5
    $region4: #{vae_forward.7} parent=1 // pred_region
      %s12 = ssub.s32 64, 64
      %13 = vsyncadd [#allocation3], %s12
      %s15 = sshll.u32 [#allocation2], 4
      %s16 = int_to_ptr.vmem [resolvable:$true] %s15
      %18 = dma.hbm_to_vmem [thread:$0]  %s0, 64, %s16, [#allocation3]
    $region5: #{vae_forward.7} parent=1 // pred_fallthru
      _
    // Predicated region
    $region6: #{vae_forward.7} parent=1 // pred_check
      _
    $region7: #{vae_forward.7} parent=1 // pred_check_branch
      %20 = sbr.rel (0) target = $region9
    $region8: #{vae_forward.7} parent=1 // pred_region
      _
    $region9: #{vae_forward.7} parent=1 // pred_fallthru
      _
    // Predicated region
    $region10: #{vae_forward.7} parent=1 // pred_check
      _
    $region11: #{vae_forward.7} parent=1 // pred_check_branch
      %22 = sbr.rel (0) target = $region13
    $region12: #{vae_forward.7} parent=1 // pred_region
      _
    $region13: #{vae_forward.7} parent=1 // pred_fallthru
      _
    // Predicated region
    $region14: #{vae_forward.7} parent=1 // pred_check
      _
    $region15: #{vae_forward.7} parent=1 // pred_check_branch
      %24 = sbr.rel (0) target = $region17
    $region16: #{vae_forward.7} parent=1 // pred_region
      %25 = dma.done [#allocation3], 64
    $region17: #{vae_forward.7} parent=1 // pred_fallthru
      _
    %v26 = vld [vmem:[#allocation2] sm:$0xf]
    %v27 = vld [vmem:[%s1] sm:$0xff]
    %v28 = vld [vmem:[%s1 + $0x8] sm:$0xff]
    %v29 = vld [vmem:[%s1 + $0x10] sm:$0xff]
    %v30 = vld [vmem:[%s1 + $0x18] sm:$0xff]
    %v31 = vld [vmem:[%s1 + $0x20] sm:$0x1]
    %v32 = vld [vmem:[%s1 + $0x28] sm:$0x1]
    %v33 = vld [vmem:[%s1 + $0x30] sm:$0x1]
    %v34 = vld [vmem:[%s1 + $0x38] sm:$0x1]
    %v35 = vld [vmem:[%s2] sm:$0xf]
    %37 = vset.pattern.permute.xlu0 0
    %38 = vperm.xlu0 %37, %v35
    %v39 = vpop.permute.xlu0 %38
    %vm41 = vcmask 72704
    %v43 = vsel %vm41, %v26, 0
    %vm45 = vcmask 1040384
    %v47 = vsel %vm45, %v31, 0
    %v50 = vsel %vm45, %v32, 0
    %v53 = vsel %vm45, %v33, 0
    %v56 = vsel %vm45, %v34, 0
    %58 = vmatprep.subr.mxu0 %v28
    %59 = vmatpush1.msra.mxu0 %v27
    %60 = vmatprep.subr.mxu0 %v50
    %61 = vmatpush1.msra.mxu0 %v47
    %62 = vmatprep.subr.mxu0 0.0
    %63 = vmatpush1.msra.mxu0 0.0
    %64 = vmatprep.subr.mxu0 0.0
    %65 = vmatpush1.msra.mxu0 0.0
    %66 = vmatprep.subr.mxu0 0.0
    %67 = vmatpush1.msra.mxu0 0.0
    %68 = vmatprep.subr.mxu0 0.0
    %69 = vmatpush1.msra.mxu0 0.0
    %70 = vmatprep.subr.mxu0 0.0
    %71 = vmatpush1.msra.mxu0 0.0
    %72 = vmatprep.subr.mxu0 0.0
    %73 = vmatpush1.msra.mxu0 0.0
    %74 = vmatprep.subr.mxu0 0.0
    %75 = vmatpush1.msra.mxu0 0.0
    %76 = vmatprep.subr.mxu0 0.0
    %77 = vmatpush1.msra.mxu0 0.0
    %78 = vmatprep.subr.mxu0 0.0
    %79 = vmatpush1.msra.mxu0 0.0
    %80 = vmatprep.subr.mxu0 0.0
    %81 = vmatpush1.msra.mxu0 0.0
    %82 = vmatprep.subr.mxu0 0.0
    %83 = vmatpush1.msra.mxu0 0.0
    %84 = vmatprep.subr.mxu0 0.0
    %85 = vmatpush1.msra.mxu0 0.0
    %86 = vmatprep.subr.mxu0 0.0
    %87 = vmatpush1.msra.mxu0 0.0
    %88 = vmatprep.subr.mxu0 0.0
    %89 = vmatpush1.msra.mxu0 0.0
    %90 = vmatprep.subr.mxu0 0.0
    %91 = vmatpush1.msra.mxu0 0.0
    %92 = vmatprep.subr.mxu0 0.0
    %93 = vmatpush1.msra.mxu0 0.0
    %94 = vmatprep.subr.mxu0 0.0
    %95 = vmatpush1.msra.mxu0 0.0
    %96 = vmatprep.subr.mxu0 0.0
    %97 = vmatpush1.msra.mxu0 0.0
    %98 = vmatprep.subr.mxu0 0.0
    %99 = vmatpush1.msra.mxu0 0.0
    %100 = vmatprep.subr.mxu0 0.0
    %101 = vmatpush1.msra.mxu0 0.0
    %102 = vmatprep.subr.mxu0 0.0
    %103 = vmatpush1.msra.mxu0 0.0
    %104 = vmatprep.subr.mxu0 0.0
    %105 = vmatpush1.msra.mxu0 0.0
    %106 = vmatprep.subr.mxu0 0.0
    %107 = vmatpush1.msra.mxu0 0.0
    %108 = vmatprep.subr.mxu0 0.0
    %109 = vmatpush1.msra.mxu0 0.0
    %110 = vmatprep.subr.mxu0 0.0
    %111 = vmatpush1.msra.mxu0 0.0
    %112 = vmatprep.subr.mxu0 0.0
    %113 = vmatpush1.msra.mxu0 0.0
    %114 = vmatprep.subr.mxu0 0.0
    %115 = vmatpush1.msra.mxu0 0.0
    %116 = vmatprep.subr.mxu0 0.0
    %117 = vmatpush1.msra.mxu0 0.0
    %118 = vmatprep.subr.mxu0 0.0
    %119 = vmatpush1.msra.mxu0 0.0
    %120 = vmatprep.subr.mxu0 0.0
    %121 = vmatpush1.msra.mxu0 0.0
    %122 = vmatprep.mubr.f32.mxu0 0.0
    %123 = vmatmul.mubr.f32.gmra.mrb[0].mxu0 %v43
    %v124 = vpop.f32.mrb[0].mxu0
    %v125 = vadd.f32 %v39, %v124
    %v126 = vpop.f32.mrb[0].mxu0
    %v127 = vadd.f32 %v39, %v126
    %128 = vdwg.mxu0
    %129 = vmatprep.subr.mxu0 %v30
    %130 = vmatpush1.msra.mxu0 %v29
    %131 = vmatprep.subr.mxu0 %v56
    %132 = vmatpush1.msra.mxu0 %v53
    %133 = vmatprep.subr.mxu0 0.0
    %134 = vmatpush1.msra.mxu0 0.0
    %135 = vmatprep.subr.mxu0 0.0
    %136 = vmatpush1.msra.mxu0 0.0
    %137 = vmatprep.subr.mxu0 0.0
    %138 = vmatpush1.msra.mxu0 0.0
    %139 = vmatprep.subr.mxu0 0.0
    %140 = vmatpush1.msra.mxu0 0.0
    %141 = vmatprep.subr.mxu0 0.0
    %142 = vmatpush1.msra.mxu0 0.0
    %143 = vmatprep.subr.mxu0 0.0
    %144 = vmatpush1.msra.mxu0 0.0
    %145 = vmatprep.subr.mxu0 0.0
    %146 = vmatpush1.msra.mxu0 0.0
    %147 = vmatprep.subr.mxu0 0.0
    %148 = vmatpush1.msra.mxu0 0.0
    %149 = vmatprep.subr.mxu0 0.0
    %150 = vmatpush1.msra.mxu0 0.0
    %151 = vmatprep.subr.mxu0 0.0
    %152 = vmatpush1.msra.mxu0 0.0
    %153 = vmatprep.subr.mxu0 0.0
    %154 = vmatpush1.msra.mxu0 0.0
    %155 = vmatprep.subr.mxu0 0.0
    %156 = vmatpush1.msra.mxu0 0.0
    %157 = vmatprep.subr.mxu0 0.0
    %158 = vmatpush1.msra.mxu0 0.0
    %159 = vmatprep.subr.mxu0 0.0
    %160 = vmatpush1.msra.mxu0 0.0
    %161 = vmatprep.subr.mxu0 0.0
    %162 = vmatpush1.msra.mxu0 0.0
    %163 = vmatprep.subr.mxu0 0.0
    %164 = vmatpush1.msra.mxu0 0.0
    %165 = vmatprep.subr.mxu0 0.0
    %166 = vmatpush1.msra.mxu0 0.0
    %167 = vmatprep.subr.mxu0 0.0
    %168 = vmatpush1.msra.mxu0 0.0
    %169 = vmatprep.subr.mxu0 0.0
    %170 = vmatpush1.msra.mxu0 0.0
    %171 = vmatprep.subr.mxu0 0.0
    %172 = vmatpush1.msra.mxu0 0.0
    %173 = vmatprep.subr.mxu0 0.0
    %174 = vmatpush1.msra.mxu0 0.0
    %175 = vmatprep.subr.mxu0 0.0
    %176 = vmatpush1.msra.mxu0 0.0
    %177 = vmatprep.subr.mxu0 0.0
    %178 = vmatpush1.msra.mxu0 0.0
    %179 = vmatprep.subr.mxu0 0.0
    %180 = vmatpush1.msra.mxu0 0.0
    %181 = vmatprep.subr.mxu0 0.0
    %182 = vmatpush1.msra.mxu0 0.0
    %183 = vmatprep.subr.mxu0 0.0
    %184 = vmatpush1.msra.mxu0 0.0
    %185 = vmatprep.subr.mxu0 0.0
    %186 = vmatpush1.msra.mxu0 0.0
    %187 = vmatprep.subr.mxu0 0.0
    %188 = vmatpush1.msra.mxu0 0.0
    %189 = vmatprep.subr.mxu0 0.0
    %190 = vmatpush1.msra.mxu0 0.0
    %191 = vmatprep.subr.mxu0 0.0
    %192 = vmatpush1.msra.mxu0 0.0
    %193 = vmatprep.mubr.f32.mxu0 0.0
    %194 = vmatmul.mubr.f32.gmra.mrb[0].mxu0 %v43
    %v195 = vpop.f32.mrb[0].mxu0
    %v196 = vadd.f32 %v39, %v195
    %v197 = vpop.f32.mrb[0].mxu0
    %v198 = vadd.f32 %v39, %v197
    %199 = vdwg.mxu0
    %v200 = vmax.f32 %v125, 0.0
    %v201 = vmax.f32 %v127, 0.0
    %v202 = vmax.f32 %v196, 0.0
    %v203 = vmax.f32 %v198, 0.0
    %v208 = vcombine.low %v200, %v201
    %v209 = vcombine.low %v202, %v203
    %212 = vst [vmem:[%s3] sm:$0xff] %v208
    %vm213 = vcmask 1043456
    %vm214 = vcmask 64516
    %vm215 = vmor %vm214, %vm213
    %216 = vst.msk [vmem:[%s3 + $0x8] sm:$0xff] %vm215, %v209
    // Predicated region
    $region18: #{vae_forward.7} parent=1 // pred_check
      _
    $region19: #{vae_forward.7} parent=1 // pred_check_branch
      %218 = sbr.rel (0) target = $region21
    $region20: #{vae_forward.7} parent=1 // pred_region
      _
    $region21: #{vae_forward.7} parent=1 // pred_fallthru
      _
    // Predicated region
    $region22: #{vae_forward.7} parent=1 // pred_check
      _
    $region23: #{vae_forward.7} parent=1 // pred_check_branch
      %220 = sbr.rel (0) target = $region25
    $region24: #{vae_forward.7} parent=1 // pred_region
      _
    $region25: #{vae_forward.7} parent=1 // pred_fallthru
      _
    %221 = vsyncpa [#allocation3], 1

// kernel: vae_forward.8
$region0: #{vae_forward.8}
  #allocation0 [shape = 'u32[]', space=smem, size = 0x4, offset = 0x4, fixed_abs, tag = 'smem constant byte address 0x4 - core index']
  #allocation1 [shape = 'u32[144,128]{1,0:T(1,128)}', space=vmem, size = 0x12000, scoped, tag = 'internal scratch']
  %s0 = inlined_call_operand.vmem [shape: f32[8,36], index: 0, kind: input, shape index: {}]
  %s1 = inlined_call_operand.vmem [shape: f32[36,288], index: 1, kind: input, shape index: {}]
  %s2 = inlined_call_operand.vmem [shape: f32[8,1], index: 2, kind: input, shape index: {}]
  %s3 = inlined_call_operand.vmem [shape: f32[8,288], index: 3, kind: output, shape index: {}]
  %s4 = sld [smem:[#allocation0]]
  $region22: #{vae_forward.8} parent=0
    _
  %s6 = ssub.s32 1, %s4
  %s7 = scalar_select 0, %s6, %s4
  // Predicated region
  $region2: #{vae_forward.8} parent=0 // pred_check
    _
  $region3: #{vae_forward.8} parent=0 // pred_check_branch
    %9 = sbr.rel (0) target = $region5
  $region4: #{vae_forward.8} parent=0 // pred_region
    _
  $region5: #{vae_forward.8} parent=0 // pred_fallthru
    _
  // Predicated region
  $region6: #{vae_forward.8} parent=0 // pred_check
    _
  $region7: #{vae_forward.8} parent=0 // pred_check_branch
    %11 = sbr.rel (0) target = $region9
  $region8: #{vae_forward.8} parent=0 // pred_region
    _
  $region9: #{vae_forward.8} parent=0 // pred_fallthru
    _
  // Predicated region
  $region10: #{vae_forward.8} parent=0 // pred_check
    _
  $region11: #{vae_forward.8} parent=0 // pred_check_branch
    %13 = sbr.rel (0) target = $region13
  $region12: #{vae_forward.8} parent=0 // pred_region
    _
  $region13: #{vae_forward.8} parent=0 // pred_fallthru
    _
  %v14 = vld [vmem:[%s0] sm:$0xff]
  %v15 = vld [vmem:[%s1] sm:$0xff]
  %v16 = vld [vmem:[%s1 + $0x8] sm:$0xff]
  %v17 = vld [vmem:[%s1 + $0x10] sm:$0xff]
  %v18 = vld [vmem:[%s1 + $0x18] sm:$0xff]
  %v19 = vld [vmem:[%s1 + $0x20] sm:$0xff]
  %v20 = vld [vmem:[%s1 + $0x28] sm:$0xff]
  %v21 = vld [vmem:[%s1 + $0x30] sm:$0xff]
  %v22 = vld [vmem:[%s1 + $0x38] sm:$0xff]
  %v23 = vld [vmem:[%s1 + $0x40] sm:$0xff]
  %v24 = vld [vmem:[%s1 + $0x48] sm:$0xff]
  %v25 = vld [vmem:[%s1 + $0x50] sm:$0xff]
  %v26 = vld [vmem:[%s1 + $0x58] sm:$0xff]
  %v27 = vld [vmem:[%s1 + $0x60] sm:$0xf]
  %v28 = vld [vmem:[%s1 + $0x68] sm:$0xf]
  %v29 = vld [vmem:[%s1 + $0x70] sm:$0xf]
  %v30 = vld [vmem:[%s2] sm:$0xff]
  %32 = vset.pattern.permute.xlu0 0
  %33 = vperm.xlu0 %32, %v30
  %v34 = vpop.permute.xlu0 %33
  %vm36 = vcmask 293888
  %v38 = vsel %vm36, %v14, 0
  %vm40 = vcmask 1043456
  %v42 = vsel %vm40, %v27, 0
  %v45 = vsel %vm40, %v28, 0
  %v48 = vsel %vm40, %v29, 0
  %50 = vmatprep.subr.mxu0 %v16
  %51 = vmatpush1.msra.mxu0 %v15
  %52 = vmatprep.subr.mxu0 %v19
  %53 = vmatpush1.msra.mxu0 %v18
  %54 = vmatprep.subr.mxu0 %v22
  %55 = vmatpush1.msra.mxu0 %v21
  %56 = vmatprep.subr.mxu0 %v25
  %57 = vmatpush1.msra.mxu0 %v24
  %58 = vmatprep.subr.mxu0 %v45
  %59 = vmatpush1.msra.mxu0 %v42
  %60 = vmatprep.subr.mxu0 0.0
  %61 = vmatpush1.msra.mxu0 0.0
  %62 = vmatprep.subr.mxu0 0.0
  %63 = vmatpush1.msra.mxu0 0.0
  %64 = vmatprep.subr.mxu0 0.0
  %65 = vmatpush1.msra.mxu0 0.0
  %66 = vmatprep.subr.mxu0 0.0
  %67 = vmatpush1.msra.mxu0 0.0
  %68 = vmatprep.subr.mxu0 0.0
  %69 = vmatpush1.msra.mxu0 0.0
  %70 = vmatprep.subr.mxu0 0.0
  %71 = vmatpush1.msra.mxu0 0.0
  %72 = vmatprep.subr.mxu0 0.0
  %73 = vmatpush1.msra.mxu0 0.0
  %74 = vmatprep.subr.mxu0 0.0
  %75 = vmatpush1.msra.mxu0 0.0
  %76 = vmatprep.subr.mxu0 0.0
  %77 = vmatpush1.msra.mxu0 0.0
  %78 = vmatprep.subr.mxu0 0.0
  %79 = vmatpush1.msra.mxu0 0.0
  %80 = vmatprep.subr.mxu0 0.0
  %81 = vmatpush1.msra.mxu0 0.0
  %82 = vmatprep.subr.mxu0 0.0
  %83 = vmatpush1.msra.mxu0 0.0
  %84 = vmatprep.subr.mxu0 0.0
  %85 = vmatpush1.msra.mxu0 0.0
  %86 = vmatprep.subr.mxu0 0.0
  %87 = vmatpush1.msra.mxu0 0.0
  %88 = vmatprep.subr.mxu0 0.0
  %89 = vmatpush1.msra.mxu0 0.0
  %90 = vmatprep.subr.mxu0 0.0
  %91 = vmatpush1.msra.mxu0 0.0
  %92 = vmatprep.subr.mxu0 0.0
  %93 = vmatpush1.msra.mxu0 0.0
  %94 = vmatprep.subr.mxu0 0.0
  %95 = vmatpush1.msra.mxu0 0.0
  %96 = vmatprep.subr.mxu0 0.0
  %97 = vmatpush1.msra.mxu0 0.0
  %98 = vmatprep.subr.mxu0 0.0
  %99 = vmatpush1.msra.mxu0 0.0
  %100 = vmatprep.subr.mxu0 0.0
  %101 = vmatpush1.msra.mxu0 0.0
  %102 = vmatprep.subr.mxu0 0.0
  %103 = vmatpush1.msra.mxu0 0.0
  %104 = vmatprep.subr.mxu0 0.0
  %105 = vmatpush1.msra.mxu0 0.0
  %106 = vmatprep.subr.mxu0 0.0
  %107 = vmatpush1.msra.mxu0 0.0
  %108 = vmatprep.subr.mxu0 0.0
  %109 = vmatpush1.msra.mxu0 0.0
  %110 = vmatprep.subr.mxu0 0.0
  %111 = vmatpush1.msra.mxu0 0.0
  %112 = vmatprep.subr.mxu0 0.0
  %113 = vmatpush1.msra.mxu0 0.0
  %114 = vmatprep.mubr.f32.mxu0 0.0
  %115 = vmatmul.mubr.f32.gmra.mrb[0].mxu0 %v38
  %v116 = vpop.f32.mrb[0].mxu0
  %v117 = vadd.f32 %v34, %v116
  %v118 = vpop.f32.mrb[0].mxu0
  %v119 = vadd.f32 %v34, %v118
  %120 = vdwg.mxu0
  %121 = vmatprep.subr.mxu0 0.0
  %122 = vmatpush1.msra.mxu0 %v17
  %123 = vmatprep.subr.mxu0 0.0
  %124 = vmatpush1.msra.mxu0 %v20
  %125 = vmatprep.subr.mxu0 0.0
  %126 = vmatpush1.msra.mxu0 %v23
  %127 = vmatprep.subr.mxu0 0.0
  %128 = vmatpush1.msra.mxu0 %v26
  %129 = vmatprep.subr.mxu0 0.0
  %130 = vmatpush1.msra.mxu0 %v48
  %131 = vmatprep.subr.mxu0 0.0
  %132 = vmatpush1.msra.mxu0 0.0
  %133 = vmatprep.subr.mxu0 0.0
  %134 = vmatpush1.msra.mxu0 0.0
  %135 = vmatprep.subr.mxu0 0.0
  %136 = vmatpush1.msra.mxu0 0.0
  %137 = vmatprep.subr.mxu0 0.0
  %138 = vmatpush1.msra.mxu0 0.0
  %139 = vmatprep.subr.mxu0 0.0
  %140 = vmatpush1.msra.mxu0 0.0
  %141 = vmatprep.subr.mxu0 0.0
  %142 = vmatpush1.msra.mxu0 0.0
  %143 = vmatprep.subr.mxu0 0.0
  %144 = vmatpush1.msra.mxu0 0.0
  %145 = vmatprep.subr.mxu0 0.0
  %146 = vmatpush1.msra.mxu0 0.0
  %147 = vmatprep.subr.mxu0 0.0
  %148 = vmatpush1.msra.mxu0 0.0
  %149 = vmatprep.subr.mxu0 0.0
  %150 = vmatpush1.msra.mxu0 0.0
  %151 = vmatprep.subr.mxu0 0.0
  %152 = vmatpush1.msra.mxu0 0.0
  %153 = vmatprep.subr.mxu0 0.0
  %154 = vmatpush1.msra.mxu0 0.0
  %155 = vmatprep.subr.mxu0 0.0
  %156 = vmatpush1.msra.mxu0 0.0
  %157 = vmatprep.subr.mxu0 0.0
  %158 = vmatpush1.msra.mxu0 0.0
  %159 = vmatprep.subr.mxu0 0.0
  %160 = vmatpush1.msra.mxu0 0.0
  %161 = vmatprep.subr.mxu0 0.0
  %162 = vmatpush1.msra.mxu0 0.0
  %163 = vmatprep.subr.mxu0 0.0
  %164 = vmatpush1.msra.mxu0 0.0
  %165 = vmatprep.subr.mxu0 0.0
  %166 = vmatpush1.msra.mxu0 0.0
  %167 = vmatprep.subr.mxu0 0.0
  %168 = vmatpush1.msra.mxu0 0.0
  %169 = vmatprep.subr.mxu0 0.0
  %170 = vmatpush1.msra.mxu0 0.0
  %171 = vmatprep.subr.mxu0 0.0
  %172 = vmatpush1.msra.mxu0 0.0
  %173 = vmatprep.subr.mxu0 0.0
  %174 = vmatpush1.msra.mxu0 0.0
  %175 = vmatprep.subr.mxu0 0.0
  %176 = vmatpush1.msra.mxu0 0.0
  %177 = vmatprep.subr.mxu0 0.0
  %178 = vmatpush1.msra.mxu0 0.0
  %179 = vmatprep.subr.mxu0 0.0
  %180 = vmatpush1.msra.mxu0 0.0
  %181 = vmatprep.subr.mxu0 0.0
  %182 = vmatpush1.msra.mxu0 0.0
  %183 = vmatprep.subr.mxu0 0.0
  %184 = vmatpush1.msra.mxu0 0.0
  %185 = vmatprep.mubr.f32.mxu0 0.0
  %186 = vmatmul.mubr.f32.gmra.mrb[0].mxu0 %v38
  %v187 = vpop.f32.mrb[0].mxu0
  %v188 = vadd.f32 %v34, %v187
  %v189 = vpop.f32.mrb[0].mxu0
  %190 = vdwg.mxu0
  %v191 = vmax.f32 %v117, 0.0
  %v192 = vmax.f32 %v119, 0.0
  %v193 = vmax.f32 %v188, 0.0
  %194 = vst [vmem:[%s3] sm:$0xff] %v191
  %195 = vst [vmem:[%s3 + $0x8] sm:$0xff] %v192
  %vm196 = vcmask 261120
  %197 = vst.msk [vmem:[%s3 + $0x10] sm:$0xff] %vm196, %v193
  // Predicated region
  $region14: #{vae_forward.8} parent=0 // pred_check
    _
  $region15: #{vae_forward.8} parent=0 // pred_check_branch
    %199 = sbr.rel (0) target = $region17
  $region16: #{vae_forward.8} parent=0 // pred_region
    _
  $region17: #{vae_forward.8} parent=0 // pred_fallthru
    _
  // Predicated region
  $region18: #{vae_forward.8} parent=0 // pred_check
    _
  $region19: #{vae_forward.8} parent=0 // pred_check_branch
    %201 = sbr.rel (0) target = $region21
  $region20: #{vae_forward.8} parent=0 // pred_region
    _
  $region21: #{vae_forward.8} parent=0 // pred_fallthru
    _

// kernel: vae_forward.9
$region0: #{vae_forward.9}
  #allocation0 [shape = 'u32[]', space=smem, size = 0x4, offset = 0x4, fixed_abs, tag = 'smem constant byte address 0x4 - core index']
  #allocation1 [shape = 'u32[144,128]{1,0:T(1,128)}', space=vmem, size = 0x12000, scoped, tag = 'internal scratch']
  %s0 = inlined_call_operand.vmem [shape: f32[8,72], index: 0, kind: input, shape index: {}]
  %s1 = inlined_call_operand.vmem [shape: f32[72,200], index: 1, kind: input, shape index: {}]
  %s2 = inlined_call_operand.vmem [shape: f32[8,1], index: 2, kind: input, shape index: {}]
  %s3 = inlined_call_operand.vmem [shape: f32[8,200], index: 3, kind: output, shape index: {}]
  %s4 = sld [smem:[#allocation0]]
  $region22: #{vae_forward.9} parent=0
    _
  %s6 = ssub.s32 1, %s4
  %s7 = scalar_select 0, %s6, %s4
  // Predicated region
  $region2: #{vae_forward.9} parent=0 // pred_check
    _
  $region3: #{vae_forward.9} parent=0 // pred_check_branch
    %9 = sbr.rel (0) target = $region5
  $region4: #{vae_forward.9} parent=0 // pred_region
    _
  $region5: #{vae_forward.9} parent=0 // pred_fallthru
    _
  // Predicated region
  $region6: #{vae_forward.9} parent=0 // pred_check
    _
  $region7: #{vae_forward.9} parent=0 // pred_check_branch
    %11 = sbr.rel (0) target = $region9
  $region8: #{vae_forward.9} parent=0 // pred_region
    _
  $region9: #{vae_forward.9} parent=0 // pred_fallthru
    _
  // Predicated region
  $region10: #{vae_forward.9} parent=0 // pred_check
    _
  $region11: #{vae_forward.9} parent=0 // pred_check_branch
    %13 = sbr.rel (0) target = $region13
  $region12: #{vae_forward.9} parent=0 // pred_region
    _
  $region13: #{vae_forward.9} parent=0 // pred_fallthru
    _
  %v14 = vld [vmem:[%s0] sm:$0xff]
  %v15 = vld [vmem:[%s1] sm:$0xff]
  %v16 = vld [vmem:[%s1 + $0x8] sm:$0xff]
  %v17 = vld [vmem:[%s1 + $0x10] sm:$0xff]
  %v18 = vld [vmem:[%s1 + $0x18] sm:$0xff]
  %v19 = vld [vmem:[%s1 + $0x20] sm:$0xff]
  %v20 = vld [vmem:[%s1 + $0x28] sm:$0xff]
  %v21 = vld [vmem:[%s1 + $0x30] sm:$0xff]
  %v22 = vld [vmem:[%s1 + $0x38] sm:$0xff]
  %v23 = vld [vmem:[%s1 + $0x40] sm:$0xff]
  %v24 = vld [vmem:[%s1 + $0x48] sm:$0xff]
  %v25 = vld [vmem:[%s1 + $0x50] sm:$0xff]
  %v26 = vld [vmem:[%s1 + $0x58] sm:$0xff]
  %v27 = vld [vmem:[%s1 + $0x60] sm:$0xff]
  %v28 = vld [vmem:[%s1 + $0x68] sm:$0xff]
  %v29 = vld [vmem:[%s1 + $0x70] sm:$0xff]
  %v30 = vld [vmem:[%s1 + $0x78] sm:$0xff]
  %v31 = vld [vmem:[%s1 + $0x80] sm:$0xff]
  %v32 = vld [vmem:[%s1 + $0x88] sm:$0xff]
  %v33 = vld [vmem:[%s2] sm:$0xff]
  %35 = vset.pattern.permute.xlu0 0
  %36 = vperm.xlu0 %35, %v33
  %v37 = vpop.permute.xlu0 %36
  %vm39 = vcmask 588800
  %v41 = vsel %vm39, %v14, 0
  %43 = vmatprep.subr.mxu0 %v16
  %44 = vmatpush1.msra.mxu0 %v15
  %45 = vmatprep.subr.mxu0 %v18
  %46 = vmatpush1.msra.mxu0 %v17
  %47 = vmatprep.subr.mxu0 %v20
  %48 = vmatpush1.msra.mxu0 %v19
  %49 = vmatprep.subr.mxu0 %v22
  %50 = vmatpush1.msra.mxu0 %v21
  %51 = vmatprep.subr.mxu0 %v24
  %52 = vmatpush1.msra.mxu0 %v23
  %53 = vmatprep.subr.mxu0 %v26
  %54 = vmatpush1.msra.mxu0 %v25
  %55 = vmatprep.subr.mxu0 %v28
  %56 = vmatpush1.msra.mxu0 %v27
  %57 = vmatprep.subr.mxu0 %v30
  %58 = vmatpush1.msra.mxu0 %v29
  %59 = vmatprep.subr.mxu0 %v32
  %60 = vmatpush1.msra.mxu0 %v31
  %61 = vmatprep.subr.mxu0 0.0
  %62 = vmatpush1.msra.mxu0 0.0
  %63 = vmatprep.subr.mxu0 0.0
  %64 = vmatpush1.msra.mxu0 0.0
  %65 = vmatprep.subr.mxu0 0.0
  %66 = vmatpush1.msra.mxu0 0.0
  %67 = vmatprep.subr.mxu0 0.0
  %68 = vmatpush1.msra.mxu0 0.0
  %69 = vmatprep.subr.mxu0 0.0
  %70 = vmatpush1.msra.mxu0 0.0
  %71 = vmatprep.subr.mxu0 0.0
  %72 = vmatpush1.msra.mxu0 0.0
  %73 = vmatprep.subr.mxu0 0.0
  %74 = vmatpush1.msra.mxu0 0.0
  %75 = vmatprep.subr.mxu0 0.0
  %76 = vmatpush1.msra.mxu0 0.0
  %77 = vmatprep.subr.mxu0 0.0
  %78 = vmatpush1.msra.mxu0 0.0
  %79 = vmatprep.subr.mxu0 0.0
  %80 = vmatpush1.msra.mxu0 0.0
  %81 = vmatprep.subr.mxu0 0.0
  %82 = vmatpush1.msra.mxu0 0.0
  %83 = vmatprep.subr.mxu0 0.0
  %84 = vmatpush1.msra.mxu0 0.0
  %85 = vmatprep.subr.mxu0 0.0
  %86 = vmatpush1.msra.mxu0 0.0
  %87 = vmatprep.subr.mxu0 0.0
  %88 = vmatpush1.msra.mxu0 0.0
  %89 = vmatprep.subr.mxu0 0.0
  %90 = vmatpush1.msra.mxu0 0.0
  %91 = vmatprep.subr.mxu0 0.0
  %92 = vmatpush1.msra.mxu0 0.0
  %93 = vmatprep.subr.mxu0 0.0
  %94 = vmatpush1.msra.mxu0 0.0
  %95 = vmatprep.subr.mxu0 0.0
  %96 = vmatpush1.msra.mxu0 0.0
  %97 = vmatprep.subr.mxu0 0.0
  %98 = vmatpush1.msra.mxu0 0.0
  %99 = vmatprep.subr.mxu0 0.0
  %100 = vmatpush1.msra.mxu0 0.0
  %101 = vmatprep.subr.mxu0 0.0
  %102 = vmatpush1.msra.mxu0 0.0
  %103 = vmatprep.subr.mxu0 0.0
  %104 = vmatpush1.msra.mxu0 0.0
  %105 = vmatprep.subr.mxu0 0.0
  %106 = vmatpush1.msra.mxu0 0.0
  %107 = vmatprep.mubr.f32.mxu0 0.0
  %108 = vmatmul.mubr.f32.gmra.mrb[0].mxu0 %v41
  %v109 = vpop.f32.mrb[0].mxu0
  %v110 = vadd.f32 %v37, %v109
  %v111 = vpop.f32.mrb[0].mxu0
  %v112 = vadd.f32 %v37, %v111
  %113 = vdwg.mxu0
  %v114 = vmax.f32 %v110, 0.0
  %v115 = vmax.f32 %v112, 0.0
  %116 = vst [vmem:[%s3] sm:$0xff] %v114
  %117 = vst.msk [vmem:[%s3 + $0x8] sm:$0xff] %vm39, %v115
  // Predicated region
  $region14: #{vae_forward.9} parent=0 // pred_check
    _
  $region15: #{vae_forward.9} parent=0 // pred_check_branch
    %119 = sbr.rel (0) target = $region17
  $region16: #{vae_forward.9} parent=0 // pred_region
    _
  $region17: #{vae_forward.9} parent=0 // pred_fallthru
    _
  // Predicated region
  $region18: #{vae_forward.9} parent=0 // pred_check
    _
  $region19: #{vae_forward.9} parent=0 // pred_check_branch
    %121 = sbr.rel (0) target = $region21
  $region20: #{vae_forward.9} parent=0 // pred_region
    _
  $region21: #{vae_forward.9} parent=0 // pred_fallthru
    _

// kernel: vae_forward.10
$region0: #{vae_forward.10}
  #allocation0 [shape = 'u32[]', space=smem, size = 0x4, offset = 0x4, fixed_abs, tag = 'smem constant byte address 0x4 - core index']
  #allocation1 [shape = 'u32[144,128]{1,0:T(1,128)}', space=vmem, size = 0x12000, scoped, tag = 'internal scratch']
  #allocation2 [shape = 'f32[1,1]{1,0:T(1,128)S(6)}', space=smem, size = 0x200, scoped, tag = 'scoped memory for vae_forward.10']
  %s0 = inlined_call_operand.<no memory space> [shape: f32[1,1], index: 0, kind: input, shape index: {}]
  %s1 = inlined_call_operand.vmem [shape: f32[2,200], index: 1, kind: input, shape index: {}]
  %s2 = inlined_call_operand.vmem [shape: f32[200,128], index: 2, kind: input, shape index: {}]
  %s3 = inlined_call_operand.vmem [shape: f32[1,128], index: 3, kind: input, shape index: {}]
  %s4 = inlined_call_operand.vmem [shape: f32[128,64], index: 4, kind: input, shape index: {}]
  %s5 = inlined_call_operand.vmem [shape: f32[1,64], index: 5, kind: input, shape index: {}]
  %s6 = inlined_call_operand.vmem [shape: f32[64,64], index: 6, kind: input, shape index: {}]
  %s7 = inlined_call_operand.vmem [shape: f32[1,64], index: 7, kind: input, shape index: {}]
  %s8 = inlined_call_operand.vmem [shape: f32[64,32], index: 8, kind: input, shape index: {}]
  %s9 = inlined_call_operand.vmem [shape: f32[1,32], index: 9, kind: input, shape index: {}]
  %s10 = inlined_call_operand.vmem [shape: f32[32,8], index: 10, kind: input, shape index: {}]
  %s11 = inlined_call_operand.vmem [shape: f32[1,8], index: 11, kind: input, shape index: {}]
  %s12 = inlined_call_operand.vmem [shape: f32[32,8], index: 12, kind: input, shape index: {}]
  %s13 = inlined_call_operand.vmem [shape: f32[1,8], index: 13, kind: input, shape index: {}]
  %s14 = inlined_call_operand.vmem [shape: f32[8,32], index: 14, kind: input, shape index: {}]
  %s15 = inlined_call_operand.vmem [shape: f32[1,32], index: 15, kind: input, shape index: {}]
  %s16 = inlined_call_operand.vmem [shape: f32[32,64], index: 16, kind: input, shape index: {}]
  %s17 = inlined_call_operand.vmem [shape: f32[1,64], index: 17, kind: input, shape index: {}]
  %s18 = inlined_call_operand.vmem [shape: f32[64,128], index: 18, kind: input, shape index: {}]
  %s19 = inlined_call_operand.vmem [shape: f32[1,128], index: 19, kind: input, shape index: {}]
  %s20 = inlined_call_operand.vmem [shape: f32[128,200], index: 20, kind: input, shape index: {}]
  %s21 = inlined_call_operand.vmem [shape: f32[1,200], index: 21, kind: input, shape index: {}]
  %s22 = inlined_call_operand.vmem [shape: f32[2,200], index: 22, kind: output, shape index: {0}]
  %s23 = inlined_call_operand.vmem [shape: f32[2,1], index: 23, kind: output, shape index: {1}]
  %24 = xla_tuple %s22, %s23
  %s25 = sld [smem:[#allocation0]]
  $region106: #{vae_forward.10} parent=0
    _
  %s27 = ssub.s32 1, %s25
  %s28 = scalar_select 0, %s27, %s25
  %29 = sst [smem:[#allocation2]] %s0
  // Predicated region
  $region2: #{vae_forward.10} parent=0 // pred_check
    _
  $region3: #{vae_forward.10} parent=0 // pred_check_branch
    %31 = sbr.rel (0) target = $region5
  $region4: #{vae_forward.10} parent=0 // pred_region
    _
  $region5: #{vae_forward.10} parent=0 // pred_fallthru
    _
  // Predicated region
  $region6: #{vae_forward.10} parent=0 // pred_check
    _
  $region7: #{vae_forward.10} parent=0 // pred_check_branch
    %33 = sbr.rel (0) target = $region9
  $region8: #{vae_forward.10} parent=0 // pred_region
    _
  $region9: #{vae_forward.10} parent=0 // pred_fallthru
    _
  // Predicated region
  $region10: #{vae_forward.10} parent=0 // pred_check
    _
  $region11: #{vae_forward.10} parent=0 // pred_check_branch
    %35 = sbr.rel (0) target = $region13
  $region12: #{vae_forward.10} parent=0 // pred_region
    _
  $region13: #{vae_forward.10} parent=0 // pred_fallthru
    _
  // Predicated region
  $region14: #{vae_forward.10} parent=0 // pred_check
    _
  $region15: #{vae_forward.10} parent=0 // pred_check_branch
    %37 = sbr.rel (0) target = $region17
  $region16: #{vae_forward.10} parent=0 // pred_region
    _
  $region17: #{vae_forward.10} parent=0 // pred_fallthru
    _
  // Predicated region
  $region18: #{vae_forward.10} parent=0 // pred_check
    _
  $region19: #{vae_forward.10} parent=0 // pred_check_branch
    %39 = sbr.rel (0) target = $region21
  $region20: #{vae_forward.10} parent=0 // pred_region
    _
  $region21: #{vae_forward.10} parent=0 // pred_fallthru
    _
  // Predicated region
  $region22: #{vae_forward.10} parent=0 // pred_check
    _
  $region23: #{vae_forward.10} parent=0 // pred_check_branch
    %41 = sbr.rel (0) target = $region25
  $region24: #{vae_forward.10} parent=0 // pred_region
    _
  $region25: #{vae_forward.10} parent=0 // pred_fallthru
    _
  // Predicated region
  $region26: #{vae_forward.10} parent=0 // pred_check
    _
  $region27: #{vae_forward.10} parent=0 // pred_check_branch
    %43 = sbr.rel (0) target = $region29
  $region28: #{vae_forward.10} parent=0 // pred_region
    _
  $region29: #{vae_forward.10} parent=0 // pred_fallthru
    _
  // Predicated region
  $region30: #{vae_forward.10} parent=0 // pred_check
    _
  $region31: #{vae_forward.10} parent=0 // pred_check_branch
    %45 = sbr.rel (0) target = $region33
  $region32: #{vae_forward.10} parent=0 // pred_region
    _
  $region33: #{vae_forward.10} parent=0 // pred_fallthru
    _
  // Predicated region
  $region34: #{vae_forward.10} parent=0 // pred_check
    _
  $region35: #{vae_forward.10} parent=0 // pred_check_branch
    %47 = sbr.rel (0) target = $region37
  $region36: #{vae_forward.10} parent=0 // pred_region
    _
  $region37: #{vae_forward.10} parent=0 // pred_fallthru
    _
  // Predicated region
  $region38: #{vae_forward.10} parent=0 // pred_check
    _
  $region39: #{vae_forward.10} parent=0 // pred_check_branch
    %49 = sbr.rel (0) target = $region41
  $region40: #{vae_forward.10} parent=0 // pred_region
    _
  $region41: #{vae_forward.10} parent=0 // pred_fallthru
    _
  // Predicated region
  $region42: #{vae_forward.10} parent=0 // pred_check
    _
  $region43: #{vae_forward.10} parent=0 // pred_check_branch
    %51 = sbr.rel (0) target = $region45
  $region44: #{vae_forward.10} parent=0 // pred_region
    _
  $region45: #{vae_forward.10} parent=0 // pred_fallthru
    _
  // Predicated region
  $region46: #{vae_forward.10} parent=0 // pred_check
    _
  $region47: #{vae_forward.10} parent=0 // pred_check_branch
    %53 = sbr.rel (0) target = $region49
  $region48: #{vae_forward.10} parent=0 // pred_region
    _
  $region49: #{vae_forward.10} parent=0 // pred_fallthru
    _
  // Predicated region
  $region50: #{vae_forward.10} parent=0 // pred_check
    _
  $region51: #{vae_forward.10} parent=0 // pred_check_branch
    %55 = sbr.rel (0) target = $region53
  $region52: #{vae_forward.10} parent=0 // pred_region
    _
  $region53: #{vae_forward.10} parent=0 // pred_fallthru
    _
  // Predicated region
  $region54: #{vae_forward.10} parent=0 // pred_check
    _
  $region55: #{vae_forward.10} parent=0 // pred_check_branch
    %57 = sbr.rel (0) target = $region57
  $region56: #{vae_forward.10} parent=0 // pred_region
    _
  $region57: #{vae_forward.10} parent=0 // pred_fallthru
    _
  // Predicated region
  $region58: #{vae_forward.10} parent=0 // pred_check
    _
  $region59: #{vae_forward.10} parent=0 // pred_check_branch
    %59 = sbr.rel (0) target = $region61
  $region60: #{vae_forward.10} parent=0 // pred_region
    _
  $region61: #{vae_forward.10} parent=0 // pred_fallthru
    _
  // Predicated region
  $region62: #{vae_forward.10} parent=0 // pred_check
    _
  $region63: #{vae_forward.10} parent=0 // pred_check_branch
    %61 = sbr.rel (0) target = $region65
  $region64: #{vae_forward.10} parent=0 // pred_region
    _
  $region65: #{vae_forward.10} parent=0 // pred_fallthru
    _
  // Predicated region
  $region66: #{vae_forward.10} parent=0 // pred_check
    _
  $region67: #{vae_forward.10} parent=0 // pred_check_branch
    %63 = sbr.rel (0) target = $region69
  $region68: #{vae_forward.10} parent=0 // pred_region
    _
  $region69: #{vae_forward.10} parent=0 // pred_fallthru
    _
  // Predicated region
  $region70: #{vae_forward.10} parent=0 // pred_check
    _
  $region71: #{vae_forward.10} parent=0 // pred_check_branch
    %65 = sbr.rel (0) target = $region73
  $region72: #{vae_forward.10} parent=0 // pred_region
    _
  $region73: #{vae_forward.10} parent=0 // pred_fallthru
    _
  // Predicated region
  $region74: #{vae_forward.10} parent=0 // pred_check
    _
  $region75: #{vae_forward.10} parent=0 // pred_check_branch
    %67 = sbr.rel (0) target = $region77
  $region76: #{vae_forward.10} parent=0 // pred_region
    _
  $region77: #{vae_forward.10} parent=0 // pred_fallthru
    _
  // Predicated region
  $region78: #{vae_forward.10} parent=0 // pred_check
    _
  $region79: #{vae_forward.10} parent=0 // pred_check_branch
    %69 = sbr.rel (0) target = $region81
  $region80: #{vae_forward.10} parent=0 // pred_region
    _
  $region81: #{vae_forward.10} parent=0 // pred_fallthru
    _
  // Predicated region
  $region82: #{vae_forward.10} parent=0 // pred_check
    _
  $region83: #{vae_forward.10} parent=0 // pred_check_branch
    %71 = sbr.rel (0) target = $region85
  $region84: #{vae_forward.10} parent=0 // pred_region
    _
  $region85: #{vae_forward.10} parent=0 // pred_fallthru
    _
  // Predicated region
  $region86: #{vae_forward.10} parent=0 // pred_check
    _
  $region87: #{vae_forward.10} parent=0 // pred_check_branch
    %73 = sbr.rel (0) target = $region89
  $region88: #{vae_forward.10} parent=0 // pred_region
    _
  $region89: #{vae_forward.10} parent=0 // pred_fallthru
    _
  %v74 = vld [vmem:[%s1] sm:$0xf]
  %v75 = vld [vmem:[%s2] sm:$0xff]
  %v76 = vld [vmem:[%s2 + $0x8] sm:$0xff]
  %v77 = vld [vmem:[%s2 + $0x10] sm:$0xff]
  %v78 = vld [vmem:[%s2 + $0x18] sm:$0xff]
  %v79 = vld [vmem:[%s2 + $0x20] sm:$0xff]
  %v80 = vld [vmem:[%s2 + $0x28] sm:$0xff]
  %v81 = vld [vmem:[%s2 + $0x30] sm:$0xff]
  %v82 = vld [vmem:[%s2 + $0x38] sm:$0xff]
  %v83 = vld [vmem:[%s2 + $0x40] sm:$0xff]
  %v84 = vld [vmem:[%s2 + $0x48] sm:$0xff]
  %v85 = vld [vmem:[%s2 + $0x50] sm:$0xff]
  %v86 = vld [vmem:[%s2 + $0x58] sm:$0xff]
  %v87 = vld [vmem:[%s2 + $0x60] sm:$0xff]
  %v88 = vld [vmem:[%s2 + $0x68] sm:$0xff]
  %v89 = vld [vmem:[%s2 + $0x70] sm:$0xff]
  %v90 = vld [vmem:[%s2 + $0x78] sm:$0xff]
  %v91 = vld [vmem:[%s2 + $0x80] sm:$0xff]
  %v92 = vld [vmem:[%s2 + $0x88] sm:$0xff]
  %v93 = vld [vmem:[%s2 + $0x90] sm:$0xff]
  %v94 = vld [vmem:[%s2 + $0x98] sm:$0xff]
  %v95 = vld [vmem:[%s2 + $0xa0] sm:$0xff]
  %v96 = vld [vmem:[%s2 + $0xa8] sm:$0xff]
  %v97 = vld [vmem:[%s2 + $0xb0] sm:$0xff]
  %v98 = vld [vmem:[%s2 + $0xb8] sm:$0xff]
  %v99 = vld [vmem:[%s2 + $0xc0] sm:$0xff]
  %v100 = vld [vmem:[%s3] sm:$0x1]
  %v102 = vlaneseq
  %v103 = vshrl.u32 %v102, 7
  %v104 = vsub.s32 0, %v103
  %v105 = vrot.slane %v100, %v104
  %v109 = vunpack.c.l.s4 1983009808
  %v110 = vunpack.c.0.s8 %v109
  %v111 = vlaneseq
  %v112 = vshrl.u32 %v111, 7
  %v113 = vsub.s32 %v110, %v112
  %v114 = vrot.slane %v74, %v113
  %v115 = vcombine.high %v114, %v114
  %vm117 = vcmask 588800
  %v118 = vsel %vm117, %v115, 0
  %120 = vmatprep.subr.mxu0 0.0
  %121 = vmatpush1.msra.mxu0 %v75
  %122 = vmatprep.subr.mxu0 0.0
  %123 = vmatpush1.msra.mxu0 %v76
  %124 = vmatprep.subr.mxu0 0.0
  %125 = vmatpush1.msra.mxu0 %v77
  %126 = vmatprep.subr.mxu0 0.0
  %127 = vmatpush1.msra.mxu0 %v78
  %128 = vmatprep.subr.mxu0 0.0
  %129 = vmatpush1.msra.mxu0 %v79
  %130 = vmatprep.subr.mxu0 0.0
  %131 = vmatpush1.msra.mxu0 %v80
  %132 = vmatprep.subr.mxu0 0.0
  %133 = vmatpush1.msra.mxu0 %v81
  %134 = vmatprep.subr.mxu0 0.0
  %135 = vmatpush1.msra.mxu0 %v82
  %136 = vmatprep.subr.mxu0 0.0
  %137 = vmatpush1.msra.mxu0 %v83
  %138 = vmatprep.subr.mxu0 0.0
  %139 = vmatpush1.msra.mxu0 %v84
  %140 = vmatprep.subr.mxu0 0.0
  %141 = vmatpush1.msra.mxu0 %v85
  %142 = vmatprep.subr.mxu0 0.0
  %143 = vmatpush1.msra.mxu0 %v86
  %144 = vmatprep.subr.mxu0 0.0
  %145 = vmatpush1.msra.mxu0 %v87
  %146 = vmatprep.subr.mxu0 0.0
  %147 = vmatpush1.msra.mxu0 %v88
  %148 = vmatprep.subr.mxu0 0.0
  %149 = vmatpush1.msra.mxu0 %v89
  %150 = vmatprep.subr.mxu0 0.0
  %151 = vmatpush1.msra.mxu0 %v90
  %152 = vmatprep.subr.mxu0 0.0
  %153 = vmatpush1.msra.mxu0 %v91
  %154 = vmatprep.subr.mxu0 0.0
  %155 = vmatpush1.msra.mxu0 %v92
  %156 = vmatprep.subr.mxu0 0.0
  %157 = vmatpush1.msra.mxu0 %v93
  %158 = vmatprep.subr.mxu0 0.0
  %159 = vmatpush1.msra.mxu0 %v94
  %160 = vmatprep.subr.mxu0 0.0
  %161 = vmatpush1.msra.mxu0 %v95
  %162 = vmatprep.subr.mxu0 0.0
  %163 = vmatpush1.msra.mxu0 %v96
  %164 = vmatprep.subr.mxu0 0.0
  %165 = vmatpush1.msra.mxu0 %v97
  %166 = vmatprep.subr.mxu0 0.0
  %167 = vmatpush1.msra.mxu0 %v98
  %168 = vmatprep.subr.mxu0 0.0
  %169 = vmatpush1.msra.mxu0 %v99
  %170 = vmatprep.subr.mxu0 0.0
  %171 = vmatpush1.msra.mxu0 0.0
  %172 = vmatprep.subr.mxu0 0.0
  %173 = vmatpush1.msra.mxu0 0.0
  %174 = vmatprep.subr.mxu0 0.0
  %175 = vmatpush1.msra.mxu0 0.0
  %176 = vmatprep.subr.mxu0 0.0
  %177 = vmatpush1.msra.mxu0 0.0
  %178 = vmatprep.subr.mxu0 0.0
  %179 = vmatpush1.msra.mxu0 0.0
  %180 = vmatprep.subr.mxu0 0.0
  %181 = vmatpush1.msra.mxu0 0.0
  %182 = vmatprep.subr.mxu0 0.0
  %183 = vmatpush1.msra.mxu0 0.0
  %184 = vmatprep.mubr.f32.mxu0 %v118
  %185 = vmatmul.mubr.f32.gmra.mrb[0].mxu0 %v114
  %v186 = vpop.f32.mrb[0].mxu0
  %v187 = vadd.f32 %v105, %v186
  %v188 = vpop.f32.mrb[0].mxu0
  %189 = vdwg.mxu0
  %v190 = vmax.f32 %v187, 0.0
  %v191 = vld [vmem:[%s4] sm:$0xff]
  %v192 = vld [vmem:[%s4 + $0x8] sm:$0xff]
  %v193 = vld [vmem:[%s4 + $0x10] sm:$0xff]
  %v194 = vld [vmem:[%s4 + $0x18] sm:$0xff]
  %v195 = vld [vmem:[%s4 + $0x20] sm:$0xff]
  %v196 = vld [vmem:[%s4 + $0x28] sm:$0xff]
  %v197 = vld [vmem:[%s4 + $0x30] sm:$0xff]
  %v198 = vld [vmem:[%s4 + $0x38] sm:$0xff]
  %v199 = vld [vmem:[%s4 + $0x40] sm:$0xff]
  %v200 = vld [vmem:[%s4 + $0x48] sm:$0xff]
  %v201 = vld [vmem:[%s4 + $0x50] sm:$0xff]
  %v202 = vld [vmem:[%s4 + $0x58] sm:$0xff]
  %v203 = vld [vmem:[%s4 + $0x60] sm:$0xff]
  %v204 = vld [vmem:[%s4 + $0x68] sm:$0xff]
  %v205 = vld [vmem:[%s4 + $0x70] sm:$0xff]
  %v206 = vld [vmem:[%s4 + $0x78] sm:$0xff]
  %v207 = vld [vmem:[%s5] sm:$0x1]
  %v209 = vlaneseq
  %v210 = vshrl.u32 %v209, 7
  %v211 = vsub.s32 0, %v210
  %v212 = vrot.slane %v207, %v211
  %214 = vmatprep.subr.mxu0 0.0
  %215 = vmatpush1.msra.mxu0 %v191
  %216 = vmatprep.subr.mxu0 0.0
  %217 = vmatpush1.msra.mxu0 %v192
  %218 = vmatprep.subr.mxu0 0.0
  %219 = vmatpush1.msra.mxu0 %v193
  %220 = vmatprep.subr.mxu0 0.0
  %221 = vmatpush1.msra.mxu0 %v194
  %222 = vmatprep.subr.mxu0 0.0
  %223 = vmatpush1.msra.mxu0 %v195
  %224 = vmatprep.subr.mxu0 0.0
  %225 = vmatpush1.msra.mxu0 %v196
  %226 = vmatprep.subr.mxu0 0.0
  %227 = vmatpush1.msra.mxu0 %v197
  %228 = vmatprep.subr.mxu0 0.0
  %229 = vmatpush1.msra.mxu0 %v198
  %230 = vmatprep.subr.mxu0 0.0
  %231 = vmatpush1.msra.mxu0 %v199
  %232 = vmatprep.subr.mxu0 0.0
  %233 = vmatpush1.msra.mxu0 %v200
  %234 = vmatprep.subr.mxu0 0.0
  %235 = vmatpush1.msra.mxu0 %v201
  %236 = vmatprep.subr.mxu0 0.0
  %237 = vmatpush1.msra.mxu0 %v202
  %238 = vmatprep.subr.mxu0 0.0
  %239 = vmatpush1.msra.mxu0 %v203
  %240 = vmatprep.subr.mxu0 0.0
  %241 = vmatpush1.msra.mxu0 %v204
  %242 = vmatprep.subr.mxu0 0.0
  %243 = vmatpush1.msra.mxu0 %v205
  %244 = vmatprep.subr.mxu0 0.0
  %245 = vmatpush1.msra.mxu0 %v206
  %246 = vmatprep.subr.mxu0 0.0
  %247 = vmatpush1.msra.mxu0 0.0
  %248 = vmatprep.subr.mxu0 0.0
  %249 = vmatpush1.msra.mxu0 0.0
  %250 = vmatprep.subr.mxu0 0.0
  %251 = vmatpush1.msra.mxu0 0.0
  %252 = vmatprep.subr.mxu0 0.0
  %253 = vmatpush1.msra.mxu0 0.0
  %254 = vmatprep.subr.mxu0 0.0
  %255 = vmatpush1.msra.mxu0 0.0
  %256 = vmatprep.subr.mxu0 0.0
  %257 = vmatpush1.msra.mxu0 0.0
  %258 = vmatprep.subr.mxu0 0.0
  %259 = vmatpush1.msra.mxu0 0.0
  %260 = vmatprep.subr.mxu0 0.0
  %261 = vmatpush1.msra.mxu0 0.0
  %262 = vmatprep.subr.mxu0 0.0
  %263 = vmatpush1.msra.mxu0 0.0
  %264 = vmatprep.subr.mxu0 0.0
  %265 = vmatpush1.msra.mxu0 0.0
  %266 = vmatprep.subr.mxu0 0.0
  %267 = vmatpush1.msra.mxu0 0.0
  %268 = vmatprep.subr.mxu0 0.0
  %269 = vmatpush1.msra.mxu0 0.0
  %270 = vmatprep.subr.mxu0 0.0
  %271 = vmatpush1.msra.mxu0 0.0
  %272 = vmatprep.subr.mxu0 0.0
  %273 = vmatpush1.msra.mxu0 0.0
  %274 = vmatprep.subr.mxu0 0.0
  %275 = vmatpush1.msra.mxu0 0.0
  %276 = vmatprep.subr.mxu0 0.0
  %277 = vmatpush1.msra.mxu0 0.0
  %278 = vmatprep.mubr.f32.mxu0 0.0
  %279 = vmatmul.mubr.f32.gmra.mrb[0].mxu0 %v190
  %v280 = vpop.f32.mrb[0].mxu0
  %v281 = vadd.f32 %v212, %v280
  %v282 = vpop.f32.mrb[0].mxu0
  %283 = vdwg.mxu0
  %v284 = vmax.f32 %v281, 0.0
  %v285 = vld [vmem:[%s6] sm:$0xff]
  %v286 = vld [vmem:[%s6 + $0x8] sm:$0xff]
  %v287 = vld [vmem:[%s6 + $0x10] sm:$0xff]
  %v288 = vld [vmem:[%s6 + $0x18] sm:$0xff]
  %v289 = vld [vmem:[%s6 + $0x20] sm:$0xff]
  %v290 = vld [vmem:[%s6 + $0x28] sm:$0xff]
  %v291 = vld [vmem:[%s6 + $0x30] sm:$0xff]
  %v292 = vld [vmem:[%s6 + $0x38] sm:$0xff]
  %v293 = vld [vmem:[%s7] sm:$0x1]
  %v295 = vlaneseq
  %v296 = vshrl.u32 %v295, 7
  %v297 = vsub.s32 0, %v296
  %v298 = vrot.slane %v293, %v297
  %vm300 = vcmask 523264
  %v302 = vsel %vm300, %v284, 0
  %304 = vmatprep.subr.mxu0 0.0
  %305 = vmatpush1.msra.mxu0 %v285
  %306 = vmatprep.subr.mxu0 0.0
  %307 = vmatpush1.msra.mxu0 %v286
  %308 = vmatprep.subr.mxu0 0.0
  %309 = vmatpush1.msra.mxu0 %v287
  %310 = vmatprep.subr.mxu0 0.0
  %311 = vmatpush1.msra.mxu0 %v288
  %312 = vmatprep.subr.mxu0 0.0
  %313 = vmatpush1.msra.mxu0 %v289
  %314 = vmatprep.subr.mxu0 0.0
  %315 = vmatpush1.msra.mxu0 %v290
  %316 = vmatprep.subr.mxu0 0.0
  %317 = vmatpush1.msra.mxu0 %v291
  %318 = vmatprep.subr.mxu0 0.0
  %319 = vmatpush1.msra.mxu0 %v292
  %320 = vmatprep.subr.mxu0 0.0
  %321 = vmatpush1.msra.mxu0 0.0
  %322 = vmatprep.subr.mxu0 0.0
  %323 = vmatpush1.msra.mxu0 0.0
  %324 = vmatprep.subr.mxu0 0.0
  %325 = vmatpush1.msra.mxu0 0.0
  %326 = vmatprep.subr.mxu0 0.0
  %327 = vmatpush1.msra.mxu0 0.0
  %328 = vmatprep.subr.mxu0 0.0
  %329 = vmatpush1.msra.mxu0 0.0
  %330 = vmatprep.subr.mxu0 0.0
  %331 = vmatpush1.msra.mxu0 0.0
  %332 = vmatprep.subr.mxu0 0.0
  %333 = vmatpush1.msra.mxu0 0.0
  %334 = vmatprep.subr.mxu0 0.0
  %335 = vmatpush1.msra.mxu0 0.0
  %336 = vmatprep.subr.mxu0 0.0
  %337 = vmatpush1.msra.mxu0 0.0
  %338 = vmatprep.subr.mxu0 0.0
  %339 = vmatpush1.msra.mxu0 0.0
  %340 = vmatprep.subr.mxu0 0.0
  %341 = vmatpush1.msra.mxu0 0.0
  %342 = vmatprep.subr.mxu0 0.0
  %343 = vmatpush1.msra.mxu0 0.0
  %344 = vmatprep.subr.mxu0 0.0
  %345 = vmatpush1.msra.mxu0 0.0
  %346 = vmatprep.subr.mxu0 0.0
  %347 = vmatpush1.msra.mxu0 0.0
  %348 = vmatprep.subr.mxu0 0.0
  %349 = vmatpush1.msra.mxu0 0.0
  %350 = vmatprep.subr.mxu0 0.0
  %351 = vmatpush1.msra.mxu0 0.0
  %352 = vmatprep.subr.mxu0 0.0
  %353 = vmatpush1.msra.mxu0 0.0
  %354 = vmatprep.subr.mxu0 0.0
  %355 = vmatpush1.msra.mxu0 0.0
  %356 = vmatprep.subr.mxu0 0.0
  %357 = vmatpush1.msra.mxu0 0.0
  %358 = vmatprep.subr.mxu0 0.0
  %359 = vmatpush1.msra.mxu0 0.0
  %360 = vmatprep.subr.mxu0 0.0
  %361 = vmatpush1.msra.mxu0 0.0
  %362 = vmatprep.subr.mxu0 0.0
  %363 = vmatpush1.msra.mxu0 0.0
  %364 = vmatprep.subr.mxu0 0.0
  %365 = vmatpush1.msra.mxu0 0.0
  %366 = vmatprep.subr.mxu0 0.0
  %367 = vmatpush1.msra.mxu0 0.0
  %368 = vmatprep.mubr.f32.mxu0 0.0
  %369 = vmatmul.mubr.f32.gmra.mrb[0].mxu0 %v302
  %v370 = vpop.f32.mrb[0].mxu0
  %v371 = vadd.f32 %v298, %v370
  %v372 = vpop.f32.mrb[0].mxu0
  %373 = vdwg.mxu0
  %v374 = vmax.f32 %v371, 0.0
  %v375 = vld [vmem:[%s8] sm:$0xff]
  %v376 = vld [vmem:[%s8 + $0x8] sm:$0xff]
  %v377 = vld [vmem:[%s8 + $0x10] sm:$0xff]
  %v378 = vld [vmem:[%s8 + $0x18] sm:$0xff]
  %v379 = vld [vmem:[%s8 + $0x20] sm:$0xff]
  %v380 = vld [vmem:[%s8 + $0x28] sm:$0xff]
  %v381 = vld [vmem:[%s8 + $0x30] sm:$0xff]
  %v382 = vld [vmem:[%s8 + $0x38] sm:$0xff]
  %v383 = vld [vmem:[%s9] sm:$0x1]
  %v385 = vlaneseq
  %v386 = vshrl.u32 %v385, 7
  %v387 = vsub.s32 0, %v386
  %v388 = vrot.slane %v383, %v387
  %v391 = vsel %vm300, %v374, 0
  %393 = vmatprep.subr.mxu0 0.0
  %394 = vmatpush1.msra.mxu0 %v375
  %395 = vmatprep.subr.mxu0 0.0
  %396 = vmatpush1.msra.mxu0 %v376
  %397 = vmatprep.subr.mxu0 0.0
  %398 = vmatpush1.msra.mxu0 %v377
  %399 = vmatprep.subr.mxu0 0.0
  %400 = vmatpush1.msra.mxu0 %v378
  %401 = vmatprep.subr.mxu0 0.0
  %402 = vmatpush1.msra.mxu0 %v379
  %403 = vmatprep.subr.mxu0 0.0
  %404 = vmatpush1.msra.mxu0 %v380
  %405 = vmatprep.subr.mxu0 0.0
  %406 = vmatpush1.msra.mxu0 %v381
  %407 = vmatprep.subr.mxu0 0.0
  %408 = vmatpush1.msra.mxu0 %v382
  %409 = vmatprep.subr.mxu0 0.0
  %410 = vmatpush1.msra.mxu0 0.0
  %411 = vmatprep.subr.mxu0 0.0
  %412 = vmatpush1.msra.mxu0 0.0
  %413 = vmatprep.subr.mxu0 0.0
  %414 = vmatpush1.msra.mxu0 0.0
  %415 = vmatprep.subr.mxu0 0.0
  %416 = vmatpush1.msra.mxu0 0.0
  %417 = vmatprep.subr.mxu0 0.0
  %418 = vmatpush1.msra.mxu0 0.0
  %419 = vmatprep.subr.mxu0 0.0
  %420 = vmatpush1.msra.mxu0 0.0
  %421 = vmatprep.subr.mxu0 0.0
  %422 = vmatpush1.msra.mxu0 0.0
  %423 = vmatprep.subr.mxu0 0.0
  %424 = vmatpush1.msra.mxu0 0.0
  %425 = vmatprep.subr.mxu0 0.0
  %426 = vmatpush1.msra.mxu0 0.0
  %427 = vmatprep.subr.mxu0 0.0
  %428 = vmatpush1.msra.mxu0 0.0
  %429 = vmatprep.subr.mxu0 0.0
  %430 = vmatpush1.msra.mxu0 0.0
  %431 = vmatprep.subr.mxu0 0.0
  %432 = vmatpush1.msra.mxu0 0.0
  %433 = vmatprep.subr.mxu0 0.0
  %434 = vmatpush1.msra.mxu0 0.0
  %435 = vmatprep.subr.mxu0 0.0
  %436 = vmatpush1.msra.mxu0 0.0
  %437 = vmatprep.subr.mxu0 0.0
  %438 = vmatpush1.msra.mxu0 0.0
  %439 = vmatprep.subr.mxu0 0.0
  %440 = vmatpush1.msra.mxu0 0.0
  %441 = vmatprep.subr.mxu0 0.0
  %442 = vmatpush1.msra.mxu0 0.0
  %443 = vmatprep.subr.mxu0 0.0
  %444 = vmatpush1.msra.mxu0 0.0
  %445 = vmatprep.subr.mxu0 0.0
  %446 = vmatpush1.msra.mxu0 0.0
  %447 = vmatprep.subr.mxu0 0.0
  %448 = vmatpush1.msra.mxu0 0.0
  %449 = vmatprep.subr.mxu0 0.0
  %450 = vmatpush1.msra.mxu0 0.0
  %451 = vmatprep.subr.mxu0 0.0
  %452 = vmatpush1.msra.mxu0 0.0
  %453 = vmatprep.subr.mxu0 0.0
  %454 = vmatpush1.msra.mxu0 0.0
  %455 = vmatprep.subr.mxu0 0.0
  %456 = vmatpush1.msra.mxu0 0.0
  %457 = vmatprep.mubr.f32.mxu0 0.0
  %458 = vmatmul.mubr.f32.gmra.mrb[0].mxu0 %v391
  %v459 = vpop.f32.mrb[0].mxu0
  %v460 = vadd.f32 %v388, %v459
  %v461 = vpop.f32.mrb[0].mxu0
  %462 = vdwg.mxu0
  %v463 = vmax.f32 %v460, 0.0
  %v464 = vld [vmem:[%s10] sm:$0xff]
  %v465 = vld [vmem:[%s10 + $0x8] sm:$0xff]
  %v466 = vld [vmem:[%s10 + $0x10] sm:$0xff]
  %v467 = vld [vmem:[%s10 + $0x18] sm:$0xff]
  %v468 = vld [vmem:[%s11] sm:$0x1]
  %v470 = vlaneseq
  %v471 = vshrl.u32 %v470, 7
  %v472 = vsub.s32 0, %v471
  %v473 = vrot.slane %v468, %v472
  %vm475 = vcmask 261120
  %v477 = vsel %vm475, %v463, 0
  %479 = vmatprep.subr.mxu0 0.0
  %480 = vmatpush1.msra.mxu0 %v464
  %481 = vmatprep.subr.mxu0 0.0
  %482 = vmatpush1.msra.mxu0 %v465
  %483 = vmatprep.subr.mxu0 0.0
  %484 = vmatpush1.msra.mxu0 %v466
  %485 = vmatprep.subr.mxu0 0.0
  %486 = vmatpush1.msra.mxu0 %v467
  %487 = vmatprep.subr.mxu0 0.0
  %488 = vmatpush1.msra.mxu0 0.0
  %489 = vmatprep.subr.mxu0 0.0
  %490 = vmatpush1.msra.mxu0 0.0
  %491 = vmatprep.subr.mxu0 0.0
  %492 = vmatpush1.msra.mxu0 0.0
  %493 = vmatprep.subr.mxu0 0.0
  %494 = vmatpush1.msra.mxu0 0.0
  %495 = vmatprep.subr.mxu0 0.0
  %496 = vmatpush1.msra.mxu0 0.0
  %497 = vmatprep.subr.mxu0 0.0
  %498 = vmatpush1.msra.mxu0 0.0
  %499 = vmatprep.subr.mxu0 0.0
  %500 = vmatpush1.msra.mxu0 0.0
  %501 = vmatprep.subr.mxu0 0.0
  %502 = vmatpush1.msra.mxu0 0.0
  %503 = vmatprep.subr.mxu0 0.0
  %504 = vmatpush1.msra.mxu0 0.0
  %505 = vmatprep.subr.mxu0 0.0
  %506 = vmatpush1.msra.mxu0 0.0
  %507 = vmatprep.subr.mxu0 0.0
  %508 = vmatpush1.msra.mxu0 0.0
  %509 = vmatprep.subr.mxu0 0.0
  %510 = vmatpush1.msra.mxu0 0.0
  %511 = vmatprep.subr.mxu0 0.0
  %512 = vmatpush1.msra.mxu0 0.0
  %513 = vmatprep.subr.mxu0 0.0
  %514 = vmatpush1.msra.mxu0 0.0
  %515 = vmatprep.subr.mxu0 0.0
  %516 = vmatpush1.msra.mxu0 0.0
  %517 = vmatprep.subr.mxu0 0.0
  %518 = vmatpush1.msra.mxu0 0.0
  %519 = vmatprep.subr.mxu0 0.0
  %520 = vmatpush1.msra.mxu0 0.0
  %521 = vmatprep.subr.mxu0 0.0
  %522 = vmatpush1.msra.mxu0 0.0
  %523 = vmatprep.subr.mxu0 0.0
  %524 = vmatpush1.msra.mxu0 0.0
  %525 = vmatprep.subr.mxu0 0.0
  %526 = vmatpush1.msra.mxu0 0.0
  %527 = vmatprep.subr.mxu0 0.0
  %528 = vmatpush1.msra.mxu0 0.0
  %529 = vmatprep.subr.mxu0 0.0
  %530 = vmatpush1.msra.mxu0 0.0
  %531 = vmatprep.subr.mxu0 0.0
  %532 = vmatpush1.msra.mxu0 0.0
  %533 = vmatprep.subr.mxu0 0.0
  %534 = vmatpush1.msra.mxu0 0.0
  %535 = vmatprep.subr.mxu0 0.0
  %536 = vmatpush1.msra.mxu0 0.0
  %537 = vmatprep.subr.mxu0 0.0
  %538 = vmatpush1.msra.mxu0 0.0
  %539 = vmatprep.subr.mxu0 0.0
  %540 = vmatpush1.msra.mxu0 0.0
  %541 = vmatprep.subr.mxu0 0.0
  %542 = vmatpush1.msra.mxu0 0.0
  %543 = vmatprep.mubr.f32.mxu0 0.0
  %544 = vmatmul.mubr.f32.gmra.mrb[0].mxu0 %v477
  %v545 = vpop.f32.mrb[0].mxu0
  %v546 = vadd.f32 %v473, %v545
  %v547 = vpop.f32.mrb[0].mxu0
  %548 = vdwg.mxu0
  %v549 = vld [vmem:[%s12] sm:$0xff]
  %v550 = vld [vmem:[%s12 + $0x8] sm:$0xff]
  %v551 = vld [vmem:[%s12 + $0x10] sm:$0xff]
  %v552 = vld [vmem:[%s12 + $0x18] sm:$0xff]
  %v553 = vld [vmem:[%s13] sm:$0x1]
  %v555 = vlaneseq
  %v556 = vshrl.u32 %v555, 7
  %v557 = vsub.s32 0, %v556
  %v558 = vrot.slane %v553, %v557
  %560 = vmatprep.subr.mxu0 0.0
  %561 = vmatpush1.msra.mxu0 %v549
  %562 = vmatprep.subr.mxu0 0.0
  %563 = vmatpush1.msra.mxu0 %v550
  %564 = vmatprep.subr.mxu0 0.0
  %565 = vmatpush1.msra.mxu0 %v551
  %566 = vmatprep.subr.mxu0 0.0
  %567 = vmatpush1.msra.mxu0 %v552
  %568 = vmatprep.subr.mxu0 0.0
  %569 = vmatpush1.msra.mxu0 0.0
  %570 = vmatprep.subr.mxu0 0.0
  %571 = vmatpush1.msra.mxu0 0.0
  %572 = vmatprep.subr.mxu0 0.0
  %573 = vmatpush1.msra.mxu0 0.0
  %574 = vmatprep.subr.mxu0 0.0
  %575 = vmatpush1.msra.mxu0 0.0
  %576 = vmatprep.subr.mxu0 0.0
  %577 = vmatpush1.msra.mxu0 0.0
  %578 = vmatprep.subr.mxu0 0.0
  %579 = vmatpush1.msra.mxu0 0.0
  %580 = vmatprep.subr.mxu0 0.0
  %581 = vmatpush1.msra.mxu0 0.0
  %582 = vmatprep.subr.mxu0 0.0
  %583 = vmatpush1.msra.mxu0 0.0
  %584 = vmatprep.subr.mxu0 0.0
  %585 = vmatpush1.msra.mxu0 0.0
  %586 = vmatprep.subr.mxu0 0.0
  %587 = vmatpush1.msra.mxu0 0.0
  %588 = vmatprep.subr.mxu0 0.0
  %589 = vmatpush1.msra.mxu0 0.0
  %590 = vmatprep.subr.mxu0 0.0
  %591 = vmatpush1.msra.mxu0 0.0
  %592 = vmatprep.subr.mxu0 0.0
  %593 = vmatpush1.msra.mxu0 0.0
  %594 = vmatprep.subr.mxu0 0.0
  %595 = vmatpush1.msra.mxu0 0.0
  %596 = vmatprep.subr.mxu0 0.0
  %597 = vmatpush1.msra.mxu0 0.0
  %598 = vmatprep.subr.mxu0 0.0
  %599 = vmatpush1.msra.mxu0 0.0
  %600 = vmatprep.subr.mxu0 0.0
  %601 = vmatpush1.msra.mxu0 0.0
  %602 = vmatprep.subr.mxu0 0.0
  %603 = vmatpush1.msra.mxu0 0.0
  %604 = vmatprep.subr.mxu0 0.0
  %605 = vmatpush1.msra.mxu0 0.0
  %606 = vmatprep.subr.mxu0 0.0
  %607 = vmatpush1.msra.mxu0 0.0
  %608 = vmatprep.subr.mxu0 0.0
  %609 = vmatpush1.msra.mxu0 0.0
  %610 = vmatprep.subr.mxu0 0.0
  %611 = vmatpush1.msra.mxu0 0.0
  %612 = vmatprep.subr.mxu0 0.0
  %613 = vmatpush1.msra.mxu0 0.0
  %614 = vmatprep.subr.mxu0 0.0
  %615 = vmatpush1.msra.mxu0 0.0
  %616 = vmatprep.subr.mxu0 0.0
  %617 = vmatpush1.msra.mxu0 0.0
  %618 = vmatprep.subr.mxu0 0.0
  %619 = vmatpush1.msra.mxu0 0.0
  %620 = vmatprep.subr.mxu0 0.0
  %621 = vmatpush1.msra.mxu0 0.0
  %622 = vmatprep.subr.mxu0 0.0
  %623 = vmatpush1.msra.mxu0 0.0
  %624 = vmatprep.mubr.f32.mxu0 0.0
  %625 = vmatmul.mubr.f32.gmra.mrb[0].mxu0 %v477
  %v626 = vpop.f32.mrb[0].mxu0
  %v627 = vadd.f32 %v558, %v626
  %v628 = vpop.f32.mrb[0].mxu0
  %629 = vdwg.mxu0
  %v630 = vmul.f32 %v627, 1.442695
  %v631 = vpow.pop %v630
  %s632 = sld [smem:[#allocation2]]
  %v633 = vstv %s632
  %v634 = vmul.f32 %v631, %v633
  %v635 = vadd.f32 %v546, %v634
  %v636 = vmul.f32 %v635, 0.5
  %v637 = vmul.f32 %v636, %v635
  %s638 = smul.f32 %s632, 0.5
  %s639 = smul.f32 %s638, %s632
  %v640 = vstv %s639
  %v641 = vsub.f32 %v637, %v640
  %v642 = vsub.f32 %v641, %v627
  %vm643 = vcmask 58368
  %v644 = vsel %vm643, %v642, 0.0
  %645 = vadd.xlane.f32.xlu0 %v644
  %v646 = vpop.xlane.xlu0 %645
  %vm647 = vcmask 1024
  %648 = vst.msk [vmem:[%s23] sm:$0x3] %vm647, %v646
  %v649 = vld [vmem:[%s14] sm:$0xff]
  %v650 = vld [vmem:[%s15] sm:$0x1]
  %v652 = vlaneseq
  %v653 = vshrl.u32 %v652, 7
  %v654 = vsub.s32 0, %v653
  %v655 = vrot.slane %v650, %v654
  %vm657 = vcmask 64512
  %v659 = vsel %vm657, %v635, 0
  %661 = vmatprep.subr.mxu0 0.0
  %662 = vmatpush1.msra.mxu0 %v649
  %663 = vmatprep.subr.mxu0 0.0
  %664 = vmatpush1.msra.mxu0 0.0
  %665 = vmatprep.subr.mxu0 0.0
  %666 = vmatpush1.msra.mxu0 0.0
  %667 = vmatprep.subr.mxu0 0.0
  %668 = vmatpush1.msra.mxu0 0.0
  %669 = vmatprep.subr.mxu0 0.0
  %670 = vmatpush1.msra.mxu0 0.0
  %671 = vmatprep.subr.mxu0 0.0
  %672 = vmatpush1.msra.mxu0 0.0
  %673 = vmatprep.subr.mxu0 0.0
  %674 = vmatpush1.msra.mxu0 0.0
  %675 = vmatprep.subr.mxu0 0.0
  %676 = vmatpush1.msra.mxu0 0.0
  %677 = vmatprep.subr.mxu0 0.0
  %678 = vmatpush1.msra.mxu0 0.0
  %679 = vmatprep.subr.mxu0 0.0
  %680 = vmatpush1.msra.mxu0 0.0
  %681 = vmatprep.subr.mxu0 0.0
  %682 = vmatpush1.msra.mxu0 0.0
  %683 = vmatprep.subr.mxu0 0.0
  %684 = vmatpush1.msra.mxu0 0.0
  %685 = vmatprep.subr.mxu0 0.0
  %686 = vmatpush1.msra.mxu0 0.0
  %687 = vmatprep.subr.mxu0 0.0
  %688 = vmatpush1.msra.mxu0 0.0
  %689 = vmatprep.subr.mxu0 0.0
  %690 = vmatpush1.msra.mxu0 0.0
  %691 = vmatprep.subr.mxu0 0.0
  %692 = vmatpush1.msra.mxu0 0.0
  %693 = vmatprep.subr.mxu0 0.0
  %694 = vmatpush1.msra.mxu0 0.0
  %695 = vmatprep.subr.mxu0 0.0
  %696 = vmatpush1.msra.mxu0 0.0
  %697 = vmatprep.subr.mxu0 0.0
  %698 = vmatpush1.msra.mxu0 0.0
  %699 = vmatprep.subr.mxu0 0.0
  %700 = vmatpush1.msra.mxu0 0.0
  %701 = vmatprep.subr.mxu0 0.0
  %702 = vmatpush1.msra.mxu0 0.0
  %703 = vmatprep.subr.mxu0 0.0
  %704 = vmatpush1.msra.mxu0 0.0
  %705 = vmatprep.subr.mxu0 0.0
  %706 = vmatpush1.msra.mxu0 0.0
  %707 = vmatprep.subr.mxu0 0.0
  %708 = vmatpush1.msra.mxu0 0.0
  %709 = vmatprep.subr.mxu0 0.0
  %710 = vmatpush1.msra.mxu0 0.0
  %711 = vmatprep.subr.mxu0 0.0
  %712 = vmatpush1.msra.mxu0 0.0
  %713 = vmatprep.subr.mxu0 0.0
  %714 = vmatpush1.msra.mxu0 0.0
  %715 = vmatprep.subr.mxu0 0.0
  %716 = vmatpush1.msra.mxu0 0.0
  %717 = vmatprep.subr.mxu0 0.0
  %718 = vmatpush1.msra.mxu0 0.0
  %719 = vmatprep.subr.mxu0 0.0
  %720 = vmatpush1.msra.mxu0 0.0
  %721 = vmatprep.subr.mxu0 0.0
  %722 = vmatpush1.msra.mxu0 0.0
  %723 = vmatprep.subr.mxu0 0.0
  %724 = vmatpush1.msra.mxu0 0.0
  %725 = vmatprep.mubr.f32.mxu0 0.0
  %726 = vmatmul.mubr.f32.gmra.mrb[0].mxu0 %v659
  %v727 = vpop.f32.mrb[0].mxu0
  %v728 = vadd.f32 %v655, %v727
  %v729 = vpop.f32.mrb[0].mxu0
  %730 = vdwg.mxu0
  %v731 = vmax.f32 %v728, 0.0
  %v732 = vld [vmem:[%s16] sm:$0xff]
  %v733 = vld [vmem:[%s16 + $0x8] sm:$0xff]
  %v734 = vld [vmem:[%s16 + $0x10] sm:$0xff]
  %v735 = vld [vmem:[%s16 + $0x18] sm:$0xff]
  %v736 = vld [vmem:[%s17] sm:$0x1]
  %v738 = vlaneseq
  %v739 = vshrl.u32 %v738, 7
  %v740 = vsub.s32 0, %v739
  %v741 = vrot.slane %v736, %v740
  %v744 = vsel %vm475, %v731, 0
  %746 = vmatprep.subr.mxu0 0.0
  %747 = vmatpush1.msra.mxu0 %v732
  %748 = vmatprep.subr.mxu0 0.0
  %749 = vmatpush1.msra.mxu0 %v733
  %750 = vmatprep.subr.mxu0 0.0
  %751 = vmatpush1.msra.mxu0 %v734
  %752 = vmatprep.subr.mxu0 0.0
  %753 = vmatpush1.msra.mxu0 %v735
  %754 = vmatprep.subr.mxu0 0.0
  %755 = vmatpush1.msra.mxu0 0.0
  %756 = vmatprep.subr.mxu0 0.0
  %757 = vmatpush1.msra.mxu0 0.0
  %758 = vmatprep.subr.mxu0 0.0
  %759 = vmatpush1.msra.mxu0 0.0
  %760 = vmatprep.subr.mxu0 0.0
  %761 = vmatpush1.msra.mxu0 0.0
  %762 = vmatprep.subr.mxu0 0.0
  %763 = vmatpush1.msra.mxu0 0.0
  %764 = vmatprep.subr.mxu0 0.0
  %765 = vmatpush1.msra.mxu0 0.0
  %766 = vmatprep.subr.mxu0 0.0
  %767 = vmatpush1.msra.mxu0 0.0
  %768 = vmatprep.subr.mxu0 0.0
  %769 = vmatpush1.msra.mxu0 0.0
  %770 = vmatprep.subr.mxu0 0.0
  %771 = vmatpush1.msra.mxu0 0.0
  %772 = vmatprep.subr.mxu0 0.0
  %773 = vmatpush1.msra.mxu0 0.0
  %774 = vmatprep.subr.mxu0 0.0
  %775 = vmatpush1.msra.mxu0 0.0
  %776 = vmatprep.subr.mxu0 0.0
  %777 = vmatpush1.msra.mxu0 0.0
  %778 = vmatprep.subr.mxu0 0.0
  %779 = vmatpush1.msra.mxu0 0.0
  %780 = vmatprep.subr.mxu0 0.0
  %781 = vmatpush1.msra.mxu0 0.0
  %782 = vmatprep.subr.mxu0 0.0
  %783 = vmatpush1.msra.mxu0 0.0
  %784 = vmatprep.subr.mxu0 0.0
  %785 = vmatpush1.msra.mxu0 0.0
  %786 = vmatprep.subr.mxu0 0.0
  %787 = vmatpush1.msra.mxu0 0.0
  %788 = vmatprep.subr.mxu0 0.0
  %789 = vmatpush1.msra.mxu0 0.0
  %790 = vmatprep.subr.mxu0 0.0
  %791 = vmatpush1.msra.mxu0 0.0
  %792 = vmatprep.subr.mxu0 0.0
  %793 = vmatpush1.msra.mxu0 0.0
  %794 = vmatprep.subr.mxu0 0.0
  %795 = vmatpush1.msra.mxu0 0.0
  %796 = vmatprep.subr.mxu0 0.0
  %797 = vmatpush1.msra.mxu0 0.0
  %798 = vmatprep.subr.mxu0 0.0
  %799 = vmatpush1.msra.mxu0 0.0
  %800 = vmatprep.subr.mxu0 0.0
  %801 = vmatpush1.msra.mxu0 0.0
  %802 = vmatprep.subr.mxu0 0.0
  %803 = vmatpush1.msra.mxu0 0.0
  %804 = vmatprep.subr.mxu0 0.0
  %805 = vmatpush1.msra.mxu0 0.0
  %806 = vmatprep.subr.mxu0 0.0
  %807 = vmatpush1.msra.mxu0 0.0
  %808 = vmatprep.subr.mxu0 0.0
  %809 = vmatpush1.msra.mxu0 0.0
  %810 = vmatprep.mubr.f32.mxu0 0.0
  %811 = vmatmul.mubr.f32.gmra.mrb[0].mxu0 %v744
  %v812 = vpop.f32.mrb[0].mxu0
  %v813 = vadd.f32 %v741, %v812
  %v814 = vpop.f32.mrb[0].mxu0
  %815 = vdwg.mxu0
  %v816 = vmax.f32 %v813, 0.0
  %v817 = vld [vmem:[%s18] sm:$0xff]
  %v818 = vld [vmem:[%s18 + $0x8] sm:$0xff]
  %v819 = vld [vmem:[%s18 + $0x10] sm:$0xff]
  %v820 = vld [vmem:[%s18 + $0x18] sm:$0xff]
  %v821 = vld [vmem:[%s18 + $0x20] sm:$0xff]
  %v822 = vld [vmem:[%s18 + $0x28] sm:$0xff]
  %v823 = vld [vmem:[%s18 + $0x30] sm:$0xff]
  %v824 = vld [vmem:[%s18 + $0x38] sm:$0xff]
  %v825 = vld [vmem:[%s19] sm:$0x1]
  %v827 = vlaneseq
  %v828 = vshrl.u32 %v827, 7
  %v829 = vsub.s32 0, %v828
  %v830 = vrot.slane %v825, %v829
  %v833 = vsel %vm300, %v816, 0
  %835 = vmatprep.subr.mxu0 0.0
  %836 = vmatpush1.msra.mxu0 %v817
  %837 = vmatprep.subr.mxu0 0.0
  %838 = vmatpush1.msra.mxu0 %v818
  %839 = vmatprep.subr.mxu0 0.0
  %840 = vmatpush1.msra.mxu0 %v819
  %841 = vmatprep.subr.mxu0 0.0
  %842 = vmatpush1.msra.mxu0 %v820
  %843 = vmatprep.subr.mxu0 0.0
  %844 = vmatpush1.msra.mxu0 %v821
  %845 = vmatprep.subr.mxu0 0.0
  %846 = vmatpush1.msra.mxu0 %v822
  %847 = vmatprep.subr.mxu0 0.0
  %848 = vmatpush1.msra.mxu0 %v823
  %849 = vmatprep.subr.mxu0 0.0
  %850 = vmatpush1.msra.mxu0 %v824
  %851 = vmatprep.subr.mxu0 0.0
  %852 = vmatpush1.msra.mxu0 0.0
  %853 = vmatprep.subr.mxu0 0.0
  %854 = vmatpush1.msra.mxu0 0.0
  %855 = vmatprep.subr.mxu0 0.0
  %856 = vmatpush1.msra.mxu0 0.0
  %857 = vmatprep.subr.mxu0 0.0
  %858 = vmatpush1.msra.mxu0 0.0
  %859 = vmatprep.subr.mxu0 0.0
  %860 = vmatpush1.msra.mxu0 0.0
  %861 = vmatprep.subr.mxu0 0.0
  %862 = vmatpush1.msra.mxu0 0.0
  %863 = vmatprep.subr.mxu0 0.0
  %864 = vmatpush1.msra.mxu0 0.0
  %865 = vmatprep.subr.mxu0 0.0
  %866 = vmatpush1.msra.mxu0 0.0
  %867 = vmatprep.subr.mxu0 0.0
  %868 = vmatpush1.msra.mxu0 0.0
  %869 = vmatprep.subr.mxu0 0.0
  %870 = vmatpush1.msra.mxu0 0.0
  %871 = vmatprep.subr.mxu0 0.0
  %872 = vmatpush1.msra.mxu0 0.0
  %873 = vmatprep.subr.mxu0 0.0
  %874 = vmatpush1.msra.mxu0 0.0
  %875 = vmatprep.subr.mxu0 0.0
  %876 = vmatpush1.msra.mxu0 0.0
  %877 = vmatprep.subr.mxu0 0.0
  %878 = vmatpush1.msra.mxu0 0.0
  %879 = vmatprep.subr.mxu0 0.0
  %880 = vmatpush1.msra.mxu0 0.0
  %881 = vmatprep.subr.mxu0 0.0
  %882 = vmatpush1.msra.mxu0 0.0
  %883 = vmatprep.subr.mxu0 0.0
  %884 = vmatpush1.msra.mxu0 0.0
  %885 = vmatprep.subr.mxu0 0.0
  %886 = vmatpush1.msra.mxu0 0.0
  %887 = vmatprep.subr.mxu0 0.0
  %888 = vmatpush1.msra.mxu0 0.0
  %889 = vmatprep.subr.mxu0 0.0
  %890 = vmatpush1.msra.mxu0 0.0
  %891 = vmatprep.subr.mxu0 0.0
  %892 = vmatpush1.msra.mxu0 0.0
  %893 = vmatprep.subr.mxu0 0.0
  %894 = vmatpush1.msra.mxu0 0.0
  %895 = vmatprep.subr.mxu0 0.0
  %896 = vmatpush1.msra.mxu0 0.0
  %897 = vmatprep.subr.mxu0 0.0
  %898 = vmatpush1.msra.mxu0 0.0
  %899 = vmatprep.mubr.f32.mxu0 0.0
  %900 = vmatmul.mubr.f32.gmra.mrb[0].mxu0 %v833
  %v901 = vpop.f32.mrb[0].mxu0
  %v902 = vadd.f32 %v830, %v901
  %v903 = vpop.f32.mrb[0].mxu0
  %904 = vdwg.mxu0
  %v905 = vmax.f32 %v902, 0.0
  %v906 = vld [vmem:[%s20] sm:$0xff]
  %v907 = vld [vmem:[%s20 + $0x8] sm:$0xff]
  %v908 = vld [vmem:[%s20 + $0x10] sm:$0xff]
  %v909 = vld [vmem:[%s20 + $0x18] sm:$0xff]
  %v910 = vld [vmem:[%s20 + $0x20] sm:$0xff]
  %v911 = vld [vmem:[%s20 + $0x28] sm:$0xff]
  %v912 = vld [vmem:[%s20 + $0x30] sm:$0xff]
  %v913 = vld [vmem:[%s20 + $0x38] sm:$0xff]
  %v914 = vld [vmem:[%s20 + $0x40] sm:$0xff]
  %v915 = vld [vmem:[%s20 + $0x48] sm:$0xff]
  %v916 = vld [vmem:[%s20 + $0x50] sm:$0xff]
  %v917 = vld [vmem:[%s20 + $0x58] sm:$0xff]
  %v918 = vld [vmem:[%s20 + $0x60] sm:$0xff]
  %v919 = vld [vmem:[%s20 + $0x68] sm:$0xff]
  %v920 = vld [vmem:[%s20 + $0x70] sm:$0xff]
  %v921 = vld [vmem:[%s20 + $0x78] sm:$0xff]
  %v922 = vld [vmem:[%s20 + $0x80] sm:$0xff]
  %v923 = vld [vmem:[%s20 + $0x88] sm:$0xff]
  %v924 = vld [vmem:[%s20 + $0x90] sm:$0xff]
  %v925 = vld [vmem:[%s20 + $0x98] sm:$0xff]
  %v926 = vld [vmem:[%s20 + $0xa0] sm:$0xff]
  %v927 = vld [vmem:[%s20 + $0xa8] sm:$0xff]
  %v928 = vld [vmem:[%s20 + $0xb0] sm:$0xff]
  %v929 = vld [vmem:[%s20 + $0xb8] sm:$0xff]
  %v930 = vld [vmem:[%s20 + $0xc0] sm:$0xff]
  %v931 = vld [vmem:[%s20 + $0xc8] sm:$0xff]
  %v932 = vld [vmem:[%s20 + $0xd0] sm:$0xff]
  %v933 = vld [vmem:[%s20 + $0xd8] sm:$0xff]
  %v934 = vld [vmem:[%s20 + $0xe0] sm:$0xff]
  %v935 = vld [vmem:[%s20 + $0xe8] sm:$0xff]
  %v936 = vld [vmem:[%s20 + $0xf0] sm:$0xff]
  %v937 = vld [vmem:[%s20 + $0xf8] sm:$0xff]
  %v938 = vld [vmem:[%s21] sm:$0x3]
  %v940 = vlaneseq
  %v941 = vshrl.u32 %v940, 7
  %v942 = vsub.s32 0, %v941
  %v943 = vrot.slane %v938, %v942
  %v944 = vlaneseq
  %v945 = vshrl.u32 %v944, 7
  %v946 = vsub.s32 1, %v945
  %v947 = vrot.slane %v938, %v946
  %950 = vmatprep.subr.mxu0 %v907
  %951 = vmatpush1.msra.mxu0 %v906
  %952 = vmatprep.subr.mxu0 %v909
  %953 = vmatpush1.msra.mxu0 %v908
  %954 = vmatprep.subr.mxu0 %v911
  %955 = vmatpush1.msra.mxu0 %v910
  %956 = vmatprep.subr.mxu0 %v913
  %957 = vmatpush1.msra.mxu0 %v912
  %958 = vmatprep.subr.mxu0 %v915
  %959 = vmatpush1.msra.mxu0 %v914
  %960 = vmatprep.subr.mxu0 %v917
  %961 = vmatpush1.msra.mxu0 %v916
  %962 = vmatprep.subr.mxu0 %v919
  %963 = vmatpush1.msra.mxu0 %v918
  %964 = vmatprep.subr.mxu0 %v921
  %965 = vmatpush1.msra.mxu0 %v920
  %966 = vmatprep.subr.mxu0 %v923
  %967 = vmatpush1.msra.mxu0 %v922
  %968 = vmatprep.subr.mxu0 %v925
  %969 = vmatpush1.msra.mxu0 %v924
  %970 = vmatprep.subr.mxu0 %v927
  %971 = vmatpush1.msra.mxu0 %v926
  %972 = vmatprep.subr.mxu0 %v929
  %973 = vmatpush1.msra.mxu0 %v928
  %974 = vmatprep.subr.mxu0 %v931
  %975 = vmatpush1.msra.mxu0 %v930
  %976 = vmatprep.subr.mxu0 %v933
  %977 = vmatpush1.msra.mxu0 %v932
  %978 = vmatprep.subr.mxu0 %v935
  %979 = vmatpush1.msra.mxu0 %v934
  %980 = vmatprep.subr.mxu0 %v937
  %981 = vmatpush1.msra.mxu0 %v936
  %982 = vmatprep.subr.mxu0 0.0
  %983 = vmatpush1.msra.mxu0 0.0
  %984 = vmatprep.subr.mxu0 0.0
  %985 = vmatpush1.msra.mxu0 0.0
  %986 = vmatprep.subr.mxu0 0.0
  %987 = vmatpush1.msra.mxu0 0.0
  %988 = vmatprep.subr.mxu0 0.0
  %989 = vmatpush1.msra.mxu0 0.0
  %990 = vmatprep.subr.mxu0 0.0
  %991 = vmatpush1.msra.mxu0 0.0
  %992 = vmatprep.subr.mxu0 0.0
  %993 = vmatpush1.msra.mxu0 0.0
  %994 = vmatprep.subr.mxu0 0.0
  %995 = vmatpush1.msra.mxu0 0.0
  %996 = vmatprep.subr.mxu0 0.0
  %997 = vmatpush1.msra.mxu0 0.0
  %998 = vmatprep.subr.mxu0 0.0
  %999 = vmatpush1.msra.mxu0 0.0
  %1000 = vmatprep.subr.mxu0 0.0
  %1001 = vmatpush1.msra.mxu0 0.0
  %1002 = vmatprep.subr.mxu0 0.0
  %1003 = vmatpush1.msra.mxu0 0.0
  %1004 = vmatprep.subr.mxu0 0.0
  %1005 = vmatpush1.msra.mxu0 0.0
  %1006 = vmatprep.subr.mxu0 0.0
  %1007 = vmatpush1.msra.mxu0 0.0
  %1008 = vmatprep.subr.mxu0 0.0
  %1009 = vmatpush1.msra.mxu0 0.0
  %1010 = vmatprep.subr.mxu0 0.0
  %1011 = vmatpush1.msra.mxu0 0.0
  %1012 = vmatprep.subr.mxu0 0.0
  %1013 = vmatpush1.msra.mxu0 0.0
  %1014 = vmatprep.mubr.f32.mxu0 0.0
  %1015 = vmatmul.mubr.f32.gmra.mrb[0].mxu0 %v905
  %v1016 = vpop.f32.mrb[0].mxu0
  %v1017 = vadd.f32 %v943, %v1016
  %v1018 = vpop.f32.mrb[0].mxu0
  %v1019 = vadd.f32 %v947, %v1018
  %1020 = vdwg.mxu0
  %v1021 = vmax.f32 %v1017, 0.0
  %v1022 = vmax.f32 %v1019, 0.0
  %v1025 = vcombine.low %v1021, %v1022
  %v1027 = vunpack.c.l.s4 1983009808
  %v1028 = vunpack.c.0.s8 %v1027
  %v1029 = vlaneseq
  %v1030 = vshrl.u32 %v1029, 7
  %v1031 = vsub.s32 %v1028, %v1030
  %v1032 = vrot.slane %v1025, %v1031
  %vm1034 = vcmask 1041408
  %vm1035 = vcmask 584706
  %vm1036 = vmor %vm1035, %vm1034
  %1037 = vst.msk [vmem:[%s22] sm:$0xf] %vm1036, %v1032
  // Predicated region
  $region90: #{vae_forward.10} parent=0 // pred_check
    _
  $region91: #{vae_forward.10} parent=0 // pred_check_branch
    %1039 = sbr.rel (0) target = $region93
  $region92: #{vae_forward.10} parent=0 // pred_region
    _
  $region93: #{vae_forward.10} parent=0 // pred_fallthru
    _
  // Predicated region
  $region94: #{vae_forward.10} parent=0 // pred_check
    _
  $region95: #{vae_forward.10} parent=0 // pred_check_branch
    %1041 = sbr.rel (0) target = $region97
  $region96: #{vae_forward.10} parent=0 // pred_region
    _
  $region97: #{vae_forward.10} parent=0 // pred_fallthru
    _
  // Predicated region
  $region98: #{vae_forward.10} parent=0 // pred_check
    _
  $region99: #{vae_forward.10} parent=0 // pred_check_branch
    %1043 = sbr.rel (0) target = $region101
  $region100: #{vae_forward.10} parent=0 // pred_region
    _
  $region101: #{vae_forward.10} parent=0 // pred_fallthru
    _
  // Predicated region
  $region102: #{vae_forward.10} parent=0 // pred_check
    _
  $region103: #{vae_forward.10} parent=0 // pred_check_branch
    %1045 = sbr.rel (0) target = $region105
  $region104: #{vae_forward.10} parent=0 // pred_region
    _
  $region105: #{vae_forward.10} parent=0 // pred_fallthru
    _

// kernel: vae_forward.11
$region0: #{vae_forward.11}
  #allocation0 [shape = 'u32[]', space=smem, size = 0x4, offset = 0x4, fixed_abs, tag = 'smem constant byte address 0x4 - core index']
  #allocation1 [shape = 'u32[144,128]{1,0:T(1,128)}', space=vmem, size = 0x12000, scoped, tag = 'internal scratch']
  %s0 = inlined_call_operand.vmem [shape: f32[8,72], index: 0, kind: input, shape index: {}]
  %s1 = inlined_call_operand.vmem [shape: f32[72,288], index: 1, kind: input, shape index: {}]
  %s2 = inlined_call_operand.vmem [shape: f32[8,1], index: 2, kind: input, shape index: {}]
  %s3 = inlined_call_operand.vmem [shape: f32[8,288], index: 3, kind: output, shape index: {}]
  %s4 = sld [smem:[#allocation0]]
  $region22: #{vae_forward.11} parent=0
    _
  %s6 = ssub.s32 1, %s4
  %s7 = scalar_select 0, %s6, %s4
  // Predicated region
  $region2: #{vae_forward.11} parent=0 // pred_check
    _
  $region3: #{vae_forward.11} parent=0 // pred_check_branch
    %9 = sbr.rel (0) target = $region5
  $region4: #{vae_forward.11} parent=0 // pred_region
    _
  $region5: #{vae_forward.11} parent=0 // pred_fallthru
    _
  // Predicated region
  $region6: #{vae_forward.11} parent=0 // pred_check
    _
  $region7: #{vae_forward.11} parent=0 // pred_check_branch
    %11 = sbr.rel (0) target = $region9
  $region8: #{vae_forward.11} parent=0 // pred_region
    _
  $region9: #{vae_forward.11} parent=0 // pred_fallthru
    _
  // Predicated region
  $region10: #{vae_forward.11} parent=0 // pred_check
    _
  $region11: #{vae_forward.11} parent=0 // pred_check_branch
    %13 = sbr.rel (0) target = $region13
  $region12: #{vae_forward.11} parent=0 // pred_region
    _
  $region13: #{vae_forward.11} parent=0 // pred_fallthru
    _
  %v14 = vld [vmem:[%s0] sm:$0xff]
  %v15 = vld [vmem:[%s1] sm:$0xff]
  %v16 = vld [vmem:[%s1 + $0x8] sm:$0xff]
  %v17 = vld [vmem:[%s1 + $0x10] sm:$0xff]
  %v18 = vld [vmem:[%s1 + $0x18] sm:$0xff]
  %v19 = vld [vmem:[%s1 + $0x20] sm:$0xff]
  %v20 = vld [vmem:[%s1 + $0x28] sm:$0xff]
  %v21 = vld [vmem:[%s1 + $0x30] sm:$0xff]
  %v22 = vld [vmem:[%s1 + $0x38] sm:$0xff]
  %v23 = vld [vmem:[%s1 + $0x40] sm:$0xff]
  %v24 = vld [vmem:[%s1 + $0x48] sm:$0xff]
  %v25 = vld [vmem:[%s1 + $0x50] sm:$0xff]
  %v26 = vld [vmem:[%s1 + $0x58] sm:$0xff]
  %v27 = vld [vmem:[%s1 + $0x60] sm:$0xff]
  %v28 = vld [vmem:[%s1 + $0x68] sm:$0xff]
  %v29 = vld [vmem:[%s1 + $0x70] sm:$0xff]
  %v30 = vld [vmem:[%s1 + $0x78] sm:$0xff]
  %v31 = vld [vmem:[%s1 + $0x80] sm:$0xff]
  %v32 = vld [vmem:[%s1 + $0x88] sm:$0xff]
  %v33 = vld [vmem:[%s1 + $0x90] sm:$0xff]
  %v34 = vld [vmem:[%s1 + $0x98] sm:$0xff]
  %v35 = vld [vmem:[%s1 + $0xa0] sm:$0xff]
  %v36 = vld [vmem:[%s1 + $0xa8] sm:$0xff]
  %v37 = vld [vmem:[%s1 + $0xb0] sm:$0xff]
  %v38 = vld [vmem:[%s1 + $0xb8] sm:$0xff]
  %v39 = vld [vmem:[%s1 + $0xc0] sm:$0xff]
  %v40 = vld [vmem:[%s1 + $0xc8] sm:$0xff]
  %v41 = vld [vmem:[%s1 + $0xd0] sm:$0xff]
  %v42 = vld [vmem:[%s2] sm:$0xff]
  %44 = vset.pattern.permute.xlu0 0
  %45 = vperm.xlu0 %44, %v42
  %v46 = vpop.permute.xlu0 %45
  %vm48 = vcmask 588800
  %v50 = vsel %vm48, %v14, 0
  %52 = vmatprep.subr.mxu0 %v16
  %53 = vmatpush1.msra.mxu0 %v15
  %54 = vmatprep.subr.mxu0 %v19
  %55 = vmatpush1.msra.mxu0 %v18
  %56 = vmatprep.subr.mxu0 %v22
  %57 = vmatpush1.msra.mxu0 %v21
  %58 = vmatprep.subr.mxu0 %v25
  %59 = vmatpush1.msra.mxu0 %v24
  %60 = vmatprep.subr.mxu0 %v28
  %61 = vmatpush1.msra.mxu0 %v27
  %62 = vmatprep.subr.mxu0 %v31
  %63 = vmatpush1.msra.mxu0 %v30
  %64 = vmatprep.subr.mxu0 %v34
  %65 = vmatpush1.msra.mxu0 %v33
  %66 = vmatprep.subr.mxu0 %v37
  %67 = vmatpush1.msra.mxu0 %v36
  %68 = vmatprep.subr.mxu0 %v40
  %69 = vmatpush1.msra.mxu0 %v39
  %70 = vmatprep.subr.mxu0 0.0
  %71 = vmatpush1.msra.mxu0 0.0
  %72 = vmatprep.subr.mxu0 0.0
  %73 = vmatpush1.msra.mxu0 0.0
  %74 = vmatprep.subr.mxu0 0.0
  %75 = vmatpush1.msra.mxu0 0.0
  %76 = vmatprep.subr.mxu0 0.0
  %77 = vmatpush1.msra.mxu0 0.0
  %78 = vmatprep.subr.mxu0 0.0
  %79 = vmatpush1.msra.mxu0 0.0
  %80 = vmatprep.subr.mxu0 0.0
  %81 = vmatpush1.msra.mxu0 0.0
  %82 = vmatprep.subr.mxu0 0.0
  %83 = vmatpush1.msra.mxu0 0.0
  %84 = vmatprep.subr.mxu0 0.0
  %85 = vmatpush1.msra.mxu0 0.0
  %86 = vmatprep.subr.mxu0 0.0
  %87 = vmatpush1.msra.mxu0 0.0
  %88 = vmatprep.subr.mxu0 0.0
  %89 = vmatpush1.msra.mxu0 0.0
  %90 = vmatprep.subr.mxu0 0.0
  %91 = vmatpush1.msra.mxu0 0.0
  %92 = vmatprep.subr.mxu0 0.0
  %93 = vmatpush1.msra.mxu0 0.0
  %94 = vmatprep.subr.mxu0 0.0
  %95 = vmatpush1.msra.mxu0 0.0
  %96 = vmatprep.subr.mxu0 0.0
  %97 = vmatpush1.msra.mxu0 0.0
  %98 = vmatprep.subr.mxu0 0.0
  %99 = vmatpush1.msra.mxu0 0.0
  %100 = vmatprep.subr.mxu0 0.0
  %101 = vmatpush1.msra.mxu0 0.0
  %102 = vmatprep.subr.mxu0 0.0
  %103 = vmatpush1.msra.mxu0 0.0
  %104 = vmatprep.subr.mxu0 0.0
  %105 = vmatpush1.msra.mxu0 0.0
  %106 = vmatprep.subr.mxu0 0.0
  %107 = vmatpush1.msra.mxu0 0.0
  %108 = vmatprep.subr.mxu0 0.0
  %109 = vmatpush1.msra.mxu0 0.0
  %110 = vmatprep.subr.mxu0 0.0
  %111 = vmatpush1.msra.mxu0 0.0
  %112 = vmatprep.subr.mxu0 0.0
  %113 = vmatpush1.msra.mxu0 0.0
  %114 = vmatprep.subr.mxu0 0.0
  %115 = vmatpush1.msra.mxu0 0.0
  %116 = vmatprep.mubr.f32.mxu0 0.0
  %117 = vmatmul.mubr.f32.gmra.mrb[0].mxu0 %v50
  %v118 = vpop.f32.mrb[0].mxu0
  %v119 = vadd.f32 %v46, %v118
  %v120 = vpop.f32.mrb[0].mxu0
  %v121 = vadd.f32 %v46, %v120
  %122 = vdwg.mxu0
  %123 = vmatprep.subr.mxu0 0.0
  %124 = vmatpush1.msra.mxu0 %v17
  %125 = vmatprep.subr.mxu0 0.0
  %126 = vmatpush1.msra.mxu0 %v20
  %127 = vmatprep.subr.mxu0 0.0
  %128 = vmatpush1.msra.mxu0 %v23
  %129 = vmatprep.subr.mxu0 0.0
  %130 = vmatpush1.msra.mxu0 %v26
  %131 = vmatprep.subr.mxu0 0.0
  %132 = vmatpush1.msra.mxu0 %v29
  %133 = vmatprep.subr.mxu0 0.0
  %134 = vmatpush1.msra.mxu0 %v32
  %135 = vmatprep.subr.mxu0 0.0
  %136 = vmatpush1.msra.mxu0 %v35
  %137 = vmatprep.subr.mxu0 0.0
  %138 = vmatpush1.msra.mxu0 %v38
  %139 = vmatprep.subr.mxu0 0.0
  %140 = vmatpush1.msra.mxu0 %v41
  %141 = vmatprep.subr.mxu0 0.0
  %142 = vmatpush1.msra.mxu0 0.0
  %143 = vmatprep.subr.mxu0 0.0
  %144 = vmatpush1.msra.mxu0 0.0
  %145 = vmatprep.subr.mxu0 0.0
  %146 = vmatpush1.msra.mxu0 0.0
  %147 = vmatprep.subr.mxu0 0.0
  %148 = vmatpush1.msra.mxu0 0.0
  %149 = vmatprep.subr.mxu0 0.0
  %150 = vmatpush1.msra.mxu0 0.0
  %151 = vmatprep.subr.mxu0 0.0
  %152 = vmatpush1.msra.mxu0 0.0
  %153 = vmatprep.subr.mxu0 0.0
  %154 = vmatpush1.msra.mxu0 0.0
  %155 = vmatprep.subr.mxu0 0.0
  %156 = vmatpush1.msra.mxu0 0.0
  %157 = vmatprep.subr.mxu0 0.0
  %158 = vmatpush1.msra.mxu0 0.0
  %159 = vmatprep.subr.mxu0 0.0
  %160 = vmatpush1.msra.mxu0 0.0
  %161 = vmatprep.subr.mxu0 0.0
  %162 = vmatpush1.msra.mxu0 0.0
  %163 = vmatprep.subr.mxu0 0.0
  %164 = vmatpush1.msra.mxu0 0.0
  %165 = vmatprep.subr.mxu0 0.0
  %166 = vmatpush1.msra.mxu0 0.0
  %167 = vmatprep.subr.mxu0 0.0
  %168 = vmatpush1.msra.mxu0 0.0
  %169 = vmatprep.subr.mxu0 0.0
  %170 = vmatpush1.msra.mxu0 0.0
  %171 = vmatprep.subr.mxu0 0.0
  %172 = vmatpush1.msra.mxu0 0.0
  %173 = vmatprep.subr.mxu0 0.0
  %174 = vmatpush1.msra.mxu0 0.0
  %175 = vmatprep.subr.mxu0 0.0
  %176 = vmatpush1.msra.mxu0 0.0
  %177 = vmatprep.subr.mxu0 0.0
  %178 = vmatpush1.msra.mxu0 0.0
  %179 = vmatprep.subr.mxu0 0.0
  %180 = vmatpush1.msra.mxu0 0.0
  %181 = vmatprep.subr.mxu0 0.0
  %182 = vmatpush1.msra.mxu0 0.0
  %183 = vmatprep.subr.mxu0 0.0
  %184 = vmatpush1.msra.mxu0 0.0
  %185 = vmatprep.subr.mxu0 0.0
  %186 = vmatpush1.msra.mxu0 0.0
  %187 = vmatprep.mubr.f32.mxu0 0.0
  %188 = vmatmul.mubr.f32.gmra.mrb[0].mxu0 %v50
  %v189 = vpop.f32.mrb[0].mxu0
  %v190 = vadd.f32 %v46, %v189
  %v191 = vpop.f32.mrb[0].mxu0
  %192 = vdwg.mxu0
  %v193 = vmax.f32 %v119, 0.0
  %v194 = vmax.f32 %v121, 0.0
  %v195 = vmax.f32 %v190, 0.0
  %196 = vst [vmem:[%s3] sm:$0xff] %v193
  %197 = vst [vmem:[%s3 + $0x8] sm:$0xff] %v194
  %vm198 = vcmask 261120
  %199 = vst.msk [vmem:[%s3 + $0x10] sm:$0xff] %vm198, %v195
  // Predicated region
  $region14: #{vae_forward.11} parent=0 // pred_check
    _
  $region15: #{vae_forward.11} parent=0 // pred_check_branch
    %201 = sbr.rel (0) target = $region17
  $region16: #{vae_forward.11} parent=0 // pred_region
    _
  $region17: #{vae_forward.11} parent=0 // pred_fallthru
    _
  // Predicated region
  $region18: #{vae_forward.11} parent=0 // pred_check
    _
  $region19: #{vae_forward.11} parent=0 // pred_check_branch
    %203 = sbr.rel (0) target = $region21
  $region20: #{vae_forward.11} parent=0 // pred_region
    _
  $region21: #{vae_forward.11} parent=0 // pred_fallthru
    _

// kernel: vae_forward.12
$region0: #{vae_forward.12}
  #allocation0 [shape = 'u32[]', space=smem, size = 0x4, offset = 0x4, fixed_abs, tag = 'smem constant byte address 0x4 - core index']
  #allocation1 [shape = 'u32[144,128]{1,0:T(1,128)}', space=vmem, size = 0x12000, scoped, tag = 'internal scratch']
  %s0 = inlined_call_operand.vmem [shape: f32[4,72], index: 0, kind: input, shape index: {}]
  %s1 = inlined_call_operand.vmem [shape: f32[72,392], index: 1, kind: input, shape index: {}]
  %s2 = inlined_call_operand.vmem [shape: f32[4,1], index: 2, kind: input, shape index: {}]
  %s3 = inlined_call_operand.vmem [shape: f32[4,392], index: 3, kind: output, shape index: {}]
  %s4 = sld [smem:[#allocation0]]
  $region22: #{vae_forward.12} parent=0
    _
  %s6 = ssub.s32 1, %s4
  %s7 = scalar_select 0, %s6, %s4
  // Predicated region
  $region2: #{vae_forward.12} parent=0 // pred_check
    _
  $region3: #{vae_forward.12} parent=0 // pred_check_branch
    %9 = sbr.rel (0) target = $region5
  $region4: #{vae_forward.12} parent=0 // pred_region
    _
  $region5: #{vae_forward.12} parent=0 // pred_fallthru
    _
  // Predicated region
  $region6: #{vae_forward.12} parent=0 // pred_check
    _
  $region7: #{vae_forward.12} parent=0 // pred_check_branch
    %11 = sbr.rel (0) target = $region9
  $region8: #{vae_forward.12} parent=0 // pred_region
    _
  $region9: #{vae_forward.12} parent=0 // pred_fallthru
    _
  // Predicated region
  $region10: #{vae_forward.12} parent=0 // pred_check
    _
  $region11: #{vae_forward.12} parent=0 // pred_check_branch
    %13 = sbr.rel (0) target = $region13
  $region12: #{vae_forward.12} parent=0 // pred_region
    _
  $region13: #{vae_forward.12} parent=0 // pred_fallthru
    _
  %v14 = vld [vmem:[%s0] sm:$0xf]
  %v15 = vld [vmem:[%s1] sm:$0xff]
  %v16 = vld [vmem:[%s1 + $0x8] sm:$0xff]
  %v17 = vld [vmem:[%s1 + $0x10] sm:$0xff]
  %v18 = vld [vmem:[%s1 + $0x18] sm:$0xff]
  %v19 = vld [vmem:[%s1 + $0x20] sm:$0xff]
  %v20 = vld [vmem:[%s1 + $0x28] sm:$0xff]
  %v21 = vld [vmem:[%s1 + $0x30] sm:$0xff]
  %v22 = vld [vmem:[%s1 + $0x38] sm:$0xff]
  %v23 = vld [vmem:[%s1 + $0x40] sm:$0xff]
  %v24 = vld [vmem:[%s1 + $0x48] sm:$0xff]
  %v25 = vld [vmem:[%s1 + $0x50] sm:$0xff]
  %v26 = vld [vmem:[%s1 + $0x58] sm:$0xff]
  %v27 = vld [vmem:[%s1 + $0x60] sm:$0xff]
  %v28 = vld [vmem:[%s1 + $0x68] sm:$0xff]
  %v29 = vld [vmem:[%s1 + $0x70] sm:$0xff]
  %v30 = vld [vmem:[%s1 + $0x78] sm:$0xff]
  %v31 = vld [vmem:[%s1 + $0x80] sm:$0xff]
  %v32 = vld [vmem:[%s1 + $0x88] sm:$0xff]
  %v33 = vld [vmem:[%s1 + $0x90] sm:$0xff]
  %v34 = vld [vmem:[%s1 + $0x98] sm:$0xff]
  %v35 = vld [vmem:[%s1 + $0xa0] sm:$0xff]
  %v36 = vld [vmem:[%s1 + $0xa8] sm:$0xff]
  %v37 = vld [vmem:[%s1 + $0xb0] sm:$0xff]
  %v38 = vld [vmem:[%s1 + $0xb8] sm:$0xff]
  %v39 = vld [vmem:[%s1 + $0xc0] sm:$0xff]
  %v40 = vld [vmem:[%s1 + $0xc8] sm:$0xff]
  %v41 = vld [vmem:[%s1 + $0xd0] sm:$0xff]
  %v42 = vld [vmem:[%s1 + $0xd8] sm:$0xff]
  %v43 = vld [vmem:[%s1 + $0xe0] sm:$0xff]
  %v44 = vld [vmem:[%s1 + $0xe8] sm:$0xff]
  %v45 = vld [vmem:[%s1 + $0xf0] sm:$0xff]
  %v46 = vld [vmem:[%s1 + $0xf8] sm:$0xff]
  %v47 = vld [vmem:[%s1 + $0x100] sm:$0xff]
  %v48 = vld [vmem:[%s1 + $0x108] sm:$0xff]
  %v49 = vld [vmem:[%s1 + $0x110] sm:$0xff]
  %v50 = vld [vmem:[%s1 + $0x118] sm:$0xff]
  %v51 = vld [vmem:[%s2] sm:$0xf]
  %53 = vset.pattern.permute.xlu0 0
  %54 = vperm.xlu0 %53, %v51
  %v55 = vpop.permute.xlu0 %54
  %vm57 = vcmask 588800
  %v59 = vsel %vm57, %v14, 0
  %61 = vmatprep.subr.mxu0 %v16
  %62 = vmatpush1.msra.mxu0 %v15
  %63 = vmatprep.subr.mxu0 %v20
  %64 = vmatpush1.msra.mxu0 %v19
  %65 = vmatprep.subr.mxu0 %v24
  %66 = vmatpush1.msra.mxu0 %v23
  %67 = vmatprep.subr.mxu0 %v28
  %68 = vmatpush1.msra.mxu0 %v27
  %69 = vmatprep.subr.mxu0 %v32
  %70 = vmatpush1.msra.mxu0 %v31
  %71 = vmatprep.subr.mxu0 %v36
  %72 = vmatpush1.msra.mxu0 %v35
  %73 = vmatprep.subr.mxu0 %v40
  %74 = vmatpush1.msra.mxu0 %v39
  %75 = vmatprep.subr.mxu0 %v44
  %76 = vmatpush1.msra.mxu0 %v43
  %77 = vmatprep.subr.mxu0 %v48
  %78 = vmatpush1.msra.mxu0 %v47
  %79 = vmatprep.subr.mxu0 0.0
  %80 = vmatpush1.msra.mxu0 0.0
  %81 = vmatprep.subr.mxu0 0.0
  %82 = vmatpush1.msra.mxu0 0.0
  %83 = vmatprep.subr.mxu0 0.0
  %84 = vmatpush1.msra.mxu0 0.0
  %85 = vmatprep.subr.mxu0 0.0
  %86 = vmatpush1.msra.mxu0 0.0
  %87 = vmatprep.subr.mxu0 0.0
  %88 = vmatpush1.msra.mxu0 0.0
  %89 = vmatprep.subr.mxu0 0.0
  %90 = vmatpush1.msra.mxu0 0.0
  %91 = vmatprep.subr.mxu0 0.0
  %92 = vmatpush1.msra.mxu0 0.0
  %93 = vmatprep.subr.mxu0 0.0
  %94 = vmatpush1.msra.mxu0 0.0
  %95 = vmatprep.subr.mxu0 0.0
  %96 = vmatpush1.msra.mxu0 0.0
  %97 = vmatprep.subr.mxu0 0.0
  %98 = vmatpush1.msra.mxu0 0.0
  %99 = vmatprep.subr.mxu0 0.0
  %100 = vmatpush1.msra.mxu0 0.0
  %101 = vmatprep.subr.mxu0 0.0
  %102 = vmatpush1.msra.mxu0 0.0
  %103 = vmatprep.subr.mxu0 0.0
  %104 = vmatpush1.msra.mxu0 0.0
  %105 = vmatprep.subr.mxu0 0.0
  %106 = vmatpush1.msra.mxu0 0.0
  %107 = vmatprep.subr.mxu0 0.0
  %108 = vmatpush1.msra.mxu0 0.0
  %109 = vmatprep.subr.mxu0 0.0
  %110 = vmatpush1.msra.mxu0 0.0
  %111 = vmatprep.subr.mxu0 0.0
  %112 = vmatpush1.msra.mxu0 0.0
  %113 = vmatprep.subr.mxu0 0.0
  %114 = vmatpush1.msra.mxu0 0.0
  %115 = vmatprep.subr.mxu0 0.0
  %116 = vmatpush1.msra.mxu0 0.0
  %117 = vmatprep.subr.mxu0 0.0
  %118 = vmatpush1.msra.mxu0 0.0
  %119 = vmatprep.subr.mxu0 0.0
  %120 = vmatpush1.msra.mxu0 0.0
  %121 = vmatprep.subr.mxu0 0.0
  %122 = vmatpush1.msra.mxu0 0.0
  %123 = vmatprep.subr.mxu0 0.0
  %124 = vmatpush1.msra.mxu0 0.0
  %125 = vmatprep.mubr.f32.mxu0 0.0
  %126 = vmatmul.mubr.f32.gmra.mrb[0].mxu0 %v59
  %v127 = vpop.f32.mrb[0].mxu0
  %v128 = vadd.f32 %v55, %v127
  %v129 = vpop.f32.mrb[0].mxu0
  %v130 = vadd.f32 %v55, %v129
  %131 = vdwg.mxu0
  %132 = vmatprep.subr.mxu0 %v18
  %133 = vmatpush1.msra.mxu0 %v17
  %134 = vmatprep.subr.mxu0 %v22
  %135 = vmatpush1.msra.mxu0 %v21
  %136 = vmatprep.subr.mxu0 %v26
  %137 = vmatpush1.msra.mxu0 %v25
  %138 = vmatprep.subr.mxu0 %v30
  %139 = vmatpush1.msra.mxu0 %v29
  %140 = vmatprep.subr.mxu0 %v34
  %141 = vmatpush1.msra.mxu0 %v33
  %142 = vmatprep.subr.mxu0 %v38
  %143 = vmatpush1.msra.mxu0 %v37
  %144 = vmatprep.subr.mxu0 %v42
  %145 = vmatpush1.msra.mxu0 %v41
  %146 = vmatprep.subr.mxu0 %v46
  %147 = vmatpush1.msra.mxu0 %v45
  %148 = vmatprep.subr.mxu0 %v50
  %149 = vmatpush1.msra.mxu0 %v49
  %150 = vmatprep.subr.mxu0 0.0
  %151 = vmatpush1.msra.mxu0 0.0
  %152 = vmatprep.subr.mxu0 0.0
  %153 = vmatpush1.msra.mxu0 0.0
  %154 = vmatprep.subr.mxu0 0.0
  %155 = vmatpush1.msra.mxu0 0.0
  %156 = vmatprep.subr.mxu0 0.0
  %157 = vmatpush1.msra.mxu0 0.0
  %158 = vmatprep.subr.mxu0 0.0
  %159 = vmatpush1.msra.mxu0 0.0
  %160 = vmatprep.subr.mxu0 0.0
  %161 = vmatpush1.msra.mxu0 0.0
  %162 = vmatprep.subr.mxu0 0.0
  %163 = vmatpush1.msra.mxu0 0.0
  %164 = vmatprep.subr.mxu0 0.0
  %165 = vmatpush1.msra.mxu0 0.0
  %166 = vmatprep.subr.mxu0 0.0
  %167 = vmatpush1.msra.mxu0 0.0
  %168 = vmatprep.subr.mxu0 0.0
  %169 = vmatpush1.msra.mxu0 0.0
  %170 = vmatprep.subr.mxu0 0.0
  %171 = vmatpush1.msra.mxu0 0.0
  %172 = vmatprep.subr.mxu0 0.0
  %173 = vmatpush1.msra.mxu0 0.0
  %174 = vmatprep.subr.mxu0 0.0
  %175 = vmatpush1.msra.mxu0 0.0
  %176 = vmatprep.subr.mxu0 0.0
  %177 = vmatpush1.msra.mxu0 0.0
  %178 = vmatprep.subr.mxu0 0.0
  %179 = vmatpush1.msra.mxu0 0.0
  %180 = vmatprep.subr.mxu0 0.0
  %181 = vmatpush1.msra.mxu0 0.0
  %182 = vmatprep.subr.mxu0 0.0
  %183 = vmatpush1.msra.mxu0 0.0
  %184 = vmatprep.subr.mxu0 0.0
  %185 = vmatpush1.msra.mxu0 0.0
  %186 = vmatprep.subr.mxu0 0.0
  %187 = vmatpush1.msra.mxu0 0.0
  %188 = vmatprep.subr.mxu0 0.0
  %189 = vmatpush1.msra.mxu0 0.0
  %190 = vmatprep.subr.mxu0 0.0
  %191 = vmatpush1.msra.mxu0 0.0
  %192 = vmatprep.subr.mxu0 0.0
  %193 = vmatpush1.msra.mxu0 0.0
  %194 = vmatprep.subr.mxu0 0.0
  %195 = vmatpush1.msra.mxu0 0.0
  %196 = vmatprep.mubr.f32.mxu0 0.0
  %197 = vmatmul.mubr.f32.gmra.mrb[0].mxu0 %v59
  %v198 = vpop.f32.mrb[0].mxu0
  %v199 = vadd.f32 %v55, %v198
  %v200 = vpop.f32.mrb[0].mxu0
  %v201 = vadd.f32 %v55, %v200
  %202 = vdwg.mxu0
  %v203 = vmax.f32 %v128, 0.0
  %v204 = vmax.f32 %v130, 0.0
  %v205 = vmax.f32 %v199, 0.0
  %v206 = vmax.f32 %v201, 0.0
  %v211 = vcombine.low %v203, %v204
  %v212 = vcombine.low %v205, %v206
  %215 = vst [vmem:[%s3] sm:$0xff] %v211
  %vm216 = vcmask 1043456
  %vm217 = vcmask 64516
  %vm218 = vmor %vm217, %vm216
  %219 = vst.msk [vmem:[%s3 + $0x8] sm:$0xff] %vm218, %v212
  // Predicated region
  $region14: #{vae_forward.12} parent=0 // pred_check
    _
  $region15: #{vae_forward.12} parent=0 // pred_check_branch
    %221 = sbr.rel (0) target = $region17
  $region16: #{vae_forward.12} parent=0 // pred_region
    _
  $region17: #{vae_forward.12} parent=0 // pred_fallthru
    _
  // Predicated region
  $region18: #{vae_forward.12} parent=0 // pred_check
    _
  $region19: #{vae_forward.12} parent=0 // pred_check_branch
    %223 = sbr.rel (0) target = $region21
  $region20: #{vae_forward.12} parent=0 // pred_region
    _
  $region21: #{vae_forward.12} parent=0 // pred_fallthru
    _

// kernel: vae_forward.13
$region0: #{vae_forward.13}
  #allocation0 [shape = 'u32[]', space=smem, size = 0x4, offset = 0x4, fixed_abs, tag = 'smem constant byte address 0x4 - core index']
  #allocation1 [shape = 'u32[144,128]{1,0:T(1,128)}', space=vmem, size = 0x12000, scoped, tag = 'internal scratch']
  #allocation2 [shape = 'f32[1,1]{1,0:T(1,128)S(6)}', space=smem, size = 0x200, scoped, tag = 'scoped memory for vae_forward.13']
  #allocation3 [shape = 'f32[1,1]{1,0:T(1,128)S(1)}', space=vmem, size = 0x200, scoped, tag = 'scoped memory for vae_forward.13']
  %s0 = inlined_call_operand.<no memory space> [shape: f32[1,1], index: 0, kind: input, shape index: {}]
  %s1 = inlined_call_operand.vmem [shape: f32[1,36], index: 1, kind: input, shape index: {}]
  %s2 = inlined_call_operand.vmem [shape: f32[36,512], index: 2, kind: input, shape index: {}]
  %s3 = inlined_call_operand.<no memory space> [shape: f32[1,1], index: 3, kind: input, shape index: {}]
  %s4 = inlined_call_operand.vmem [shape: f32[1,512], index: 4, kind: input, shape index: {}]
  %s5 = inlined_call_operand.vmem [shape: f32[2,1], index: 5, kind: input, shape index: {}]
  %s6 = inlined_call_operand.vmem [shape: f32[1,512], index: 6, kind: output, shape index: {0}]
  %s7 = inlined_call_operand.hbm [shape: f32[1,1], index: 7, kind: output, shape index: {1}]
  %8 = xla_tuple %s6, %s7
  %s9 = sld [smem:[#allocation0]]
  $region42: #{vae_forward.13} parent=0
    _
  %s11 = ssub.s32 1, %s9
  %s12 = scalar_select 0, %s11, %s9
  %13 = sst [smem:[#allocation2]] %s0
  %v14 = vstv %s3
  %15 = vst [vmem:[#allocation3] sm:$0x1] %v14
  $region1: #{vae_forward.13} parent=0
    #allocation4 [shape = 'u8[512]{0}', space=vmem, size = 0x400, scoped, tag = 'output window, operand 1, single buffered']
    #allocation5 [shape = 's32[1]{0}', space=sflag, size = 0x4, scoped, tag = 'scoped memory for vae_forward.13']
    %16 = vsyncpa [#allocation5], 0
    // Predicated region
    $region2: #{vae_forward.13} parent=1 // pred_check
      _
    $region3: #{vae_forward.13} parent=1 // pred_check_branch
      %18 = sbr.rel (0) target = $region5
    $region4: #{vae_forward.13} parent=1 // pred_region
      _
    $region5: #{vae_forward.13} parent=1 // pred_fallthru
      _
    // Predicated region
    $region6: #{vae_forward.13} parent=1 // pred_check
      _
    $region7: #{vae_forward.13} parent=1 // pred_check_branch
      %20 = sbr.rel (0) target = $region9
    $region8: #{vae_forward.13} parent=1 // pred_region
      _
    $region9: #{vae_forward.13} parent=1 // pred_fallthru
      _
    // Predicated region
    $region10: #{vae_forward.13} parent=1 // pred_check
      _
    $region11: #{vae_forward.13} parent=1 // pred_check_branch
      %22 = sbr.rel (0) target = $region13
    $region12: #{vae_forward.13} parent=1 // pred_region
      _
    $region13: #{vae_forward.13} parent=1 // pred_fallthru
      _
    // Predicated region
    $region14: #{vae_forward.13} parent=1 // pred_check
      _
    $region15: #{vae_forward.13} parent=1 // pred_check_branch
      %24 = sbr.rel (0) target = $region17
    $region16: #{vae_forward.13} parent=1 // pred_region
      _
    $region17: #{vae_forward.13} parent=1 // pred_fallthru
      _
    // Predicated region
    $region18: #{vae_forward.13} parent=1 // pred_check
      _
    $region19: #{vae_forward.13} parent=1 // pred_check_branch
      %26 = sbr.rel (0) target = $region21
    $region20: #{vae_forward.13} parent=1 // pred_region
      _
    $region21: #{vae_forward.13} parent=1 // pred_fallthru
      _
    // Predicated region
    $region22: #{vae_forward.13} parent=1 // pred_check
      _
    $region23: #{vae_forward.13} parent=1 // pred_check_branch
      %28 = sbr.rel (0) target = $region25
    $region24: #{vae_forward.13} parent=1 // pred_region
      _
    $region25: #{vae_forward.13} parent=1 // pred_fallthru
      _
    %v29 = vld [vmem:[%s1] sm:$0x1]
    %v30 = vld [vmem:[%s2] sm:$0xff]
    %v31 = vld [vmem:[%s2 + $0x8] sm:$0xff]
    %v32 = vld [vmem:[%s2 + $0x10] sm:$0xff]
    %v33 = vld [vmem:[%s2 + $0x18] sm:$0xff]
    %v34 = vld [vmem:[%s2 + $0x20] sm:$0xff]
    %v35 = vld [vmem:[%s2 + $0x28] sm:$0xff]
    %v36 = vld [vmem:[%s2 + $0x30] sm:$0xff]
    %v37 = vld [vmem:[%s2 + $0x38] sm:$0xff]
    %v38 = vld [vmem:[%s2 + $0x40] sm:$0xff]
    %v39 = vld [vmem:[%s2 + $0x48] sm:$0xff]
    %v40 = vld [vmem:[%s2 + $0x50] sm:$0xff]
    %v41 = vld [vmem:[%s2 + $0x58] sm:$0xff]
    %v42 = vld [vmem:[%s2 + $0x60] sm:$0xff]
    %v43 = vld [vmem:[%s2 + $0x68] sm:$0xff]
    %v44 = vld [vmem:[%s2 + $0x70] sm:$0xff]
    %v45 = vld [vmem:[%s2 + $0x78] sm:$0xff]
    %v46 = vld [vmem:[%s2 + $0x80] sm:$0xf]
    %v47 = vld [vmem:[%s2 + $0x88] sm:$0xf]
    %v48 = vld [vmem:[%s2 + $0x90] sm:$0xf]
    %v49 = vld [vmem:[%s2 + $0x98] sm:$0xf]
    %v50 = vld [vmem:[#allocation3] sm:$0x1]
    %52 = vset.pattern.permute.xlu0 0
    %53 = vperm.xlu0 %52, %v50
    %v54 = vpop.permute.xlu0 %53
    %v56 = vlaneseq
    %v57 = vshrl.u32 %v56, 7
    %v58 = vsub.s32 0, %v57
    %v59 = vrot.slane %v54, %v58
    %vm60 = vcmask 293888
    %v62 = vsel %vm60, %v29, 0
    %vm64 = vcmask 1043456
    %v66 = vsel %vm64, %v46, 0
    %v69 = vsel %vm64, %v47, 0
    %v72 = vsel %vm64, %v48, 0
    %v75 = vsel %vm64, %v49, 0
    %77 = vmatprep.subr.mxu0 %v31
    %78 = vmatpush1.msra.mxu0 %v30
    %79 = vmatprep.subr.mxu0 %v35
    %80 = vmatpush1.msra.mxu0 %v34
    %81 = vmatprep.subr.mxu0 %v39
    %82 = vmatpush1.msra.mxu0 %v38
    %83 = vmatprep.subr.mxu0 %v43
    %84 = vmatpush1.msra.mxu0 %v42
    %85 = vmatprep.subr.mxu0 %v69
    %86 = vmatpush1.msra.mxu0 %v66
    %87 = vmatprep.subr.mxu0 0.0
    %88 = vmatpush1.msra.mxu0 0.0
    %89 = vmatprep.subr.mxu0 0.0
    %90 = vmatpush1.msra.mxu0 0.0
    %91 = vmatprep.subr.mxu0 0.0
    %92 = vmatpush1.msra.mxu0 0.0
    %93 = vmatprep.subr.mxu0 0.0
    %94 = vmatpush1.msra.mxu0 0.0
    %95 = vmatprep.subr.mxu0 0.0
    %96 = vmatpush1.msra.mxu0 0.0
    %97 = vmatprep.subr.mxu0 0.0
    %98 = vmatpush1.msra.mxu0 0.0
    %99 = vmatprep.subr.mxu0 0.0
    %100 = vmatpush1.msra.mxu0 0.0
    %101 = vmatprep.subr.mxu0 0.0
    %102 = vmatpush1.msra.mxu0 0.0
    %103 = vmatprep.subr.mxu0 0.0
    %104 = vmatpush1.msra.mxu0 0.0
    %105 = vmatprep.subr.mxu0 0.0
    %106 = vmatpush1.msra.mxu0 0.0
    %107 = vmatprep.subr.mxu0 0.0
    %108 = vmatpush1.msra.mxu0 0.0
    %109 = vmatprep.subr.mxu0 0.0
    %110 = vmatpush1.msra.mxu0 0.0
    %111 = vmatprep.subr.mxu0 0.0
    %112 = vmatpush1.msra.mxu0 0.0
    %113 = vmatprep.subr.mxu0 0.0
    %114 = vmatpush1.msra.mxu0 0.0
    %115 = vmatprep.subr.mxu0 0.0
    %116 = vmatpush1.msra.mxu0 0.0
    %117 = vmatprep.subr.mxu0 0.0
    %118 = vmatpush1.msra.mxu0 0.0
    %119 = vmatprep.subr.mxu0 0.0
    %120 = vmatpush1.msra.mxu0 0.0
    %121 = vmatprep.subr.mxu0 0.0
    %122 = vmatpush1.msra.mxu0 0.0
    %123 = vmatprep.subr.mxu0 0.0
    %124 = vmatpush1.msra.mxu0 0.0
    %125 = vmatprep.subr.mxu0 0.0
    %126 = vmatpush1.msra.mxu0 0.0
    %127 = vmatprep.subr.mxu0 0.0
    %128 = vmatpush1.msra.mxu0 0.0
    %129 = vmatprep.subr.mxu0 0.0
    %130 = vmatpush1.msra.mxu0 0.0
    %131 = vmatprep.subr.mxu0 0.0
    %132 = vmatpush1.msra.mxu0 0.0
    %133 = vmatprep.subr.mxu0 0.0
    %134 = vmatpush1.msra.mxu0 0.0
    %135 = vmatprep.subr.mxu0 0.0
    %136 = vmatpush1.msra.mxu0 0.0
    %137 = vmatprep.subr.mxu0 0.0
    %138 = vmatpush1.msra.mxu0 0.0
    %139 = vmatprep.subr.mxu0 0.0
    %140 = vmatpush1.msra.mxu0 0.0
    %141 = vmatprep.mubr.f32.mxu0 0.0
    %142 = vmatmul.mubr.f32.gmra.mrb[0].mxu0 %v62
    %v143 = vpop.f32.mrb[0].mxu0
    %v144 = vadd.f32 %v59, %v143
    %v145 = vpop.f32.mrb[0].mxu0
    %v146 = vadd.f32 %v59, %v145
    %147 = vdwg.mxu0
    %148 = vmatprep.subr.mxu0 %v33
    %149 = vmatpush1.msra.mxu0 %v32
    %150 = vmatprep.subr.mxu0 %v37
    %151 = vmatpush1.msra.mxu0 %v36
    %152 = vmatprep.subr.mxu0 %v41
    %153 = vmatpush1.msra.mxu0 %v40
    %154 = vmatprep.subr.mxu0 %v45
    %155 = vmatpush1.msra.mxu0 %v44
    %156 = vmatprep.subr.mxu0 %v75
    %157 = vmatpush1.msra.mxu0 %v72
    %158 = vmatprep.subr.mxu0 0.0
    %159 = vmatpush1.msra.mxu0 0.0
    %160 = vmatprep.subr.mxu0 0.0
    %161 = vmatpush1.msra.mxu0 0.0
    %162 = vmatprep.subr.mxu0 0.0
    %163 = vmatpush1.msra.mxu0 0.0
    %164 = vmatprep.subr.mxu0 0.0
    %165 = vmatpush1.msra.mxu0 0.0
    %166 = vmatprep.subr.mxu0 0.0
    %167 = vmatpush1.msra.mxu0 0.0
    %168 = vmatprep.subr.mxu0 0.0
    %169 = vmatpush1.msra.mxu0 0.0
    %170 = vmatprep.subr.mxu0 0.0
    %171 = vmatpush1.msra.mxu0 0.0
    %172 = vmatprep.subr.mxu0 0.0
    %173 = vmatpush1.msra.mxu0 0.0
    %174 = vmatprep.subr.mxu0 0.0
    %175 = vmatpush1.msra.mxu0 0.0
    %176 = vmatprep.subr.mxu0 0.0
    %177 = vmatpush1.msra.mxu0 0.0
    %178 = vmatprep.subr.mxu0 0.0
    %179 = vmatpush1.msra.mxu0 0.0
    %180 = vmatprep.subr.mxu0 0.0
    %181 = vmatpush1.msra.mxu0 0.0
    %182 = vmatprep.subr.mxu0 0.0
    %183 = vmatpush1.msra.mxu0 0.0
    %184 = vmatprep.subr.mxu0 0.0
    %185 = vmatpush1.msra.mxu0 0.0
    %186 = vmatprep.subr.mxu0 0.0
    %187 = vmatpush1.msra.mxu0 0.0
    %188 = vmatprep.subr.mxu0 0.0
    %189 = vmatpush1.msra.mxu0 0.0
    %190 = vmatprep.subr.mxu0 0.0
    %191 = vmatpush1.msra.mxu0 0.0
    %192 = vmatprep.subr.mxu0 0.0
    %193 = vmatpush1.msra.mxu0 0.0
    %194 = vmatprep.subr.mxu0 0.0
    %195 = vmatpush1.msra.mxu0 0.0
    %196 = vmatprep.subr.mxu0 0.0
    %197 = vmatpush1.msra.mxu0 0.0
    %198 = vmatprep.subr.mxu0 0.0
    %199 = vmatpush1.msra.mxu0 0.0
    %200 = vmatprep.subr.mxu0 0.0
    %201 = vmatpush1.msra.mxu0 0.0
    %202 = vmatprep.subr.mxu0 0.0
    %203 = vmatpush1.msra.mxu0 0.0
    %204 = vmatprep.subr.mxu0 0.0
    %205 = vmatpush1.msra.mxu0 0.0
    %206 = vmatprep.subr.mxu0 0.0
    %207 = vmatpush1.msra.mxu0 0.0
    %208 = vmatprep.subr.mxu0 0.0
    %209 = vmatpush1.msra.mxu0 0.0
    %210 = vmatprep.subr.mxu0 0.0
    %211 = vmatpush1.msra.mxu0 0.0
    %212 = vmatprep.mubr.f32.mxu0 0.0
    %213 = vmatmul.mubr.f32.gmra.mrb[0].mxu0 %v62
    %v214 = vpop.f32.mrb[0].mxu0
    %v215 = vadd.f32 %v59, %v214
    %v216 = vpop.f32.mrb[0].mxu0
    %v217 = vadd.f32 %v59, %v216
    %218 = vdwg.mxu0
    %v219 = vxor.u32 %v144, 2147483648
    %v220 = vxor.u32 %v146, 2147483648
    %v221 = vxor.u32 %v215, 2147483648
    %v222 = vxor.u32 %v217, 2147483648
    %v223 = vmul.f32 %v219, 1.442695
    %v224 = vpow.pop %v223
    %v225 = vmul.f32 %v220, 1.442695
    %v226 = vpow.pop %v225
    %v227 = vmul.f32 %v221, 1.442695
    %v228 = vpow.pop %v227
    %v229 = vmul.f32 %v222, 1.442695
    %v230 = vpow.pop %v229
    %v231 = vadd.f32 %v224, 1.0
    %v232 = vadd.f32 %v226, 1.0
    %v233 = vadd.f32 %v228, 1.0
    %v234 = vadd.f32 %v230, 1.0
    %v235 = vrcp.pop %v231
    %v236 = vmul.f32 1.0, %v235
    %v237 = vrcp.pop %v232
    %v238 = vmul.f32 1.0, %v237
    %v239 = vrcp.pop %v233
    %v240 = vmul.f32 1.0, %v239
    %v241 = vrcp.pop %v234
    %v242 = vmul.f32 1.0, %v241
    %v247 = vcombine.low %v236, %v238
    %v248 = vcombine.low %v240, %v242
    %v250 = vunpack.c.l.s4 1966171168
    %v251 = vunpack.c.0.s8 %v250
    %v252 = vlaneseq
    %v253 = vshrl.u32 %v252, 7
    %v254 = vsub.s32 %v251, %v253
    %v255 = vrot.slane %v247, %v254
    %v257 = vunpack.c.l.s4 1966171168
    %v258 = vunpack.c.0.s8 %v257
    %v259 = vlaneseq
    %v260 = vshrl.u32 %v259, 7
    %v261 = vsub.s32 %v258, %v260
    %v262 = vrot.slane %v248, %v261
    %v263 = vcombine.low %v255, %v262
    %v265 = vunpack.c.l.s4 1966171168
    %v266 = vunpack.c.0.s8 %v265
    %v267 = vlaneseq
    %v268 = vshrl.u32 %v267, 7
    %v269 = vsub.s32 %v266, %v268
    %v270 = vrot.slane %v263, %v269
    %v272 = vlaneseq
    %vm273 = vcmp.ge.s32.totalorder %v272, 0
    %vm274 = vcmp.lt.s32.totalorder %v272, 512
    %vm275 = vmand %vm273, %vm274
    %276 = vst.msk [vmem:[%s6] sm:$0xf] %vm275, %v270
    %s277 = sld [smem:[#allocation2]]
    %s278 = smul.f32 %s277, -2.0
    %v279 = vstv %s278
    %v280 = vmul.f32 %v279, 1.442695
    %v281 = vpow.pop %v280
    %s282 = vtos %v281
    %v283 = vld [vmem:[%s4] sm:$0xf]
    %v284 = vsub.f32 %v283, %v270
    %v285 = vmul.f32 %v284, -0.5
    %v286 = vmul.f32 %v285, %v284
    %v287 = vstv %s282
    %v288 = vmul.f32 %v286, %v287
    %v289 = vstv %s277
    %v290 = vsub.f32 %v288, %v289
    %v291 = vsub.f32 %v290, 0.9189385
    %v293 = vlaneseq
    %v294 = vshrl.u32 %v293, 7
    %v295 = vsub.s32 0, %v294
    %v296 = vrot.slane %v291, %v295
    %v297 = vlaneseq
    %v298 = vshrl.u32 %v297, 7
    %v299 = vsub.s32 1, %v298
    %v300 = vrot.slane %v291, %v299
    %v301 = vlaneseq
    %v302 = vshrl.u32 %v301, 7
    %v303 = vsub.s32 2, %v302
    %v304 = vrot.slane %v291, %v303
    %v305 = vlaneseq
    %v306 = vshrl.u32 %v305, 7
    %v307 = vsub.s32 3, %v306
    %v308 = vrot.slane %v291, %v307
    %vm313 = vcmask 1040384
    %v314 = vsel %vm313, %v296, 0.0
    %v315 = vsel %vm313, %v300, 0.0
    %v316 = vadd.f32 %v314, %v315
    %v317 = vsel %vm313, %v304, 0.0
    %v318 = vadd.f32 %v316, %v317
    %v319 = vsel %vm313, %v308, 0.0
    %v320 = vadd.f32 %v318, %v319
    %321 = vadd.xlane.f32.xlu0 %v320
    %v322 = vpop.xlane.xlu0 %321
    %v323 = vld [vmem:[%s5] sm:$0x3]
    %vm324 = vcmask 1024
    %v325 = vsel %vm324, %v323, 0.0
    %v326 = vrot.slane %v325, 4
    %v327 = vadd.f32 %v325, %v326
    %v328 = vrot.slane %v327, 2
    %v329 = vadd.f32 %v327, %v328
    %v330 = vrot.slane %v329, 1
    %v331 = vadd.f32 %v329, %v330
    %v332 = vsub.f32 %v331, %v322
    %vm333 = vcmask 0
    %334 = vst.msk [vmem:[#allocation4] sm:$0x1] %vm333, %v332
    // Predicated region
    $region26: #{vae_forward.13} parent=1 // pred_check
      _
    $region27: #{vae_forward.13} parent=1 // pred_check_branch
      %336 = sbr.rel (0) target = $region29
    $region28: #{vae_forward.13} parent=1 // pred_region
      _
    $region29: #{vae_forward.13} parent=1 // pred_fallthru
      _
    // Predicated region
    $region30: #{vae_forward.13} parent=1 // pred_check
      _
    $region31: #{vae_forward.13} parent=1 // pred_check_branch
      %338 = sbr.rel (0) target = $region33
    $region32: #{vae_forward.13} parent=1 // pred_region
      %s340 = ssub.s32 16, 16
      %341 = vsyncadd [#allocation5], %s340
      %s343 = sshll.u32 [#allocation4], 4
      %s344 = int_to_ptr.vmem [resolvable:$true] %s343
      %346 = dma.vmem_to_hbm [thread:$0]  %s344, 16, %s7, [#allocation5]
    $region33: #{vae_forward.13} parent=1 // pred_fallthru
      _
    // Predicated region
    $region34: #{vae_forward.13} parent=1 // pred_check
      _
    $region35: #{vae_forward.13} parent=1 // pred_check_branch
      %348 = sbr.rel (0) target = $region37
    $region36: #{vae_forward.13} parent=1 // pred_region
      _
    $region37: #{vae_forward.13} parent=1 // pred_fallthru
      _
    // Predicated region
    $region38: #{vae_forward.13} parent=1 // pred_check
      _
    $region39: #{vae_forward.13} parent=1 // pred_check_branch
      %350 = sbr.rel (0) target = $region41
    $region40: #{vae_forward.13} parent=1 // pred_region
      %351 = dma.done [#allocation5], 16
    $region41: #{vae_forward.13} parent=1 // pred_fallthru
      _
    %352 = vsyncpa [#allocation5], 1

</llo_original>
